<compile_context>
chip_gen: v6e
topology: v6e:2x2x1
jax: 0.10.0
libtpu: 0.0.40
codegen_flags: <defaults>
</compile_context>

<pallas_src>
import jax
import jax.numpy as jnp
from jax.experimental import pallas as pl
from jax.experimental.pallas import tpu as pltpu  # noqa: F401 (kept for TPU backend)


# ----------------------------- Pallas kernels ------------------------------

def _conv_pool_relu_kernel(p_ref, w_ref, b_ref, o_ref):
    """Fused conv-as-matmul + bias + 3x3 max-pool + ReLU (transposed layout).

    p_ref: (PP, K, Np)  -- PP = pool*pool window positions, K = kh*kw*Cin,
                           Np = N*Hp*Wp pooled output positions (lane axis).
    w_ref: (Cout, K);  b_ref: (Cout, 1);  o_ref: (Cout, Np).
    """
    pp = p_ref.shape[0]
    acc = jnp.dot(w_ref[...], p_ref[0], preferred_element_type=jnp.float32)
    for w in range(1, pp):
        acc = jnp.maximum(
            acc, jnp.dot(w_ref[...], p_ref[w], preferred_element_type=jnp.float32)
        )
    # max-pool over the window axis is done; add bias and ReLU in f32.
    o_ref[...] = jnp.maximum(acc + b_ref[...], 0.0)


def conv_pool_relu(patches_t, w_mat, b):
    """relu(maxpool3x3(conv(x) + b)) for one stage; output (Cout, N*Hp*Wp)."""
    _, _, np_ = patches_t.shape
    cout = w_mat.shape[0]
    return pl.pallas_call(
        _conv_pool_relu_kernel,
        out_shape=jax.ShapeDtypeStruct((cout, np_), jnp.float32),
    )(patches_t, w_mat, b.reshape(cout, 1))


def _fc_kernel(x_ref, w1_ref, b1_ref, w2_ref, b2_ref, o_ref):
    # Dropout -> Linear(500,100) -> Dropout -> ReLU -> Linear(100,15)
    # (dropouts are identity in eval mode)
    h = jnp.dot(x_ref[...], w1_ref[...], preferred_element_type=jnp.float32) + b1_ref[...]
    h = jnp.maximum(h, 0.0)
    o_ref[...] = (
        jnp.dot(h, w2_ref[...], preferred_element_type=jnp.float32) + b2_ref[...]
    )


def fc_layers(x, w1_t, b1, w2_t, b2):
    n = x.shape[0]
    out_dim = w2_t.shape[1]
    return pl.pallas_call(
        _fc_kernel,
        out_shape=jax.ShapeDtypeStruct((n, out_dim), jnp.float32),
    )(x, w1_t, b1.reshape(1, -1), w2_t, b2.reshape(1, -1))


# ------------------------------- JAX glue -----------------------------------

def pooled_patches_t(x_nhwc, k, p):
    """Patches for the fused conv+pool kernel, already grouped by pool window.

    Returns (p*p, k*k*C, N*Hp*Wp): axis 0 = (di,dj) position inside the pool
    window, axis 1 = (kh,kw,ci) patch element, axis 2 = (n,hp,wp) pooled output
    position (lane axis).  Floor pooling semantics like nn.MaxPool2d(p, stride=p).
    """
    N, H, W, C = x_nhwc.shape
    Ho, Wo = H - k + 1, W - k + 1
    Hp, Wp = Ho // p, Wo // p
    wins = []
    for di in range(p):
        for dj in range(p):
            cols = []
            for i in range(k):
                for j in range(k):
                    r0, c0 = di + i, dj + j
                    cols.append(
                        x_nhwc[:, r0:r0 + p * (Hp - 1) + 1:p,
                                  c0:c0 + p * (Wp - 1) + 1:p, :]
                    )                                   # (N, Hp, Wp, C)
            pt = jnp.stack(cols, axis=0)                # (k*k, N, Hp, Wp, C)
            pt = jnp.transpose(pt, (0, 4, 1, 2, 3))     # (k*k, C, N, Hp, Wp)
            wins.append(pt.reshape(k * k * C, N * Hp * Wp))
    return jnp.stack(wins, axis=0), (N, Hp, Wp)         # (p*p, K, Npool)


def conv_weight_to_mat_t(w_oihw):
    """(Cout, Cin, kh, kw) -> (Cout, kh*kw*Cin), matching the patch K order."""
    co, ci, kh, kw = w_oihw.shape
    return jnp.transpose(w_oihw, (0, 2, 3, 1)).reshape(co, kh * kw * ci)


def simplenet_dropout_forward(x_nchw, params):
    N = x_nchw.shape[0]
    x = jnp.transpose(x_nchw, (0, 2, 3, 1)).astype(jnp.float32)       # NCHW -> NHWC

    # --- stage 1: Conv(1->10, k=5) + MaxPool(3,3) + ReLU (one fused kernel) ---
    p1, (_, hp1, wp1) = pooled_patches_t(x, 5, 3)                     # (9, 25, N*400)
    z1 = conv_pool_relu(p1, conv_weight_to_mat_t(params["conv1_w"]),
                        params["conv1_b"])                            # (10, N*400)
    z1_nhwc = jnp.transpose(z1.reshape(10, N, hp1, wp1), (1, 2, 3, 0))  # (N,20,20,10)

    # --- stage 2: Conv(10->20, k=5) + MaxPool(3,3) + ReLU (one fused kernel) ---
    p2, (_, hp2, wp2) = pooled_patches_t(z1_nhwc, 5, 3)               # (9, 250, N*25)
    z2 = conv_pool_relu(p2, conv_weight_to_mat_t(params["conv2_w"]),
                        params["conv2_b"])                            # (20, N*25)

    # --- flatten in NCHW (c, h, w) order to match PyTorch x.view(N, -1) ---
    feat = jnp.transpose(z2.reshape(20, N, hp2, wp2), (1, 0, 2, 3)).reshape(N, -1)

    # --- fused FC stack: [Dropout] Linear(500,100) [Dropout] ReLU Linear(100,15) ---
    return fc_layers(feat,
                     params["fc1_w"].T, params["fc1_b"],
                     params["fc2_w"].T, params["fc2_b"])              # (N, 15)


def init_params(key):
    ks = jax.random.split(key, 8)

    def nrm(k, shape, scale):
        return scale * jax.random.normal(k, shape, jnp.float32)

    # Same shapes as the PyTorch module's parameters.
    return dict(
        conv1_w=nrm(ks[0], (10, 1, 5, 5), 0.1),
        conv1_b=nrm(ks[1], (10,), 0.1),
        conv2_w=nrm(ks[2], (20, 10, 5, 5), 0.1),
        conv2_b=nrm(ks[3], (20,), 0.1),
        fc1_w=nrm(ks[4], (100, 500), 0.05),
        fc1_b=nrm(ks[5], (100,), 0.05),
        fc2_w=nrm(ks[6], (15, 100), 0.05),
        fc2_b=nrm(ks[7], (15,), 0.05),
    )


if __name__ == "__main__":
    key = jax.random.PRNGKey(0)
    pkey, xkey = jax.random.split(key)
    params = init_params(pkey)

    # Input must be 64x64 so the flattened conv features are exactly 500
    # (in_features of Linear(500,100)): 64 -> 60 -> 20 -> 16 -> 5; 20*5*5 = 500.
    x = jax.random.normal(xkey, (2, 1, 64, 64), jnp.float32)

    out = jax.jit(simplenet_dropout_forward)(x, params)
    out = jax.block_until_ready(out)
    assert out.shape == (2, 15) and out.dtype == jnp.float32
    print("KERNEL_OK")
</pallas_src>

<mosaic_0001>
module attributes {stable_mosaic.version = 11 : i64} {
  func.func @_conv_pool_relu_kernel(%arg0: memref<9x25x800xf32, #tpu.memory_space<vmem>>, %arg1: memref<10x25xf32, #tpu.memory_space<vmem>>, %arg2: memref<10x1xf32, #tpu.memory_space<vmem>>, %arg3: memref<10x800xf32, #tpu.memory_space<vmem>>) attributes {dimension_semantics = [], scalar_prefetch = 0 : i64, scratch_operands = 0 : i64, tpu.core_type = #tpu.core_type<tc>} {
    %c0 = arith.constant 0 : index
    %c0_0 = arith.constant 0 : index
    %0 = vector.load %arg1[%c0, %c0_0] : memref<10x25xf32, #tpu.memory_space<vmem>>, vector<10x25xf32>
    %c0_1 = arith.constant 0 : index
    %c0_2 = arith.constant 0 : index
    %c0_3 = arith.constant 0 : index
    %1 = vector.load %arg0[%c0_1, %c0_2, %c0_3] : memref<9x25x800xf32, #tpu.memory_space<vmem>>, vector<1x25x800xf32>
    %2 = vector.shape_cast %1 : vector<1x25x800xf32> to vector<25x800xf32>
    %cst = arith.constant dense<0.000000e+00> : vector<10x800xf32>
    %3 = tpu.matmul %0, %2, %cst {dimension_numbers = #tpu.dot_dimension_numbers<[1], [0], [0], [1], [0, 0, 1, 1], [], []>} : vector<10x25xf32>, vector<25x800xf32>, vector<10x800xf32> -> vector<10x800xf32>
    %c0_4 = arith.constant 0 : index
    %c0_5 = arith.constant 0 : index
    %4 = vector.load %arg1[%c0_4, %c0_5] : memref<10x25xf32, #tpu.memory_space<vmem>>, vector<10x25xf32>
    %c1 = arith.constant 1 : index
    %c0_6 = arith.constant 0 : index
    %c0_7 = arith.constant 0 : index
    %5 = vector.load %arg0[%c1, %c0_6, %c0_7] : memref<9x25x800xf32, #tpu.memory_space<vmem>>, vector<1x25x800xf32>
    %6 = vector.shape_cast %5 : vector<1x25x800xf32> to vector<25x800xf32>
    %cst_8 = arith.constant dense<0.000000e+00> : vector<10x800xf32>
    %7 = tpu.matmul %4, %6, %cst_8 {dimension_numbers = #tpu.dot_dimension_numbers<[1], [0], [0], [1], [0, 0, 1, 1], [], []>} : vector<10x25xf32>, vector<25x800xf32>, vector<10x800xf32> -> vector<10x800xf32>
    %8 = arith.maximumf %3, %7 : vector<10x800xf32>
    %c0_9 = arith.constant 0 : index
    %c0_10 = arith.constant 0 : index
    %9 = vector.load %arg1[%c0_9, %c0_10] : memref<10x25xf32, #tpu.memory_space<vmem>>, vector<10x25xf32>
    %c2 = arith.constant 2 : index
    %c0_11 = arith.constant 0 : index
    %c0_12 = arith.constant 0 : index
    %10 = vector.load %arg0[%c2, %c0_11, %c0_12] : memref<9x25x800xf32, #tpu.memory_space<vmem>>, vector<1x25x800xf32>
    %11 = vector.shape_cast %10 : vector<1x25x800xf32> to vector<25x800xf32>
    %cst_13 = arith.constant dense<0.000000e+00> : vector<10x800xf32>
    %12 = tpu.matmul %9, %11, %cst_13 {dimension_numbers = #tpu.dot_dimension_numbers<[1], [0], [0], [1], [0, 0, 1, 1], [], []>} : vector<10x25xf32>, vector<25x800xf32>, vector<10x800xf32> -> vector<10x800xf32>
    %13 = arith.maximumf %8, %12 : vector<10x800xf32>
    %c0_14 = arith.constant 0 : index
    %c0_15 = arith.constant 0 : index
    %14 = vector.load %arg1[%c0_14, %c0_15] : memref<10x25xf32, #tpu.memory_space<vmem>>, vector<10x25xf32>
    %c3 = arith.constant 3 : index
    %c0_16 = arith.constant 0 : index
    %c0_17 = arith.constant 0 : index
    %15 = vector.load %arg0[%c3, %c0_16, %c0_17] : memref<9x25x800xf32, #tpu.memory_space<vmem>>, vector<1x25x800xf32>
    %16 = vector.shape_cast %15 : vector<1x25x800xf32> to vector<25x800xf32>
    %cst_18 = arith.constant dense<0.000000e+00> : vector<10x800xf32>
    %17 = tpu.matmul %14, %16, %cst_18 {dimension_numbers = #tpu.dot_dimension_numbers<[1], [0], [0], [1], [0, 0, 1, 1], [], []>} : vector<10x25xf32>, vector<25x800xf32>, vector<10x800xf32> -> vector<10x800xf32>
    %18 = arith.maximumf %13, %17 : vector<10x800xf32>
    %c0_19 = arith.constant 0 : index
    %c0_20 = arith.constant 0 : index
    %19 = vector.load %arg1[%c0_19, %c0_20] : memref<10x25xf32, #tpu.memory_space<vmem>>, vector<10x25xf32>
    %c4 = arith.constant 4 : index
    %c0_21 = arith.constant 0 : index
    %c0_22 = arith.constant 0 : index
    %20 = vector.load %arg0[%c4, %c0_21, %c0_22] : memref<9x25x800xf32, #tpu.memory_space<vmem>>, vector<1x25x800xf32>
    %21 = vector.shape_cast %20 : vector<1x25x800xf32> to vector<25x800xf32>
    %cst_23 = arith.constant dense<0.000000e+00> : vector<10x800xf32>
    %22 = tpu.matmul %19, %21, %cst_23 {dimension_numbers = #tpu.dot_dimension_numbers<[1], [0], [0], [1], [0, 0, 1, 1], [], []>} : vector<10x25xf32>, vector<25x800xf32>, vector<10x800xf32> -> vector<10x800xf32>
    %23 = arith.maximumf %18, %22 : vector<10x800xf32>
    %c0_24 = arith.constant 0 : index
    %c0_25 = arith.constant 0 : index
    %24 = vector.load %arg1[%c0_24, %c0_25] : memref<10x25xf32, #tpu.memory_space<vmem>>, vector<10x25xf32>
    %c5 = arith.constant 5 : index
    %c0_26 = arith.constant 0 : index
    %c0_27 = arith.constant 0 : index
    %25 = vector.load %arg0[%c5, %c0_26, %c0_27] : memref<9x25x800xf32, #tpu.memory_space<vmem>>, vector<1x25x800xf32>
    %26 = vector.shape_cast %25 : vector<1x25x800xf32> to vector<25x800xf32>
    %cst_28 = arith.constant dense<0.000000e+00> : vector<10x800xf32>
    %27 = tpu.matmul %24, %26, %cst_28 {dimension_numbers = #tpu.dot_dimension_numbers<[1], [0], [0], [1], [0, 0, 1, 1], [], []>} : vector<10x25xf32>, vector<25x800xf32>, vector<10x800xf32> -> vector<10x800xf32>
    %28 = arith.maximumf %23, %27 : vector<10x800xf32>
    %c0_29 = arith.constant 0 : index
    %c0_30 = arith.constant 0 : index
    %29 = vector.load %arg1[%c0_29, %c0_30] : memref<10x25xf32, #tpu.memory_space<vmem>>, vector<10x25xf32>
    %c6 = arith.constant 6 : index
    %c0_31 = arith.constant 0 : index
    %c0_32 = arith.constant 0 : index
    %30 = vector.load %arg0[%c6, %c0_31, %c0_32] : memref<9x25x800xf32, #tpu.memory_space<vmem>>, vector<1x25x800xf32>
    %31 = vector.shape_cast %30 : vector<1x25x800xf32> to vector<25x800xf32>
    %cst_33 = arith.constant dense<0.000000e+00> : vector<10x800xf32>
    %32 = tpu.matmul %29, %31, %cst_33 {dimension_numbers = #tpu.dot_dimension_numbers<[1], [0], [0], [1], [0, 0, 1, 1], [], []>} : vector<10x25xf32>, vector<25x800xf32>, vector<10x800xf32> -> vector<10x800xf32>
    %33 = arith.maximumf %28, %32 : vector<10x800xf32>
    %c0_34 = arith.constant 0 : index
    %c0_35 = arith.constant 0 : index
    %34 = vector.load %arg1[%c0_34, %c0_35] : memref<10x25xf32, #tpu.memory_space<vmem>>, vector<10x25xf32>
    %c7 = arith.constant 7 : index
    %c0_36 = arith.constant 0 : index
    %c0_37 = arith.constant 0 : index
    %35 = vector.load %arg0[%c7, %c0_36, %c0_37] : memref<9x25x800xf32, #tpu.memory_space<vmem>>, vector<1x25x800xf32>
    %36 = vector.shape_cast %35 : vector<1x25x800xf32> to vector<25x800xf32>
    %cst_38 = arith.constant dense<0.000000e+00> : vector<10x800xf32>
    %37 = tpu.matmul %34, %36, %cst_38 {dimension_numbers = #tpu.dot_dimension_numbers<[1], [0], [0], [1], [0, 0, 1, 1], [], []>} : vector<10x25xf32>, vector<25x800xf32>, vector<10x800xf32> -> vector<10x800xf32>
    %38 = arith.maximumf %33, %37 : vector<10x800xf32>
    %c0_39 = arith.constant 0 : index
    %c0_40 = arith.constant 0 : index
    %39 = vector.load %arg1[%c0_39, %c0_40] : memref<10x25xf32, #tpu.memory_space<vmem>>, vector<10x25xf32>
    %c8 = arith.constant 8 : index
    %c0_41 = arith.constant 0 : index
    %c0_42 = arith.constant 0 : index
    %40 = vector.load %arg0[%c8, %c0_41, %c0_42] : memref<9x25x800xf32, #tpu.memory_space<vmem>>, vector<1x25x800xf32>
    %41 = vector.shape_cast %40 : vector<1x25x800xf32> to vector<25x800xf32>
    %cst_43 = arith.constant dense<0.000000e+00> : vector<10x800xf32>
    %42 = tpu.matmul %39, %41, %cst_43 {dimension_numbers = #tpu.dot_dimension_numbers<[1], [0], [0], [1], [0, 0, 1, 1], [], []>} : vector<10x25xf32>, vector<25x800xf32>, vector<10x800xf32> -> vector<10x800xf32>
    %43 = arith.maximumf %38, %42 : vector<10x800xf32>
    %c0_44 = arith.constant 0 : index
    %c0_45 = arith.constant 0 : index
    %44 = vector.load %arg2[%c0_44, %c0_45] : memref<10x1xf32, #tpu.memory_space<vmem>>, vector<10x1xf32>
    %45 = vector.broadcast %44 : vector<10x1xf32> to vector<10x800xf32>
    %46 = arith.addf %43, %45 : vector<10x800xf32>
    %cst_46 = arith.constant 0.000000e+00 : f32
    %47 = vector.broadcast %cst_46 : f32 to vector<10x800xf32>
    %48 = arith.maximumf %46, %47 : vector<10x800xf32>
    %c0_47 = arith.constant 0 : index
    %c0_48 = arith.constant 0 : index
    %49 = vector.load %arg3[%c0_47, %c0_48] : memref<10x800xf32, #tpu.memory_space<vmem>>, vector<10x800xf32>
    tpu.vector_store %arg3[%c0_47, %c0_48], %48 {strides = array<i32>} : memref<10x800xf32, #tpu.memory_space<vmem>>, vector<10x800xf32>,
    return
  }
}

module attributes {stable_mosaic.version = 11 : i64} {
  func.func @_conv_pool_relu_kernel(%arg0: memref<9x250x50xf32, #tpu.memory_space<vmem>>, %arg1: memref<20x250xf32, #tpu.memory_space<vmem>>, %arg2: memref<20x1xf32, #tpu.memory_space<vmem>>, %arg3: memref<20x50xf32, #tpu.memory_space<vmem>>) attributes {dimension_semantics = [], scalar_prefetch = 0 : i64, scratch_operands = 0 : i64, tpu.core_type = #tpu.core_type<tc>} {
    %c0 = arith.constant 0 : index
    %c0_0 = arith.constant 0 : index
    %0 = vector.load %arg1[%c0, %c0_0] : memref<20x250xf32, #tpu.memory_space<vmem>>, vector<20x250xf32>
    %c0_1 = arith.constant 0 : index
    %c0_2 = arith.constant 0 : index
    %c0_3 = arith.constant 0 : index
    %1 = vector.load %arg0[%c0_1, %c0_2, %c0_3] : memref<9x250x50xf32, #tpu.memory_space<vmem>>, vector<1x250x50xf32>
    %2 = vector.shape_cast %1 : vector<1x250x50xf32> to vector<250x50xf32>
    %cst = arith.constant dense<0.000000e+00> : vector<20x50xf32>
    %3 = tpu.matmul %0, %2, %cst {dimension_numbers = #tpu.dot_dimension_numbers<[1], [0], [0], [1], [0, 0, 1, 1], [], []>} : vector<20x250xf32>, vector<250x50xf32>, vector<20x50xf32> -> vector<20x50xf32>
    %c0_4 = arith.constant 0 : index
    %c0_5 = arith.constant 0 : index
    %4 = vector.load %arg1[%c0_4, %c0_5] : memref<20x250xf32, #tpu.memory_space<vmem>>, vector<20x250xf32>
    %c1 = arith.constant 1 : index
    %c0_6 = arith.constant 0 : index
    %c0_7 = arith.constant 0 : index
    %5 = vector.load %arg0[%c1, %c0_6, %c0_7] : memref<9x250x50xf32, #tpu.memory_space<vmem>>, vector<1x250x50xf32>
    %6 = vector.shape_cast %5 : vector<1x250x50xf32> to vector<250x50xf32>
    %cst_8 = arith.constant dense<0.000000e+00> : vector<20x50xf32>
    %7 = tpu.matmul %4, %6, %cst_8 {dimension_numbers = #tpu.dot_dimension_numbers<[1], [0], [0], [1], [0, 0, 1, 1], [], []>} : vector<20x250xf32>, vector<250x50xf32>, vector<20x50xf32> -> vector<20x50xf32>
    %8 = arith.maximumf %3, %7 : vector<20x50xf32>
    %c0_9 = arith.constant 0 : index
    %c0_10 = arith.constant 0 : index
    %9 = vector.load %arg1[%c0_9, %c0_10] : memref<20x250xf32, #tpu.memory_space<vmem>>, vector<20x250xf32>
    %c2 = arith.constant 2 : index
    %c0_11 = arith.constant 0 : index
    %c0_12 = arith.constant 0 : index
    %10 = vector.load %arg0[%c2, %c0_11, %c0_12] : memref<9x250x50xf32, #tpu.memory_space<vmem>>, vector<1x250x50xf32>
    %11 = vector.shape_cast %10 : vector<1x250x50xf32> to vector<250x50xf32>
    %cst_13 = arith.constant dense<0.000000e+00> : vector<20x50xf32>
    %12 = tpu.matmul %9, %11, %cst_13 {dimension_numbers = #tpu.dot_dimension_numbers<[1], [0], [0], [1], [0, 0, 1, 1], [], []>} : vector<20x250xf32>, vector<250x50xf32>, vector<20x50xf32> -> vector<20x50xf32>
    %13 = arith.maximumf %8, %12 : vector<20x50xf32>
    %c0_14 = arith.constant 0 : index
    %c0_15 = arith.constant 0 : index
    %14 = vector.load %arg1[%c0_14, %c0_15] : memref<20x250xf32, #tpu.memory_space<vmem>>, vector<20x250xf32>
    %c3 = arith.constant 3 : index
    %c0_16 = arith.constant 0 : index
    %c0_17 = arith.constant 0 : index
    %15 = vector.load %arg0[%c3, %c0_16, %c0_17] : memref<9x250x50xf32, #tpu.memory_space<vmem>>, vector<1x250x50xf32>
    %16 = vector.shape_cast %15 : vector<1x250x50xf32> to vector<250x50xf32>
    %cst_18 = arith.constant dense<0.000000e+00> : vector<20x50xf32>
    %17 = tpu.matmul %14, %16, %cst_18 {dimension_numbers = #tpu.dot_dimension_numbers<[1], [0], [0], [1], [0, 0, 1, 1], [], []>} : vector<20x250xf32>, vector<250x50xf32>, vector<20x50xf32> -> vector<20x50xf32>
    %18 = arith.maximumf %13, %17 : vector<20x50xf32>
    %c0_19 = arith.constant 0 : index
    %c0_20 = arith.constant 0 : index
    %19 = vector.load %arg1[%c0_19, %c0_20] : memref<20x250xf32, #tpu.memory_space<vmem>>, vector<20x250xf32>
    %c4 = arith.constant 4 : index
    %c0_21 = arith.constant 0 : index
    %c0_22 = arith.constant 0 : index
    %20 = vector.load %arg0[%c4, %c0_21, %c0_22] : memref<9x250x50xf32, #tpu.memory_space<vmem>>, vector<1x250x50xf32>
    %21 = vector.shape_cast %20 : vector<1x250x50xf32> to vector<250x50xf32>
    %cst_23 = arith.constant dense<0.000000e+00> : vector<20x50xf32>
    %22 = tpu.matmul %19, %21, %cst_23 {dimension_numbers = #tpu.dot_dimension_numbers<[1], [0], [0], [1], [0, 0, 1, 1], [], []>} : vector<20x250xf32>, vector<250x50xf32>, vector<20x50xf32> -> vector<20x50xf32>
    %23 = arith.maximumf %18, %22 : vector<20x50xf32>
    %c0_24 = arith.constant 0 : index
    %c0_25 = arith.constant 0 : index
    %24 = vector.load %arg1[%c0_24, %c0_25] : memref<20x250xf32, #tpu.memory_space<vmem>>, vector<20x250xf32>
    %c5 = arith.constant 5 : index
    %c0_26 = arith.constant 0 : index
    %c0_27 = arith.constant 0 : index
    %25 = vector.load %arg0[%c5, %c0_26, %c0_27] : memref<9x250x50xf32, #tpu.memory_space<vmem>>, vector<1x250x50xf32>
    %26 = vector.shape_cast %25 : vector<1x250x50xf32> to vector<250x50xf32>
    %cst_28 = arith.constant dense<0.000000e+00> : vector<20x50xf32>
    %27 = tpu.matmul %24, %26, %cst_28 {dimension_numbers = #tpu.dot_dimension_numbers<[1], [0], [0], [1], [0, 0, 1, 1], [], []>} : vector<20x250xf32>, vector<250x50xf32>, vector<20x50xf32> -> vector<20x50xf32>
    %28 = arith.maximumf %23, %27 : vector<20x50xf32>
    %c0_29 = arith.constant 0 : index
    %c0_30 = arith.constant 0 : index
    %29 = vector.load %arg1[%c0_29, %c0_30] : memref<20x250xf32, #tpu.memory_space<vmem>>, vector<20x250xf32>
    %c6 = arith.constant 6 : index
    %c0_31 = arith.constant 0 : index
    %c0_32 = arith.constant 0 : index
    %30 = vector.load %arg0[%c6, %c0_31, %c0_32] : memref<9x250x50xf32, #tpu.memory_space<vmem>>, vector<1x250x50xf32>
    %31 = vector.shape_cast %30 : vector<1x250x50xf32> to vector<250x50xf32>
    %cst_33 = arith.constant dense<0.000000e+00> : vector<20x50xf32>
    %32 = tpu.matmul %29, %31, %cst_33 {dimension_numbers = #tpu.dot_dimension_numbers<[1], [0], [0], [1], [0, 0, 1, 1], [], []>} : vector<20x250xf32>, vector<250x50xf32>, vector<20x50xf32> -> vector<20x50xf32>
    %33 = arith.maximumf %28, %32 : vector<20x50xf32>
    %c0_34 = arith.constant 0 : index
    %c0_35 = arith.constant 0 : index
    %34 = vector.load %arg1[%c0_34, %c0_35] : memref<20x250xf32, #tpu.memory_space<vmem>>, vector<20x250xf32>
    %c7 = arith.constant 7 : index
    %c0_36 = arith.constant 0 : index
    %c0_37 = arith.constant 0 : index
    %35 = vector.load %arg0[%c7, %c0_36, %c0_37] : memref<9x250x50xf32, #tpu.memory_space<vmem>>, vector<1x250x50xf32>
    %36 = vector.shape_cast %35 : vector<1x250x50xf32> to vector<250x50xf32>
    %cst_38 = arith.constant dense<0.000000e+00> : vector<20x50xf32>
    %37 = tpu.matmul %34, %36, %cst_38 {dimension_numbers = #tpu.dot_dimension_numbers<[1], [0], [0], [1], [0, 0, 1, 1], [], []>} : vector<20x250xf32>, vector<250x50xf32>, vector<20x50xf32> -> vector<20x50xf32>
    %38 = arith.maximumf %33, %37 : vector<20x50xf32>
    %c0_39 = arith.constant 0 : index
    %c0_40 = arith.constant 0 : index
    %39 = vector.load %arg1[%c0_39, %c0_40] : memref<20x250xf32, #tpu.memory_space<vmem>>, vector<20x250xf32>
    %c8 = arith.constant 8 : index
    %c0_41 = arith.constant 0 : index
    %c0_42 = arith.constant 0 : index
    %40 = vector.load %arg0[%c8, %c0_41, %c0_42] : memref<9x250x50xf32, #tpu.memory_space<vmem>>, vector<1x250x50xf32>
    %41 = vector.shape_cast %40 : vector<1x250x50xf32> to vector<250x50xf32>
    %cst_43 = arith.constant dense<0.000000e+00> : vector<20x50xf32>
    %42 = tpu.matmul %39, %41, %cst_43 {dimension_numbers = #tpu.dot_dimension_numbers<[1], [0], [0], [1], [0, 0, 1, 1], [], []>} : vector<20x250xf32>, vector<250x50xf32>, vector<20x50xf32> -> vector<20x50xf32>
    %43 = arith.maximumf %38, %42 : vector<20x50xf32>
    %c0_44 = arith.constant 0 : index
    %c0_45 = arith.constant 0 : index
    %44 = vector.load %arg2[%c0_44, %c0_45] : memref<20x1xf32, #tpu.memory_space<vmem>>, vector<20x1xf32>
    %45 = vector.broadcast %44 : vector<20x1xf32> to vector<20x50xf32>
    %46 = arith.addf %43, %45 : vector<20x50xf32>
    %cst_46 = arith.constant 0.000000e+00 : f32
    %47 = vector.broadcast %cst_46 : f32 to vector<20x50xf32>
    %48 = arith.maximumf %46, %47 : vector<20x50xf32>
    %c0_47 = arith.constant 0 : index
    %c0_48 = arith.constant 0 : index
    %49 = vector.load %arg3[%c0_47, %c0_48] : memref<20x50xf32, #tpu.memory_space<vmem>>, vector<20x50xf32>
    tpu.vector_store %arg3[%c0_47, %c0_48], %48 {strides = array<i32>} : memref<20x50xf32, #tpu.memory_space<vmem>>, vector<20x50xf32>,
    return
  }
}

module attributes {stable_mosaic.version = 11 : i64} {
  func.func @_fc_kernel(%arg0: memref<2x500xf32, #tpu.memory_space<vmem>>, %arg1: memref<500x100xf32, #tpu.memory_space<vmem>>, %arg2: memref<1x100xf32, #tpu.memory_space<vmem>>, %arg3: memref<100x15xf32, #tpu.memory_space<vmem>>, %arg4: memref<1x15xf32, #tpu.memory_space<vmem>>, %arg5: memref<2x15xf32, #tpu.memory_space<vmem>>) attributes {dimension_semantics = [], scalar_prefetch = 0 : i64, scratch_operands = 0 : i64, tpu.core_type = #tpu.core_type<tc>} {
    %c0 = arith.constant 0 : index
    %c0_0 = arith.constant 0 : index
    %0 = vector.load %arg0[%c0, %c0_0] : memref<2x500xf32, #tpu.memory_space<vmem>>, vector<2x500xf32>
    %c0_1 = arith.constant 0 : index
    %c0_2 = arith.constant 0 : index
    %1 = vector.load %arg1[%c0_1, %c0_2] : memref<500x100xf32, #tpu.memory_space<vmem>>, vector<500x100xf32>
    %cst = arith.constant dense<0.000000e+00> : vector<2x100xf32>
    %2 = tpu.matmul %0, %1, %cst {dimension_numbers = #tpu.dot_dimension_numbers<[1], [0], [0], [1], [0, 0, 1, 1], [], []>} : vector<2x500xf32>, vector<500x100xf32>, vector<2x100xf32> -> vector<2x100xf32>
    %c0_3 = arith.constant 0 : index
    %c0_4 = arith.constant 0 : index
    %3 = vector.load %arg2[%c0_3, %c0_4] : memref<1x100xf32, #tpu.memory_space<vmem>>, vector<1x100xf32>
    %4 = vector.broadcast %3 : vector<1x100xf32> to vector<2x100xf32>
    %5 = arith.addf %2, %4 : vector<2x100xf32>
    %cst_5 = arith.constant 0.000000e+00 : f32
    %6 = vector.broadcast %cst_5 : f32 to vector<2x100xf32>
    %7 = arith.maximumf %5, %6 : vector<2x100xf32>
    %c0_6 = arith.constant 0 : index
    %c0_7 = arith.constant 0 : index
    %8 = vector.load %arg3[%c0_6, %c0_7] : memref<100x15xf32, #tpu.memory_space<vmem>>, vector<100x15xf32>
    %cst_8 = arith.constant dense<0.000000e+00> : vector<2x15xf32>
    %9 = tpu.matmul %7, %8, %cst_8 {dimension_numbers = #tpu.dot_dimension_numbers<[1], [0], [0], [1], [0, 0, 1, 1], [], []>} : vector<2x100xf32>, vector<100x15xf32>, vector<2x15xf32> -> vector<2x15xf32>
    %c0_9 = arith.constant 0 : index
    %c0_10 = arith.constant 0 : index
    %10 = vector.load %arg4[%c0_9, %c0_10] : memref<1x15xf32, #tpu.memory_space<vmem>>, vector<1x15xf32>
    %11 = vector.broadcast %10 : vector<1x15xf32> to vector<2x15xf32>
    %12 = arith.addf %9, %11 : vector<2x15xf32>
    %c0_11 = arith.constant 0 : index
    %c0_12 = arith.constant 0 : index
    %13 = vector.load %arg5[%c0_11, %c0_12] : memref<2x15xf32, #tpu.memory_space<vmem>>, vector<2x15xf32>
    tpu.vector_store %arg5[%c0_11, %c0_12], %12 {strides = array<i32>} : memref<2x15xf32, #tpu.memory_space<vmem>>, vector<2x15xf32>,
    return
  }
}

</mosaic_0001>

<llo_original>
// kernel: simplenet_dropout_forward.3
$region0: #{simplenet_dropout_forward.3}
  #allocation0 [shape = 'u32[]', space=smem, size = 0x4, offset = 0x4, fixed_abs, tag = 'smem constant byte address 0x4 - core index']
  #allocation1 [shape = 'u32[144,128]{1,0:T(1,128)}', space=vmem, size = 0x12000, scoped, tag = 'internal scratch']
  %s0 = inlined_call_operand.vmem [shape: f32[9,25,800], index: 0, kind: input, shape index: {}]
  %s1 = inlined_call_operand.vmem [shape: f32[10,25], index: 1, kind: input, shape index: {}]
  %s2 = inlined_call_operand.vmem [shape: f32[10,1], index: 2, kind: input, shape index: {}]
  %s3 = inlined_call_operand.vmem [shape: f32[10,800], index: 3, kind: output, shape index: {}]
  %s4 = sld [smem:[#allocation0]]
  $region22: #{simplenet_dropout_forward.3} parent=0
    _
  %s6 = ssub.s32 1, %s4
  %s7 = scalar_select 0, %s6, %s4
  // Predicated region
  $region2: #{simplenet_dropout_forward.3} parent=0 // pred_check
    _
  $region3: #{simplenet_dropout_forward.3} parent=0 // pred_check_branch
    %9 = sbr.rel (0) target = $region5
  $region4: #{simplenet_dropout_forward.3} parent=0 // pred_region
    _
  $region5: #{simplenet_dropout_forward.3} parent=0 // pred_fallthru
    _
  // Predicated region
  $region6: #{simplenet_dropout_forward.3} parent=0 // pred_check
    _
  $region7: #{simplenet_dropout_forward.3} parent=0 // pred_check_branch
    %11 = sbr.rel (0) target = $region9
  $region8: #{simplenet_dropout_forward.3} parent=0 // pred_region
    _
  $region9: #{simplenet_dropout_forward.3} parent=0 // pred_fallthru
    _
  // Predicated region
  $region10: #{simplenet_dropout_forward.3} parent=0 // pred_check
    _
  $region11: #{simplenet_dropout_forward.3} parent=0 // pred_check_branch
    %13 = sbr.rel (0) target = $region13
  $region12: #{simplenet_dropout_forward.3} parent=0 // pred_region
    _
  $region13: #{simplenet_dropout_forward.3} parent=0 // pred_fallthru
    _
  %v14 = vld [vmem:[%s1] sm:$0xff]
  %v15 = vld [vmem:[%s1 + $0x8] sm:$0x3]
  %v16 = vld [vmem:[%s0] sm:$0xff]
  %v17 = vld [vmem:[%s0 + $0x8] sm:$0xff]
  %v18 = vld [vmem:[%s0 + $0x10] sm:$0xff]
  %v19 = vld [vmem:[%s0 + $0x18] sm:$0xff]
  %v20 = vld [vmem:[%s0 + $0x20] sm:$0xff]
  %v21 = vld [vmem:[%s0 + $0x28] sm:$0xff]
  %v22 = vld [vmem:[%s0 + $0x30] sm:$0xff]
  %v23 = vld [vmem:[%s0 + $0x38] sm:$0xff]
  %v24 = vld [vmem:[%s0 + $0x40] sm:$0xff]
  %v25 = vld [vmem:[%s0 + $0x48] sm:$0xff]
  %v26 = vld [vmem:[%s0 + $0x50] sm:$0xff]
  %v27 = vld [vmem:[%s0 + $0x58] sm:$0xff]
  %v28 = vld [vmem:[%s0 + $0x60] sm:$0xff]
  %v29 = vld [vmem:[%s0 + $0x68] sm:$0xff]
  %v30 = vld [vmem:[%s0 + $0x70] sm:$0xff]
  %v31 = vld [vmem:[%s0 + $0x78] sm:$0xff]
  %v32 = vld [vmem:[%s0 + $0x80] sm:$0xff]
  %v33 = vld [vmem:[%s0 + $0x88] sm:$0xff]
  %v34 = vld [vmem:[%s0 + $0x90] sm:$0xff]
  %v35 = vld [vmem:[%s0 + $0x98] sm:$0xff]
  %v36 = vld [vmem:[%s0 + $0xa0] sm:$0xff]
  %v37 = vld [vmem:[%s0 + $0xa8] sm:$0x1]
  %v38 = vld [vmem:[%s0 + $0xb0] sm:$0x1]
  %v39 = vld [vmem:[%s0 + $0xb8] sm:$0x1]
  %v40 = vld [vmem:[%s0 + $0xc0] sm:$0x1]
  %v41 = vld [vmem:[%s0 + $0xc8] sm:$0x1]
  %v42 = vld [vmem:[%s0 + $0xd0] sm:$0x1]
  %v43 = vld [vmem:[%s0 + $0xd8] sm:$0x1]
  %vm44 = vcmask 203776
  %v46 = vsel %vm44, %v14, 0
  %v49 = vsel %vm44, %v15, 0
  %vm51 = vcmask 1040384
  %v53 = vsel %vm51, %v37, 0
  %v56 = vsel %vm51, %v38, 0
  %v59 = vsel %vm51, %v39, 0
  %v62 = vsel %vm51, %v40, 0
  %v65 = vsel %vm51, %v41, 0
  %v68 = vsel %vm51, %v42, 0
  %v71 = vsel %vm51, %v43, 0
  %73 = vmatprep.subr.mxu0 0.0
  %74 = vmatpush1.msra.mxu0 0.0
  %75 = vmatprep.subr.mxu0 0.0
  %76 = vmatpush1.msra.mxu0 0.0
  %77 = vmatprep.subr.mxu0 0.0
  %78 = vmatpush1.msra.mxu0 0.0
  %79 = vmatprep.subr.mxu0 0.0
  %80 = vmatpush1.msra.mxu0 0.0
  %81 = vmatprep.subr.mxu0 0.0
  %82 = vmatpush1.msra.mxu0 0.0
  %83 = vmatprep.subr.mxu0 0.0
  %84 = vmatpush1.msra.mxu0 0.0
  %85 = vmatprep.subr.mxu0 0.0
  %86 = vmatpush1.msra.mxu0 0.0
  %87 = vmatprep.subr.mxu0 0.0
  %88 = vmatpush1.msra.mxu0 0.0
  %89 = vmatprep.subr.mxu0 0.0
  %90 = vmatpush1.msra.mxu0 0.0
  %91 = vmatprep.subr.mxu0 0.0
  %92 = vmatpush1.msra.mxu0 0.0
  %93 = vmatprep.subr.mxu0 0.0
  %94 = vmatpush1.msra.mxu0 0.0
  %95 = vmatprep.subr.mxu0 0.0
  %96 = vmatpush1.msra.mxu0 0.0
  %97 = vmatprep.subr.mxu0 %v56
  %98 = vmatpush1.msra.mxu0 %v53
  %99 = vmatprep.subr.mxu0 %v31
  %100 = vmatpush1.msra.mxu0 %v30
  %101 = vmatprep.subr.mxu0 %v24
  %102 = vmatpush1.msra.mxu0 %v23
  %103 = vmatprep.subr.mxu0 %v17
  %104 = vmatpush1.msra.mxu0 %v16
  %105 = vmatprep.subr.mxu0 0.0
  %106 = vmatpush2.msra.mxu0 0.0
  %107 = vmatprep.subr.mxu0 0.0
  %108 = vmatpush2.msra.mxu0 0.0
  %109 = vmatprep.subr.mxu0 0.0
  %110 = vmatpush2.msra.mxu0 0.0
  %111 = vmatprep.subr.mxu0 0.0
  %112 = vmatpush2.msra.mxu0 0.0
  %113 = vmatprep.subr.mxu0 0.0
  %114 = vmatpush2.msra.mxu0 0.0
  %115 = vmatprep.subr.mxu0 0.0
  %116 = vmatpush2.msra.mxu0 0.0
  %117 = vmatprep.subr.mxu0 0.0
  %118 = vmatpush2.msra.mxu0 0.0
  %119 = vmatprep.subr.mxu0 0.0
  %120 = vmatpush2.msra.mxu0 0.0
  %121 = vmatprep.subr.mxu0 0.0
  %122 = vmatpush2.msra.mxu0 0.0
  %123 = vmatprep.subr.mxu0 0.0
  %124 = vmatpush2.msra.mxu0 0.0
  %125 = vmatprep.subr.mxu0 0.0
  %126 = vmatpush2.msra.mxu0 0.0
  %127 = vmatprep.subr.mxu0 0.0
  %128 = vmatpush2.msra.mxu0 0.0
  %129 = vmatprep.subr.mxu0 0.0
  %130 = vmatpush2.msra.mxu0 0.0
  %131 = vmatprep.subr.mxu0 0.0
  %132 = vmatpush2.msra.mxu0 0.0
  %133 = vmatprep.subr.mxu0 0.0
  %134 = vmatpush2.msra.mxu0 0.0
  %135 = vmatprep.subr.mxu0 0.0
  %136 = vmatpush2.msra.mxu0 0.0
  %137 = vmatprep.mubr.f32.mxu0 0.0
  %138 = vmatmul.mubr.f32.gmra.mxu0 %v46
  %v139 = vpop.f32.mrf.mxu0
  %v140 = vadd.f32 0.0, %v139
  %v141 = vpop.f32.mrf.mxu0
  %v142 = vadd.f32 0.0, %v141
  %143 = vmatprep.mubr.f32.mxu0 0.0
  %144 = vmatmul.mubr.f32.gmra.mxu0 %v49
  %v145 = vpop.f32.mrf.mxu0
  %v146 = vadd.f32 0.0, %v145
  %v147 = vpop.f32.mrf.mxu0
  %v148 = vadd.f32 0.0, %v147
  %149 = vdwg.mxu0
  %150 = vmatprep.subr.mxu0 0.0
  %151 = vmatpush1.msra.mxu0 0.0
  %152 = vmatprep.subr.mxu0 0.0
  %153 = vmatpush1.msra.mxu0 0.0
  %154 = vmatprep.subr.mxu0 0.0
  %155 = vmatpush1.msra.mxu0 0.0
  %156 = vmatprep.subr.mxu0 0.0
  %157 = vmatpush1.msra.mxu0 0.0
  %158 = vmatprep.subr.mxu0 0.0
  %159 = vmatpush1.msra.mxu0 0.0
  %160 = vmatprep.subr.mxu0 0.0
  %161 = vmatpush1.msra.mxu0 0.0
  %162 = vmatprep.subr.mxu0 0.0
  %163 = vmatpush1.msra.mxu0 0.0
  %164 = vmatprep.subr.mxu0 0.0
  %165 = vmatpush1.msra.mxu0 0.0
  %166 = vmatprep.subr.mxu0 0.0
  %167 = vmatpush1.msra.mxu0 0.0
  %168 = vmatprep.subr.mxu0 0.0
  %169 = vmatpush1.msra.mxu0 0.0
  %170 = vmatprep.subr.mxu0 0.0
  %171 = vmatpush1.msra.mxu0 0.0
  %172 = vmatprep.subr.mxu0 0.0
  %173 = vmatpush1.msra.mxu0 0.0
  %174 = vmatprep.subr.mxu0 %v62
  %175 = vmatpush1.msra.mxu0 %v59
  %176 = vmatprep.subr.mxu0 %v33
  %177 = vmatpush1.msra.mxu0 %v32
  %178 = vmatprep.subr.mxu0 %v26
  %179 = vmatpush1.msra.mxu0 %v25
  %180 = vmatprep.subr.mxu0 %v19
  %181 = vmatpush1.msra.mxu0 %v18
  %182 = vmatprep.subr.mxu0 0.0
  %183 = vmatpush2.msra.mxu0 0.0
  %184 = vmatprep.subr.mxu0 0.0
  %185 = vmatpush2.msra.mxu0 0.0
  %186 = vmatprep.subr.mxu0 0.0
  %187 = vmatpush2.msra.mxu0 0.0
  %188 = vmatprep.subr.mxu0 0.0
  %189 = vmatpush2.msra.mxu0 0.0
  %190 = vmatprep.subr.mxu0 0.0
  %191 = vmatpush2.msra.mxu0 0.0
  %192 = vmatprep.subr.mxu0 0.0
  %193 = vmatpush2.msra.mxu0 0.0
  %194 = vmatprep.subr.mxu0 0.0
  %195 = vmatpush2.msra.mxu0 0.0
  %196 = vmatprep.subr.mxu0 0.0
  %197 = vmatpush2.msra.mxu0 0.0
  %198 = vmatprep.subr.mxu0 0.0
  %199 = vmatpush2.msra.mxu0 0.0
  %200 = vmatprep.subr.mxu0 0.0
  %201 = vmatpush2.msra.mxu0 0.0
  %202 = vmatprep.subr.mxu0 0.0
  %203 = vmatpush2.msra.mxu0 0.0
  %204 = vmatprep.subr.mxu0 0.0
  %205 = vmatpush2.msra.mxu0 0.0
  %206 = vmatprep.subr.mxu0 0.0
  %207 = vmatpush2.msra.mxu0 0.0
  %208 = vmatprep.subr.mxu0 0.0
  %209 = vmatpush2.msra.mxu0 0.0
  %210 = vmatprep.subr.mxu0 0.0
  %211 = vmatpush2.msra.mxu0 0.0
  %212 = vmatprep.subr.mxu0 0.0
  %213 = vmatpush2.msra.mxu0 0.0
  %214 = vmatprep.mubr.f32.mxu0 0.0
  %215 = vmatmul.mubr.f32.gmra.mxu0 %v46
  %v216 = vpop.f32.mrf.mxu0
  %v217 = vadd.f32 0.0, %v216
  %v218 = vpop.f32.mrf.mxu0
  %v219 = vadd.f32 0.0, %v218
  %220 = vmatprep.mubr.f32.mxu0 0.0
  %221 = vmatmul.mubr.f32.gmra.mxu0 %v49
  %v222 = vpop.f32.mrf.mxu0
  %v223 = vadd.f32 0.0, %v222
  %v224 = vpop.f32.mrf.mxu0
  %v225 = vadd.f32 0.0, %v224
  %226 = vdwg.mxu0
  %227 = vmatprep.subr.mxu0 0.0
  %228 = vmatpush1.msra.mxu0 0.0
  %229 = vmatprep.subr.mxu0 0.0
  %230 = vmatpush1.msra.mxu0 0.0
  %231 = vmatprep.subr.mxu0 0.0
  %232 = vmatpush1.msra.mxu0 0.0
  %233 = vmatprep.subr.mxu0 0.0
  %234 = vmatpush1.msra.mxu0 0.0
  %235 = vmatprep.subr.mxu0 0.0
  %236 = vmatpush1.msra.mxu0 0.0
  %237 = vmatprep.subr.mxu0 0.0
  %238 = vmatpush1.msra.mxu0 0.0
  %239 = vmatprep.subr.mxu0 0.0
  %240 = vmatpush1.msra.mxu0 0.0
  %241 = vmatprep.subr.mxu0 0.0
  %242 = vmatpush1.msra.mxu0 0.0
  %243 = vmatprep.subr.mxu0 0.0
  %244 = vmatpush1.msra.mxu0 0.0
  %245 = vmatprep.subr.mxu0 0.0
  %246 = vmatpush1.msra.mxu0 0.0
  %247 = vmatprep.subr.mxu0 0.0
  %248 = vmatpush1.msra.mxu0 0.0
  %249 = vmatprep.subr.mxu0 0.0
  %250 = vmatpush1.msra.mxu0 0.0
  %251 = vmatprep.subr.mxu0 %v68
  %252 = vmatpush1.msra.mxu0 %v65
  %253 = vmatprep.subr.mxu0 %v35
  %254 = vmatpush1.msra.mxu0 %v34
  %255 = vmatprep.subr.mxu0 %v28
  %256 = vmatpush1.msra.mxu0 %v27
  %257 = vmatprep.subr.mxu0 %v21
  %258 = vmatpush1.msra.mxu0 %v20
  %259 = vmatprep.subr.mxu0 0.0
  %260 = vmatpush2.msra.mxu0 0.0
  %261 = vmatprep.subr.mxu0 0.0
  %262 = vmatpush2.msra.mxu0 0.0
  %263 = vmatprep.subr.mxu0 0.0
  %264 = vmatpush2.msra.mxu0 0.0
  %265 = vmatprep.subr.mxu0 0.0
  %266 = vmatpush2.msra.mxu0 0.0
  %267 = vmatprep.subr.mxu0 0.0
  %268 = vmatpush2.msra.mxu0 0.0
  %269 = vmatprep.subr.mxu0 0.0
  %270 = vmatpush2.msra.mxu0 0.0
  %271 = vmatprep.subr.mxu0 0.0
  %272 = vmatpush2.msra.mxu0 0.0
  %273 = vmatprep.subr.mxu0 0.0
  %274 = vmatpush2.msra.mxu0 0.0
  %275 = vmatprep.subr.mxu0 0.0
  %276 = vmatpush2.msra.mxu0 0.0
  %277 = vmatprep.subr.mxu0 0.0
  %278 = vmatpush2.msra.mxu0 0.0
  %279 = vmatprep.subr.mxu0 0.0
  %280 = vmatpush2.msra.mxu0 0.0
  %281 = vmatprep.subr.mxu0 0.0
  %282 = vmatpush2.msra.mxu0 0.0
  %283 = vmatprep.subr.mxu0 0.0
  %284 = vmatpush2.msra.mxu0 0.0
  %285 = vmatprep.subr.mxu0 0.0
  %286 = vmatpush2.msra.mxu0 0.0
  %287 = vmatprep.subr.mxu0 0.0
  %288 = vmatpush2.msra.mxu0 0.0
  %289 = vmatprep.subr.mxu0 0.0
  %290 = vmatpush2.msra.mxu0 0.0
  %291 = vmatprep.mubr.f32.mxu0 0.0
  %292 = vmatmul.mubr.f32.gmra.mxu0 %v46
  %v293 = vpop.f32.mrf.mxu0
  %v294 = vadd.f32 0.0, %v293
  %v295 = vpop.f32.mrf.mxu0
  %v296 = vadd.f32 0.0, %v295
  %297 = vmatprep.mubr.f32.mxu0 0.0
  %298 = vmatmul.mubr.f32.gmra.mxu0 %v49
  %v299 = vpop.f32.mrf.mxu0
  %v300 = vadd.f32 0.0, %v299
  %v301 = vpop.f32.mrf.mxu0
  %v302 = vadd.f32 0.0, %v301
  %303 = vdwg.mxu0
  %304 = vmatprep.subr.mxu0 0.0
  %305 = vmatpush1.msra.mxu0 0.0
  %306 = vmatprep.subr.mxu0 0.0
  %307 = vmatpush1.msra.mxu0 0.0
  %308 = vmatprep.subr.mxu0 0.0
  %309 = vmatpush1.msra.mxu0 0.0
  %310 = vmatprep.subr.mxu0 0.0
  %311 = vmatpush1.msra.mxu0 0.0
  %312 = vmatprep.subr.mxu0 0.0
  %313 = vmatpush1.msra.mxu0 0.0
  %314 = vmatprep.subr.mxu0 0.0
  %315 = vmatpush1.msra.mxu0 0.0
  %316 = vmatprep.subr.mxu0 0.0
  %317 = vmatpush1.msra.mxu0 0.0
  %318 = vmatprep.subr.mxu0 0.0
  %319 = vmatpush1.msra.mxu0 0.0
  %320 = vmatprep.subr.mxu0 0.0
  %321 = vmatpush1.msra.mxu0 0.0
  %322 = vmatprep.subr.mxu0 0.0
  %323 = vmatpush1.msra.mxu0 0.0
  %324 = vmatprep.subr.mxu0 0.0
  %325 = vmatpush1.msra.mxu0 0.0
  %326 = vmatprep.subr.mxu0 0.0
  %327 = vmatpush1.msra.mxu0 0.0
  %328 = vmatprep.subr.mxu0 0.0
  %329 = vmatpush1.msra.mxu0 %v71
  %330 = vmatprep.subr.mxu0 0.0
  %331 = vmatpush1.msra.mxu0 %v36
  %332 = vmatprep.subr.mxu0 0.0
  %333 = vmatpush1.msra.mxu0 %v29
  %334 = vmatprep.subr.mxu0 0.0
  %335 = vmatpush1.msra.mxu0 %v22
  %336 = vmatprep.subr.mxu0 0.0
  %337 = vmatpush2.msra.mxu0 0.0
  %338 = vmatprep.subr.mxu0 0.0
  %339 = vmatpush2.msra.mxu0 0.0
  %340 = vmatprep.subr.mxu0 0.0
  %341 = vmatpush2.msra.mxu0 0.0
  %342 = vmatprep.subr.mxu0 0.0
  %343 = vmatpush2.msra.mxu0 0.0
  %344 = vmatprep.subr.mxu0 0.0
  %345 = vmatpush2.msra.mxu0 0.0
  %346 = vmatprep.subr.mxu0 0.0
  %347 = vmatpush2.msra.mxu0 0.0
  %348 = vmatprep.subr.mxu0 0.0
  %349 = vmatpush2.msra.mxu0 0.0
  %350 = vmatprep.subr.mxu0 0.0
  %351 = vmatpush2.msra.mxu0 0.0
  %352 = vmatprep.subr.mxu0 0.0
  %353 = vmatpush2.msra.mxu0 0.0
  %354 = vmatprep.subr.mxu0 0.0
  %355 = vmatpush2.msra.mxu0 0.0
  %356 = vmatprep.subr.mxu0 0.0
  %357 = vmatpush2.msra.mxu0 0.0
  %358 = vmatprep.subr.mxu0 0.0
  %359 = vmatpush2.msra.mxu0 0.0
  %360 = vmatprep.subr.mxu0 0.0
  %361 = vmatpush2.msra.mxu0 0.0
  %362 = vmatprep.subr.mxu0 0.0
  %363 = vmatpush2.msra.mxu0 0.0
  %364 = vmatprep.subr.mxu0 0.0
  %365 = vmatpush2.msra.mxu0 0.0
  %366 = vmatprep.subr.mxu0 0.0
  %367 = vmatpush2.msra.mxu0 0.0
  %368 = vmatprep.mubr.f32.mxu0 0.0
  %369 = vmatmul.mubr.f32.gmra.mxu0 %v46
  %v370 = vpop.f32.mrf.mxu0
  %v371 = vadd.f32 0.0, %v370
  %v372 = vpop.f32.mrf.mxu0
  %373 = vmatprep.mubr.f32.mxu0 0.0
  %374 = vmatmul.mubr.f32.gmra.mxu0 %v49
  %v375 = vpop.f32.mrf.mxu0
  %v376 = vadd.f32 0.0, %v375
  %v377 = vpop.f32.mrf.mxu0
  %378 = vdwg.mxu0
  %s379 = scalar_lea.vmem %s0, 224
  %v380 = vld [vmem:[%s379] sm:$0xff]
  %v381 = vld [vmem:[%s379 + $0x8] sm:$0xff]
  %v382 = vld [vmem:[%s379 + $0x10] sm:$0xff]
  %v383 = vld [vmem:[%s379 + $0x18] sm:$0xff]
  %v384 = vld [vmem:[%s379 + $0x20] sm:$0xff]
  %v385 = vld [vmem:[%s379 + $0x28] sm:$0xff]
  %v386 = vld [vmem:[%s379 + $0x30] sm:$0xff]
  %v387 = vld [vmem:[%s379 + $0x38] sm:$0xff]
  %v388 = vld [vmem:[%s379 + $0x40] sm:$0xff]
  %v389 = vld [vmem:[%s379 + $0x48] sm:$0xff]
  %v390 = vld [vmem:[%s379 + $0x50] sm:$0xff]
  %v391 = vld [vmem:[%s379 + $0x58] sm:$0xff]
  %v392 = vld [vmem:[%s379 + $0x60] sm:$0xff]
  %v393 = vld [vmem:[%s379 + $0x68] sm:$0xff]
  %v394 = vld [vmem:[%s379 + $0x70] sm:$0xff]
  %v395 = vld [vmem:[%s379 + $0x78] sm:$0xff]
  %v396 = vld [vmem:[%s379 + $0x80] sm:$0xff]
  %v397 = vld [vmem:[%s379 + $0x88] sm:$0xff]
  %v398 = vld [vmem:[%s379 + $0x90] sm:$0xff]
  %v399 = vld [vmem:[%s379 + $0x98] sm:$0xff]
  %v400 = vld [vmem:[%s379 + $0xa0] sm:$0xff]
  %v401 = vld [vmem:[%s379 + $0xa8] sm:$0x1]
  %v402 = vld [vmem:[%s379 + $0xb0] sm:$0x1]
  %v403 = vld [vmem:[%s379 + $0xb8] sm:$0x1]
  %v404 = vld [vmem:[%s379 + $0xc0] sm:$0x1]
  %v405 = vld [vmem:[%s379 + $0xc8] sm:$0x1]
  %v406 = vld [vmem:[%s379 + $0xd0] sm:$0x1]
  %v407 = vld [vmem:[%s379 + $0xd8] sm:$0x1]
  %v409 = vsel %vm51, %v401, 0
  %v412 = vsel %vm51, %v402, 0
  %v415 = vsel %vm51, %v403, 0
  %v418 = vsel %vm51, %v404, 0
  %v421 = vsel %vm51, %v405, 0
  %v424 = vsel %vm51, %v406, 0
  %v427 = vsel %vm51, %v407, 0
  %429 = vmatprep.subr.mxu0 0.0
  %430 = vmatpush1.msra.mxu0 0.0
  %431 = vmatprep.subr.mxu0 0.0
  %432 = vmatpush1.msra.mxu0 0.0
  %433 = vmatprep.subr.mxu0 0.0
  %434 = vmatpush1.msra.mxu0 0.0
  %435 = vmatprep.subr.mxu0 0.0
  %436 = vmatpush1.msra.mxu0 0.0
  %437 = vmatprep.subr.mxu0 0.0
  %438 = vmatpush1.msra.mxu0 0.0
  %439 = vmatprep.subr.mxu0 0.0
  %440 = vmatpush1.msra.mxu0 0.0
  %441 = vmatprep.subr.mxu0 0.0
  %442 = vmatpush1.msra.mxu0 0.0
  %443 = vmatprep.subr.mxu0 0.0
  %444 = vmatpush1.msra.mxu0 0.0
  %445 = vmatprep.subr.mxu0 0.0
  %446 = vmatpush1.msra.mxu0 0.0
  %447 = vmatprep.subr.mxu0 0.0
  %448 = vmatpush1.msra.mxu0 0.0
  %449 = vmatprep.subr.mxu0 0.0
  %450 = vmatpush1.msra.mxu0 0.0
  %451 = vmatprep.subr.mxu0 0.0
  %452 = vmatpush1.msra.mxu0 0.0
  %453 = vmatprep.subr.mxu0 %v412
  %454 = vmatpush1.msra.mxu0 %v409
  %455 = vmatprep.subr.mxu0 %v395
  %456 = vmatpush1.msra.mxu0 %v394
  %457 = vmatprep.subr.mxu0 %v388
  %458 = vmatpush1.msra.mxu0 %v387
  %459 = vmatprep.subr.mxu0 %v381
  %460 = vmatpush1.msra.mxu0 %v380
  %461 = vmatprep.subr.mxu0 0.0
  %462 = vmatpush2.msra.mxu0 0.0
  %463 = vmatprep.subr.mxu0 0.0
  %464 = vmatpush2.msra.mxu0 0.0
  %465 = vmatprep.subr.mxu0 0.0
  %466 = vmatpush2.msra.mxu0 0.0
  %467 = vmatprep.subr.mxu0 0.0
  %468 = vmatpush2.msra.mxu0 0.0
  %469 = vmatprep.subr.mxu0 0.0
  %470 = vmatpush2.msra.mxu0 0.0
  %471 = vmatprep.subr.mxu0 0.0
  %472 = vmatpush2.msra.mxu0 0.0
  %473 = vmatprep.subr.mxu0 0.0
  %474 = vmatpush2.msra.mxu0 0.0
  %475 = vmatprep.subr.mxu0 0.0
  %476 = vmatpush2.msra.mxu0 0.0
  %477 = vmatprep.subr.mxu0 0.0
  %478 = vmatpush2.msra.mxu0 0.0
  %479 = vmatprep.subr.mxu0 0.0
  %480 = vmatpush2.msra.mxu0 0.0
  %481 = vmatprep.subr.mxu0 0.0
  %482 = vmatpush2.msra.mxu0 0.0
  %483 = vmatprep.subr.mxu0 0.0
  %484 = vmatpush2.msra.mxu0 0.0
  %485 = vmatprep.subr.mxu0 0.0
  %486 = vmatpush2.msra.mxu0 0.0
  %487 = vmatprep.subr.mxu0 0.0
  %488 = vmatpush2.msra.mxu0 0.0
  %489 = vmatprep.subr.mxu0 0.0
  %490 = vmatpush2.msra.mxu0 0.0
  %491 = vmatprep.subr.mxu0 0.0
  %492 = vmatpush2.msra.mxu0 0.0
  %493 = vmatprep.mubr.f32.mxu0 0.0
  %494 = vmatmul.mubr.f32.gmra.mxu0 %v46
  %v495 = vpop.f32.mrf.mxu0
  %v496 = vadd.f32 0.0, %v495
  %v497 = vpop.f32.mrf.mxu0
  %v498 = vadd.f32 0.0, %v497
  %499 = vmatprep.mubr.f32.mxu0 0.0
  %500 = vmatmul.mubr.f32.gmra.mxu0 %v49
  %v501 = vpop.f32.mrf.mxu0
  %v502 = vadd.f32 0.0, %v501
  %v503 = vpop.f32.mrf.mxu0
  %v504 = vadd.f32 0.0, %v503
  %505 = vdwg.mxu0
  %506 = vmatprep.subr.mxu0 0.0
  %507 = vmatpush1.msra.mxu0 0.0
  %508 = vmatprep.subr.mxu0 0.0
  %509 = vmatpush1.msra.mxu0 0.0
  %510 = vmatprep.subr.mxu0 0.0
  %511 = vmatpush1.msra.mxu0 0.0
  %512 = vmatprep.subr.mxu0 0.0
  %513 = vmatpush1.msra.mxu0 0.0
  %514 = vmatprep.subr.mxu0 0.0
  %515 = vmatpush1.msra.mxu0 0.0
  %516 = vmatprep.subr.mxu0 0.0
  %517 = vmatpush1.msra.mxu0 0.0
  %518 = vmatprep.subr.mxu0 0.0
  %519 = vmatpush1.msra.mxu0 0.0
  %520 = vmatprep.subr.mxu0 0.0
  %521 = vmatpush1.msra.mxu0 0.0
  %522 = vmatprep.subr.mxu0 0.0
  %523 = vmatpush1.msra.mxu0 0.0
  %524 = vmatprep.subr.mxu0 0.0
  %525 = vmatpush1.msra.mxu0 0.0
  %526 = vmatprep.subr.mxu0 0.0
  %527 = vmatpush1.msra.mxu0 0.0
  %528 = vmatprep.subr.mxu0 0.0
  %529 = vmatpush1.msra.mxu0 0.0
  %530 = vmatprep.subr.mxu0 %v418
  %531 = vmatpush1.msra.mxu0 %v415
  %532 = vmatprep.subr.mxu0 %v397
  %533 = vmatpush1.msra.mxu0 %v396
  %534 = vmatprep.subr.mxu0 %v390
  %535 = vmatpush1.msra.mxu0 %v389
  %536 = vmatprep.subr.mxu0 %v383
  %537 = vmatpush1.msra.mxu0 %v382
  %538 = vmatprep.subr.mxu0 0.0
  %539 = vmatpush2.msra.mxu0 0.0
  %540 = vmatprep.subr.mxu0 0.0
  %541 = vmatpush2.msra.mxu0 0.0
  %542 = vmatprep.subr.mxu0 0.0
  %543 = vmatpush2.msra.mxu0 0.0
  %544 = vmatprep.subr.mxu0 0.0
  %545 = vmatpush2.msra.mxu0 0.0
  %546 = vmatprep.subr.mxu0 0.0
  %547 = vmatpush2.msra.mxu0 0.0
  %548 = vmatprep.subr.mxu0 0.0
  %549 = vmatpush2.msra.mxu0 0.0
  %550 = vmatprep.subr.mxu0 0.0
  %551 = vmatpush2.msra.mxu0 0.0
  %552 = vmatprep.subr.mxu0 0.0
  %553 = vmatpush2.msra.mxu0 0.0
  %554 = vmatprep.subr.mxu0 0.0
  %555 = vmatpush2.msra.mxu0 0.0
  %556 = vmatprep.subr.mxu0 0.0
  %557 = vmatpush2.msra.mxu0 0.0
  %558 = vmatprep.subr.mxu0 0.0
  %559 = vmatpush2.msra.mxu0 0.0
  %560 = vmatprep.subr.mxu0 0.0
  %561 = vmatpush2.msra.mxu0 0.0
  %562 = vmatprep.subr.mxu0 0.0
  %563 = vmatpush2.msra.mxu0 0.0
  %564 = vmatprep.subr.mxu0 0.0
  %565 = vmatpush2.msra.mxu0 0.0
  %566 = vmatprep.subr.mxu0 0.0
  %567 = vmatpush2.msra.mxu0 0.0
  %568 = vmatprep.subr.mxu0 0.0
  %569 = vmatpush2.msra.mxu0 0.0
  %570 = vmatprep.mubr.f32.mxu0 0.0
  %571 = vmatmul.mubr.f32.gmra.mxu0 %v46
  %v572 = vpop.f32.mrf.mxu0
  %v573 = vadd.f32 0.0, %v572
  %v574 = vpop.f32.mrf.mxu0
  %v575 = vadd.f32 0.0, %v574
  %576 = vmatprep.mubr.f32.mxu0 0.0
  %577 = vmatmul.mubr.f32.gmra.mxu0 %v49
  %v578 = vpop.f32.mrf.mxu0
  %v579 = vadd.f32 0.0, %v578
  %v580 = vpop.f32.mrf.mxu0
  %v581 = vadd.f32 0.0, %v580
  %582 = vdwg.mxu0
  %583 = vmatprep.subr.mxu0 0.0
  %584 = vmatpush1.msra.mxu0 0.0
  %585 = vmatprep.subr.mxu0 0.0
  %586 = vmatpush1.msra.mxu0 0.0
  %587 = vmatprep.subr.mxu0 0.0
  %588 = vmatpush1.msra.mxu0 0.0
  %589 = vmatprep.subr.mxu0 0.0
  %590 = vmatpush1.msra.mxu0 0.0
  %591 = vmatprep.subr.mxu0 0.0
  %592 = vmatpush1.msra.mxu0 0.0
  %593 = vmatprep.subr.mxu0 0.0
  %594 = vmatpush1.msra.mxu0 0.0
  %595 = vmatprep.subr.mxu0 0.0
  %596 = vmatpush1.msra.mxu0 0.0
  %597 = vmatprep.subr.mxu0 0.0
  %598 = vmatpush1.msra.mxu0 0.0
  %599 = vmatprep.subr.mxu0 0.0
  %600 = vmatpush1.msra.mxu0 0.0
  %601 = vmatprep.subr.mxu0 0.0
  %602 = vmatpush1.msra.mxu0 0.0
  %603 = vmatprep.subr.mxu0 0.0
  %604 = vmatpush1.msra.mxu0 0.0
  %605 = vmatprep.subr.mxu0 0.0
  %606 = vmatpush1.msra.mxu0 0.0
  %607 = vmatprep.subr.mxu0 %v424
  %608 = vmatpush1.msra.mxu0 %v421
  %609 = vmatprep.subr.mxu0 %v399
  %610 = vmatpush1.msra.mxu0 %v398
  %611 = vmatprep.subr.mxu0 %v392
  %612 = vmatpush1.msra.mxu0 %v391
  %613 = vmatprep.subr.mxu0 %v385
  %614 = vmatpush1.msra.mxu0 %v384
  %615 = vmatprep.subr.mxu0 0.0
  %616 = vmatpush2.msra.mxu0 0.0
  %617 = vmatprep.subr.mxu0 0.0
  %618 = vmatpush2.msra.mxu0 0.0
  %619 = vmatprep.subr.mxu0 0.0
  %620 = vmatpush2.msra.mxu0 0.0
  %621 = vmatprep.subr.mxu0 0.0
  %622 = vmatpush2.msra.mxu0 0.0
  %623 = vmatprep.subr.mxu0 0.0
  %624 = vmatpush2.msra.mxu0 0.0
  %625 = vmatprep.subr.mxu0 0.0
  %626 = vmatpush2.msra.mxu0 0.0
  %627 = vmatprep.subr.mxu0 0.0
  %628 = vmatpush2.msra.mxu0 0.0
  %629 = vmatprep.subr.mxu0 0.0
  %630 = vmatpush2.msra.mxu0 0.0
  %631 = vmatprep.subr.mxu0 0.0
  %632 = vmatpush2.msra.mxu0 0.0
  %633 = vmatprep.subr.mxu0 0.0
  %634 = vmatpush2.msra.mxu0 0.0
  %635 = vmatprep.subr.mxu0 0.0
  %636 = vmatpush2.msra.mxu0 0.0
  %637 = vmatprep.subr.mxu0 0.0
  %638 = vmatpush2.msra.mxu0 0.0
  %639 = vmatprep.subr.mxu0 0.0
  %640 = vmatpush2.msra.mxu0 0.0
  %641 = vmatprep.subr.mxu0 0.0
  %642 = vmatpush2.msra.mxu0 0.0
  %643 = vmatprep.subr.mxu0 0.0
  %644 = vmatpush2.msra.mxu0 0.0
  %645 = vmatprep.subr.mxu0 0.0
  %646 = vmatpush2.msra.mxu0 0.0
  %647 = vmatprep.mubr.f32.mxu0 0.0
  %648 = vmatmul.mubr.f32.gmra.mxu0 %v46
  %v649 = vpop.f32.mrf.mxu0
  %v650 = vadd.f32 0.0, %v649
  %v651 = vpop.f32.mrf.mxu0
  %v652 = vadd.f32 0.0, %v651
  %653 = vmatprep.mubr.f32.mxu0 0.0
  %654 = vmatmul.mubr.f32.gmra.mxu0 %v49
  %v655 = vpop.f32.mrf.mxu0
  %v656 = vadd.f32 0.0, %v655
  %v657 = vpop.f32.mrf.mxu0
  %v658 = vadd.f32 0.0, %v657
  %659 = vdwg.mxu0
  %660 = vmatprep.subr.mxu0 0.0
  %661 = vmatpush1.msra.mxu0 0.0
  %662 = vmatprep.subr.mxu0 0.0
  %663 = vmatpush1.msra.mxu0 0.0
  %664 = vmatprep.subr.mxu0 0.0
  %665 = vmatpush1.msra.mxu0 0.0
  %666 = vmatprep.subr.mxu0 0.0
  %667 = vmatpush1.msra.mxu0 0.0
  %668 = vmatprep.subr.mxu0 0.0
  %669 = vmatpush1.msra.mxu0 0.0
  %670 = vmatprep.subr.mxu0 0.0
  %671 = vmatpush1.msra.mxu0 0.0
  %672 = vmatprep.subr.mxu0 0.0
  %673 = vmatpush1.msra.mxu0 0.0
  %674 = vmatprep.subr.mxu0 0.0
  %675 = vmatpush1.msra.mxu0 0.0
  %676 = vmatprep.subr.mxu0 0.0
  %677 = vmatpush1.msra.mxu0 0.0
  %678 = vmatprep.subr.mxu0 0.0
  %679 = vmatpush1.msra.mxu0 0.0
  %680 = vmatprep.subr.mxu0 0.0
  %681 = vmatpush1.msra.mxu0 0.0
  %682 = vmatprep.subr.mxu0 0.0
  %683 = vmatpush1.msra.mxu0 0.0
  %684 = vmatprep.subr.mxu0 0.0
  %685 = vmatpush1.msra.mxu0 %v427
  %686 = vmatprep.subr.mxu0 0.0
  %687 = vmatpush1.msra.mxu0 %v400
  %688 = vmatprep.subr.mxu0 0.0
  %689 = vmatpush1.msra.mxu0 %v393
  %690 = vmatprep.subr.mxu0 0.0
  %691 = vmatpush1.msra.mxu0 %v386
  %692 = vmatprep.subr.mxu0 0.0
  %693 = vmatpush2.msra.mxu0 0.0
  %694 = vmatprep.subr.mxu0 0.0
  %695 = vmatpush2.msra.mxu0 0.0
  %696 = vmatprep.subr.mxu0 0.0
  %697 = vmatpush2.msra.mxu0 0.0
  %698 = vmatprep.subr.mxu0 0.0
  %699 = vmatpush2.msra.mxu0 0.0
  %700 = vmatprep.subr.mxu0 0.0
  %701 = vmatpush2.msra.mxu0 0.0
  %702 = vmatprep.subr.mxu0 0.0
  %703 = vmatpush2.msra.mxu0 0.0
  %704 = vmatprep.subr.mxu0 0.0
  %705 = vmatpush2.msra.mxu0 0.0
  %706 = vmatprep.subr.mxu0 0.0
  %707 = vmatpush2.msra.mxu0 0.0
  %708 = vmatprep.subr.mxu0 0.0
  %709 = vmatpush2.msra.mxu0 0.0
  %710 = vmatprep.subr.mxu0 0.0
  %711 = vmatpush2.msra.mxu0 0.0
  %712 = vmatprep.subr.mxu0 0.0
  %713 = vmatpush2.msra.mxu0 0.0
  %714 = vmatprep.subr.mxu0 0.0
  %715 = vmatpush2.msra.mxu0 0.0
  %716 = vmatprep.subr.mxu0 0.0
  %717 = vmatpush2.msra.mxu0 0.0
  %718 = vmatprep.subr.mxu0 0.0
  %719 = vmatpush2.msra.mxu0 0.0
  %720 = vmatprep.subr.mxu0 0.0
  %721 = vmatpush2.msra.mxu0 0.0
  %722 = vmatprep.subr.mxu0 0.0
  %723 = vmatpush2.msra.mxu0 0.0
  %724 = vmatprep.mubr.f32.mxu0 0.0
  %725 = vmatmul.mubr.f32.gmra.mxu0 %v46
  %v726 = vpop.f32.mrf.mxu0
  %v727 = vadd.f32 0.0, %v726
  %v728 = vpop.f32.mrf.mxu0
  %729 = vmatprep.mubr.f32.mxu0 0.0
  %730 = vmatmul.mubr.f32.gmra.mxu0 %v49
  %v731 = vpop.f32.mrf.mxu0
  %v732 = vadd.f32 0.0, %v731
  %v733 = vpop.f32.mrf.mxu0
  %734 = vdwg.mxu0
  %v735 = vmax.f32 %v140, %v496
  %v736 = vmax.f32 %v142, %v498
  %v737 = vmax.f32 %v217, %v573
  %v738 = vmax.f32 %v219, %v575
  %v739 = vmax.f32 %v294, %v650
  %v740 = vmax.f32 %v296, %v652
  %v741 = vmax.f32 %v371, %v727
  %v742 = vmax.f32 %v146, %v502
  %v743 = vmax.f32 %v148, %v504
  %v744 = vmax.f32 %v223, %v579
  %v745 = vmax.f32 %v225, %v581
  %v746 = vmax.f32 %v300, %v656
  %v747 = vmax.f32 %v302, %v658
  %v748 = vmax.f32 %v376, %v732
  %s749 = scalar_lea.vmem %s0, 448
  %v750 = vld [vmem:[%s749] sm:$0xff]
  %v751 = vld [vmem:[%s749 + $0x8] sm:$0xff]
  %v752 = vld [vmem:[%s749 + $0x10] sm:$0xff]
  %v753 = vld [vmem:[%s749 + $0x18] sm:$0xff]
  %v754 = vld [vmem:[%s749 + $0x20] sm:$0xff]
  %v755 = vld [vmem:[%s749 + $0x28] sm:$0xff]
  %v756 = vld [vmem:[%s749 + $0x30] sm:$0xff]
  %v757 = vld [vmem:[%s749 + $0x38] sm:$0xff]
  %v758 = vld [vmem:[%s749 + $0x40] sm:$0xff]
  %v759 = vld [vmem:[%s749 + $0x48] sm:$0xff]
  %v760 = vld [vmem:[%s749 + $0x50] sm:$0xff]
  %v761 = vld [vmem:[%s749 + $0x58] sm:$0xff]
  %v762 = vld [vmem:[%s749 + $0x60] sm:$0xff]
  %v763 = vld [vmem:[%s749 + $0x68] sm:$0xff]
  %v764 = vld [vmem:[%s749 + $0x70] sm:$0xff]
  %v765 = vld [vmem:[%s749 + $0x78] sm:$0xff]
  %v766 = vld [vmem:[%s749 + $0x80] sm:$0xff]
  %v767 = vld [vmem:[%s749 + $0x88] sm:$0xff]
  %v768 = vld [vmem:[%s749 + $0x90] sm:$0xff]
  %v769 = vld [vmem:[%s749 + $0x98] sm:$0xff]
  %v770 = vld [vmem:[%s749 + $0xa0] sm:$0xff]
  %v771 = vld [vmem:[%s749 + $0xa8] sm:$0x1]
  %v772 = vld [vmem:[%s749 + $0xb0] sm:$0x1]
  %v773 = vld [vmem:[%s749 + $0xb8] sm:$0x1]
  %v774 = vld [vmem:[%s749 + $0xc0] sm:$0x1]
  %v775 = vld [vmem:[%s749 + $0xc8] sm:$0x1]
  %v776 = vld [vmem:[%s749 + $0xd0] sm:$0x1]
  %v777 = vld [vmem:[%s749 + $0xd8] sm:$0x1]
  %v779 = vsel %vm51, %v771, 0
  %v782 = vsel %vm51, %v772, 0
  %v785 = vsel %vm51, %v773, 0
  %v788 = vsel %vm51, %v774, 0
  %v791 = vsel %vm51, %v775, 0
  %v794 = vsel %vm51, %v776, 0
  %v797 = vsel %vm51, %v777, 0
  %799 = vmatprep.subr.mxu0 0.0
  %800 = vmatpush1.msra.mxu0 0.0
  %801 = vmatprep.subr.mxu0 0.0
  %802 = vmatpush1.msra.mxu0 0.0
  %803 = vmatprep.subr.mxu0 0.0
  %804 = vmatpush1.msra.mxu0 0.0
  %805 = vmatprep.subr.mxu0 0.0
  %806 = vmatpush1.msra.mxu0 0.0
  %807 = vmatprep.subr.mxu0 0.0
  %808 = vmatpush1.msra.mxu0 0.0
  %809 = vmatprep.subr.mxu0 0.0
  %810 = vmatpush1.msra.mxu0 0.0
  %811 = vmatprep.subr.mxu0 0.0
  %812 = vmatpush1.msra.mxu0 0.0
  %813 = vmatprep.subr.mxu0 0.0
  %814 = vmatpush1.msra.mxu0 0.0
  %815 = vmatprep.subr.mxu0 0.0
  %816 = vmatpush1.msra.mxu0 0.0
  %817 = vmatprep.subr.mxu0 0.0
  %818 = vmatpush1.msra.mxu0 0.0
  %819 = vmatprep.subr.mxu0 0.0
  %820 = vmatpush1.msra.mxu0 0.0
  %821 = vmatprep.subr.mxu0 0.0
  %822 = vmatpush1.msra.mxu0 0.0
  %823 = vmatprep.subr.mxu0 %v782
  %824 = vmatpush1.msra.mxu0 %v779
  %825 = vmatprep.subr.mxu0 %v765
  %826 = vmatpush1.msra.mxu0 %v764
  %827 = vmatprep.subr.mxu0 %v758
  %828 = vmatpush1.msra.mxu0 %v757
  %829 = vmatprep.subr.mxu0 %v751
  %830 = vmatpush1.msra.mxu0 %v750
  %831 = vmatprep.subr.mxu0 0.0
  %832 = vmatpush2.msra.mxu0 0.0
  %833 = vmatprep.subr.mxu0 0.0
  %834 = vmatpush2.msra.mxu0 0.0
  %835 = vmatprep.subr.mxu0 0.0
  %836 = vmatpush2.msra.mxu0 0.0
  %837 = vmatprep.subr.mxu0 0.0
  %838 = vmatpush2.msra.mxu0 0.0
  %839 = vmatprep.subr.mxu0 0.0
  %840 = vmatpush2.msra.mxu0 0.0
  %841 = vmatprep.subr.mxu0 0.0
  %842 = vmatpush2.msra.mxu0 0.0
  %843 = vmatprep.subr.mxu0 0.0
  %844 = vmatpush2.msra.mxu0 0.0
  %845 = vmatprep.subr.mxu0 0.0
  %846 = vmatpush2.msra.mxu0 0.0
  %847 = vmatprep.subr.mxu0 0.0
  %848 = vmatpush2.msra.mxu0 0.0
  %849 = vmatprep.subr.mxu0 0.0
  %850 = vmatpush2.msra.mxu0 0.0
  %851 = vmatprep.subr.mxu0 0.0
  %852 = vmatpush2.msra.mxu0 0.0
  %853 = vmatprep.subr.mxu0 0.0
  %854 = vmatpush2.msra.mxu0 0.0
  %855 = vmatprep.subr.mxu0 0.0
  %856 = vmatpush2.msra.mxu0 0.0
  %857 = vmatprep.subr.mxu0 0.0
  %858 = vmatpush2.msra.mxu0 0.0
  %859 = vmatprep.subr.mxu0 0.0
  %860 = vmatpush2.msra.mxu0 0.0
  %861 = vmatprep.subr.mxu0 0.0
  %862 = vmatpush2.msra.mxu0 0.0
  %863 = vmatprep.mubr.f32.mxu0 0.0
  %864 = vmatmul.mubr.f32.gmra.mxu0 %v46
  %v865 = vpop.f32.mrf.mxu0
  %v866 = vadd.f32 0.0, %v865
  %v867 = vpop.f32.mrf.mxu0
  %v868 = vadd.f32 0.0, %v867
  %869 = vmatprep.mubr.f32.mxu0 0.0
  %870 = vmatmul.mubr.f32.gmra.mxu0 %v49
  %v871 = vpop.f32.mrf.mxu0
  %v872 = vadd.f32 0.0, %v871
  %v873 = vpop.f32.mrf.mxu0
  %v874 = vadd.f32 0.0, %v873
  %875 = vdwg.mxu0
  %876 = vmatprep.subr.mxu0 0.0
  %877 = vmatpush1.msra.mxu0 0.0
  %878 = vmatprep.subr.mxu0 0.0
  %879 = vmatpush1.msra.mxu0 0.0
  %880 = vmatprep.subr.mxu0 0.0
  %881 = vmatpush1.msra.mxu0 0.0
  %882 = vmatprep.subr.mxu0 0.0
  %883 = vmatpush1.msra.mxu0 0.0
  %884 = vmatprep.subr.mxu0 0.0
  %885 = vmatpush1.msra.mxu0 0.0
  %886 = vmatprep.subr.mxu0 0.0
  %887 = vmatpush1.msra.mxu0 0.0
  %888 = vmatprep.subr.mxu0 0.0
  %889 = vmatpush1.msra.mxu0 0.0
  %890 = vmatprep.subr.mxu0 0.0
  %891 = vmatpush1.msra.mxu0 0.0
  %892 = vmatprep.subr.mxu0 0.0
  %893 = vmatpush1.msra.mxu0 0.0
  %894 = vmatprep.subr.mxu0 0.0
  %895 = vmatpush1.msra.mxu0 0.0
  %896 = vmatprep.subr.mxu0 0.0
  %897 = vmatpush1.msra.mxu0 0.0
  %898 = vmatprep.subr.mxu0 0.0
  %899 = vmatpush1.msra.mxu0 0.0
  %900 = vmatprep.subr.mxu0 %v788
  %901 = vmatpush1.msra.mxu0 %v785
  %902 = vmatprep.subr.mxu0 %v767
  %903 = vmatpush1.msra.mxu0 %v766
  %904 = vmatprep.subr.mxu0 %v760
  %905 = vmatpush1.msra.mxu0 %v759
  %906 = vmatprep.subr.mxu0 %v753
  %907 = vmatpush1.msra.mxu0 %v752
  %908 = vmatprep.subr.mxu0 0.0
  %909 = vmatpush2.msra.mxu0 0.0
  %910 = vmatprep.subr.mxu0 0.0
  %911 = vmatpush2.msra.mxu0 0.0
  %912 = vmatprep.subr.mxu0 0.0
  %913 = vmatpush2.msra.mxu0 0.0
  %914 = vmatprep.subr.mxu0 0.0
  %915 = vmatpush2.msra.mxu0 0.0
  %916 = vmatprep.subr.mxu0 0.0
  %917 = vmatpush2.msra.mxu0 0.0
  %918 = vmatprep.subr.mxu0 0.0
  %919 = vmatpush2.msra.mxu0 0.0
  %920 = vmatprep.subr.mxu0 0.0
  %921 = vmatpush2.msra.mxu0 0.0
  %922 = vmatprep.subr.mxu0 0.0
  %923 = vmatpush2.msra.mxu0 0.0
  %924 = vmatprep.subr.mxu0 0.0
  %925 = vmatpush2.msra.mxu0 0.0
  %926 = vmatprep.subr.mxu0 0.0
  %927 = vmatpush2.msra.mxu0 0.0
  %928 = vmatprep.subr.mxu0 0.0
  %929 = vmatpush2.msra.mxu0 0.0
  %930 = vmatprep.subr.mxu0 0.0
  %931 = vmatpush2.msra.mxu0 0.0
  %932 = vmatprep.subr.mxu0 0.0
  %933 = vmatpush2.msra.mxu0 0.0
  %934 = vmatprep.subr.mxu0 0.0
  %935 = vmatpush2.msra.mxu0 0.0
  %936 = vmatprep.subr.mxu0 0.0
  %937 = vmatpush2.msra.mxu0 0.0
  %938 = vmatprep.subr.mxu0 0.0
  %939 = vmatpush2.msra.mxu0 0.0
  %940 = vmatprep.mubr.f32.mxu0 0.0
  %941 = vmatmul.mubr.f32.gmra.mxu0 %v46
  %v942 = vpop.f32.mrf.mxu0
  %v943 = vadd.f32 0.0, %v942
  %v944 = vpop.f32.mrf.mxu0
  %v945 = vadd.f32 0.0, %v944
  %946 = vmatprep.mubr.f32.mxu0 0.0
  %947 = vmatmul.mubr.f32.gmra.mxu0 %v49
  %v948 = vpop.f32.mrf.mxu0
  %v949 = vadd.f32 0.0, %v948
  %v950 = vpop.f32.mrf.mxu0
  %v951 = vadd.f32 0.0, %v950
  %952 = vdwg.mxu0
  %953 = vmatprep.subr.mxu0 0.0
  %954 = vmatpush1.msra.mxu0 0.0
  %955 = vmatprep.subr.mxu0 0.0
  %956 = vmatpush1.msra.mxu0 0.0
  %957 = vmatprep.subr.mxu0 0.0
  %958 = vmatpush1.msra.mxu0 0.0
  %959 = vmatprep.subr.mxu0 0.0
  %960 = vmatpush1.msra.mxu0 0.0
  %961 = vmatprep.subr.mxu0 0.0
  %962 = vmatpush1.msra.mxu0 0.0
  %963 = vmatprep.subr.mxu0 0.0
  %964 = vmatpush1.msra.mxu0 0.0
  %965 = vmatprep.subr.mxu0 0.0
  %966 = vmatpush1.msra.mxu0 0.0
  %967 = vmatprep.subr.mxu0 0.0
  %968 = vmatpush1.msra.mxu0 0.0
  %969 = vmatprep.subr.mxu0 0.0
  %970 = vmatpush1.msra.mxu0 0.0
  %971 = vmatprep.subr.mxu0 0.0
  %972 = vmatpush1.msra.mxu0 0.0
  %973 = vmatprep.subr.mxu0 0.0
  %974 = vmatpush1.msra.mxu0 0.0
  %975 = vmatprep.subr.mxu0 0.0
  %976 = vmatpush1.msra.mxu0 0.0
  %977 = vmatprep.subr.mxu0 %v794
  %978 = vmatpush1.msra.mxu0 %v791
  %979 = vmatprep.subr.mxu0 %v769
  %980 = vmatpush1.msra.mxu0 %v768
  %981 = vmatprep.subr.mxu0 %v762
  %982 = vmatpush1.msra.mxu0 %v761
  %983 = vmatprep.subr.mxu0 %v755
  %984 = vmatpush1.msra.mxu0 %v754
  %985 = vmatprep.subr.mxu0 0.0
  %986 = vmatpush2.msra.mxu0 0.0
  %987 = vmatprep.subr.mxu0 0.0
  %988 = vmatpush2.msra.mxu0 0.0
  %989 = vmatprep.subr.mxu0 0.0
  %990 = vmatpush2.msra.mxu0 0.0
  %991 = vmatprep.subr.mxu0 0.0
  %992 = vmatpush2.msra.mxu0 0.0
  %993 = vmatprep.subr.mxu0 0.0
  %994 = vmatpush2.msra.mxu0 0.0
  %995 = vmatprep.subr.mxu0 0.0
  %996 = vmatpush2.msra.mxu0 0.0
  %997 = vmatprep.subr.mxu0 0.0
  %998 = vmatpush2.msra.mxu0 0.0
  %999 = vmatprep.subr.mxu0 0.0
  %1000 = vmatpush2.msra.mxu0 0.0
  %1001 = vmatprep.subr.mxu0 0.0
  %1002 = vmatpush2.msra.mxu0 0.0
  %1003 = vmatprep.subr.mxu0 0.0
  %1004 = vmatpush2.msra.mxu0 0.0
  %1005 = vmatprep.subr.mxu0 0.0
  %1006 = vmatpush2.msra.mxu0 0.0
  %1007 = vmatprep.subr.mxu0 0.0
  %1008 = vmatpush2.msra.mxu0 0.0
  %1009 = vmatprep.subr.mxu0 0.0
  %1010 = vmatpush2.msra.mxu0 0.0
  %1011 = vmatprep.subr.mxu0 0.0
  %1012 = vmatpush2.msra.mxu0 0.0
  %1013 = vmatprep.subr.mxu0 0.0
  %1014 = vmatpush2.msra.mxu0 0.0
  %1015 = vmatprep.subr.mxu0 0.0
  %1016 = vmatpush2.msra.mxu0 0.0
  %1017 = vmatprep.mubr.f32.mxu0 0.0
  %1018 = vmatmul.mubr.f32.gmra.mxu0 %v46
  %v1019 = vpop.f32.mrf.mxu0
  %v1020 = vadd.f32 0.0, %v1019
  %v1021 = vpop.f32.mrf.mxu0
  %v1022 = vadd.f32 0.0, %v1021
  %1023 = vmatprep.mubr.f32.mxu0 0.0
  %1024 = vmatmul.mubr.f32.gmra.mxu0 %v49
  %v1025 = vpop.f32.mrf.mxu0
  %v1026 = vadd.f32 0.0, %v1025
  %v1027 = vpop.f32.mrf.mxu0
  %v1028 = vadd.f32 0.0, %v1027
  %1029 = vdwg.mxu0
  %1030 = vmatprep.subr.mxu0 0.0
  %1031 = vmatpush1.msra.mxu0 0.0
  %1032 = vmatprep.subr.mxu0 0.0
  %1033 = vmatpush1.msra.mxu0 0.0
  %1034 = vmatprep.subr.mxu0 0.0
  %1035 = vmatpush1.msra.mxu0 0.0
  %1036 = vmatprep.subr.mxu0 0.0
  %1037 = vmatpush1.msra.mxu0 0.0
  %1038 = vmatprep.subr.mxu0 0.0
  %1039 = vmatpush1.msra.mxu0 0.0
  %1040 = vmatprep.subr.mxu0 0.0
  %1041 = vmatpush1.msra.mxu0 0.0
  %1042 = vmatprep.subr.mxu0 0.0
  %1043 = vmatpush1.msra.mxu0 0.0
  %1044 = vmatprep.subr.mxu0 0.0
  %1045 = vmatpush1.msra.mxu0 0.0
  %1046 = vmatprep.subr.mxu0 0.0
  %1047 = vmatpush1.msra.mxu0 0.0
  %1048 = vmatprep.subr.mxu0 0.0
  %1049 = vmatpush1.msra.mxu0 0.0
  %1050 = vmatprep.subr.mxu0 0.0
  %1051 = vmatpush1.msra.mxu0 0.0
  %1052 = vmatprep.subr.mxu0 0.0
  %1053 = vmatpush1.msra.mxu0 0.0
  %1054 = vmatprep.subr.mxu0 0.0
  %1055 = vmatpush1.msra.mxu0 %v797
  %1056 = vmatprep.subr.mxu0 0.0
  %1057 = vmatpush1.msra.mxu0 %v770
  %1058 = vmatprep.subr.mxu0 0.0
  %1059 = vmatpush1.msra.mxu0 %v763
  %1060 = vmatprep.subr.mxu0 0.0
  %1061 = vmatpush1.msra.mxu0 %v756
  %1062 = vmatprep.subr.mxu0 0.0
  %1063 = vmatpush2.msra.mxu0 0.0
  %1064 = vmatprep.subr.mxu0 0.0
  %1065 = vmatpush2.msra.mxu0 0.0
  %1066 = vmatprep.subr.mxu0 0.0
  %1067 = vmatpush2.msra.mxu0 0.0
  %1068 = vmatprep.subr.mxu0 0.0
  %1069 = vmatpush2.msra.mxu0 0.0
  %1070 = vmatprep.subr.mxu0 0.0
  %1071 = vmatpush2.msra.mxu0 0.0
  %1072 = vmatprep.subr.mxu0 0.0
  %1073 = vmatpush2.msra.mxu0 0.0
  %1074 = vmatprep.subr.mxu0 0.0
  %1075 = vmatpush2.msra.mxu0 0.0
  %1076 = vmatprep.subr.mxu0 0.0
  %1077 = vmatpush2.msra.mxu0 0.0
  %1078 = vmatprep.subr.mxu0 0.0
  %1079 = vmatpush2.msra.mxu0 0.0
  %1080 = vmatprep.subr.mxu0 0.0
  %1081 = vmatpush2.msra.mxu0 0.0
  %1082 = vmatprep.subr.mxu0 0.0
  %1083 = vmatpush2.msra.mxu0 0.0
  %1084 = vmatprep.subr.mxu0 0.0
  %1085 = vmatpush2.msra.mxu0 0.0
  %1086 = vmatprep.subr.mxu0 0.0
  %1087 = vmatpush2.msra.mxu0 0.0
  %1088 = vmatprep.subr.mxu0 0.0
  %1089 = vmatpush2.msra.mxu0 0.0
  %1090 = vmatprep.subr.mxu0 0.0
  %1091 = vmatpush2.msra.mxu0 0.0
  %1092 = vmatprep.subr.mxu0 0.0
  %1093 = vmatpush2.msra.mxu0 0.0
  %1094 = vmatprep.mubr.f32.mxu0 0.0
  %1095 = vmatmul.mubr.f32.gmra.mxu0 %v46
  %v1096 = vpop.f32.mrf.mxu0
  %v1097 = vadd.f32 0.0, %v1096
  %v1098 = vpop.f32.mrf.mxu0
  %1099 = vmatprep.mubr.f32.mxu0 0.0
  %1100 = vmatmul.mubr.f32.gmra.mxu0 %v49
  %v1101 = vpop.f32.mrf.mxu0
  %v1102 = vadd.f32 0.0, %v1101
  %v1103 = vpop.f32.mrf.mxu0
  %1104 = vdwg.mxu0
  %v1105 = vmax.f32 %v735, %v866
  %v1106 = vmax.f32 %v736, %v868
  %v1107 = vmax.f32 %v737, %v943
  %v1108 = vmax.f32 %v738, %v945
  %v1109 = vmax.f32 %v739, %v1020
  %v1110 = vmax.f32 %v740, %v1022
  %v1111 = vmax.f32 %v741, %v1097
  %v1112 = vmax.f32 %v742, %v872
  %v1113 = vmax.f32 %v743, %v874
  %v1114 = vmax.f32 %v744, %v949
  %v1115 = vmax.f32 %v745, %v951
  %v1116 = vmax.f32 %v746, %v1026
  %v1117 = vmax.f32 %v747, %v1028
  %v1118 = vmax.f32 %v748, %v1102
  %s1119 = scalar_lea.vmem %s0, 672
  %v1120 = vld [vmem:[%s1119] sm:$0xff]
  %v1121 = vld [vmem:[%s1119 + $0x8] sm:$0xff]
  %v1122 = vld [vmem:[%s1119 + $0x10] sm:$0xff]
  %v1123 = vld [vmem:[%s1119 + $0x18] sm:$0xff]
  %v1124 = vld [vmem:[%s1119 + $0x20] sm:$0xff]
  %v1125 = vld [vmem:[%s1119 + $0x28] sm:$0xff]
  %v1126 = vld [vmem:[%s1119 + $0x30] sm:$0xff]
  %v1127 = vld [vmem:[%s1119 + $0x38] sm:$0xff]
  %v1128 = vld [vmem:[%s1119 + $0x40] sm:$0xff]
  %v1129 = vld [vmem:[%s1119 + $0x48] sm:$0xff]
  %v1130 = vld [vmem:[%s1119 + $0x50] sm:$0xff]
  %v1131 = vld [vmem:[%s1119 + $0x58] sm:$0xff]
  %v1132 = vld [vmem:[%s1119 + $0x60] sm:$0xff]
  %v1133 = vld [vmem:[%s1119 + $0x68] sm:$0xff]
  %v1134 = vld [vmem:[%s1119 + $0x70] sm:$0xff]
  %v1135 = vld [vmem:[%s1119 + $0x78] sm:$0xff]
  %v1136 = vld [vmem:[%s1119 + $0x80] sm:$0xff]
  %v1137 = vld [vmem:[%s1119 + $0x88] sm:$0xff]
  %v1138 = vld [vmem:[%s1119 + $0x90] sm:$0xff]
  %v1139 = vld [vmem:[%s1119 + $0x98] sm:$0xff]
  %v1140 = vld [vmem:[%s1119 + $0xa0] sm:$0xff]
  %v1141 = vld [vmem:[%s1119 + $0xa8] sm:$0x1]
  %v1142 = vld [vmem:[%s1119 + $0xb0] sm:$0x1]
  %v1143 = vld [vmem:[%s1119 + $0xb8] sm:$0x1]
  %v1144 = vld [vmem:[%s1119 + $0xc0] sm:$0x1]
  %v1145 = vld [vmem:[%s1119 + $0xc8] sm:$0x1]
  %v1146 = vld [vmem:[%s1119 + $0xd0] sm:$0x1]
  %v1147 = vld [vmem:[%s1119 + $0xd8] sm:$0x1]
  %v1149 = vsel %vm51, %v1141, 0
  %v1152 = vsel %vm51, %v1142, 0
  %v1155 = vsel %vm51, %v1143, 0
  %v1158 = vsel %vm51, %v1144, 0
  %v1161 = vsel %vm51, %v1145, 0
  %v1164 = vsel %vm51, %v1146, 0
  %v1167 = vsel %vm51, %v1147, 0
  %1169 = vmatprep.subr.mxu0 0.0
  %1170 = vmatpush1.msra.mxu0 0.0
  %1171 = vmatprep.subr.mxu0 0.0
  %1172 = vmatpush1.msra.mxu0 0.0
  %1173 = vmatprep.subr.mxu0 0.0
  %1174 = vmatpush1.msra.mxu0 0.0
  %1175 = vmatprep.subr.mxu0 0.0
  %1176 = vmatpush1.msra.mxu0 0.0
  %1177 = vmatprep.subr.mxu0 0.0
  %1178 = vmatpush1.msra.mxu0 0.0
  %1179 = vmatprep.subr.mxu0 0.0
  %1180 = vmatpush1.msra.mxu0 0.0
  %1181 = vmatprep.subr.mxu0 0.0
  %1182 = vmatpush1.msra.mxu0 0.0
  %1183 = vmatprep.subr.mxu0 0.0
  %1184 = vmatpush1.msra.mxu0 0.0
  %1185 = vmatprep.subr.mxu0 0.0
  %1186 = vmatpush1.msra.mxu0 0.0
  %1187 = vmatprep.subr.mxu0 0.0
  %1188 = vmatpush1.msra.mxu0 0.0
  %1189 = vmatprep.subr.mxu0 0.0
  %1190 = vmatpush1.msra.mxu0 0.0
  %1191 = vmatprep.subr.mxu0 0.0
  %1192 = vmatpush1.msra.mxu0 0.0
  %1193 = vmatprep.subr.mxu0 %v1152
  %1194 = vmatpush1.msra.mxu0 %v1149
  %1195 = vmatprep.subr.mxu0 %v1135
  %1196 = vmatpush1.msra.mxu0 %v1134
  %1197 = vmatprep.subr.mxu0 %v1128
  %1198 = vmatpush1.msra.mxu0 %v1127
  %1199 = vmatprep.subr.mxu0 %v1121
  %1200 = vmatpush1.msra.mxu0 %v1120
  %1201 = vmatprep.subr.mxu0 0.0
  %1202 = vmatpush2.msra.mxu0 0.0
  %1203 = vmatprep.subr.mxu0 0.0
  %1204 = vmatpush2.msra.mxu0 0.0
  %1205 = vmatprep.subr.mxu0 0.0
  %1206 = vmatpush2.msra.mxu0 0.0
  %1207 = vmatprep.subr.mxu0 0.0
  %1208 = vmatpush2.msra.mxu0 0.0
  %1209 = vmatprep.subr.mxu0 0.0
  %1210 = vmatpush2.msra.mxu0 0.0
  %1211 = vmatprep.subr.mxu0 0.0
  %1212 = vmatpush2.msra.mxu0 0.0
  %1213 = vmatprep.subr.mxu0 0.0
  %1214 = vmatpush2.msra.mxu0 0.0
  %1215 = vmatprep.subr.mxu0 0.0
  %1216 = vmatpush2.msra.mxu0 0.0
  %1217 = vmatprep.subr.mxu0 0.0
  %1218 = vmatpush2.msra.mxu0 0.0
  %1219 = vmatprep.subr.mxu0 0.0
  %1220 = vmatpush2.msra.mxu0 0.0
  %1221 = vmatprep.subr.mxu0 0.0
  %1222 = vmatpush2.msra.mxu0 0.0
  %1223 = vmatprep.subr.mxu0 0.0
  %1224 = vmatpush2.msra.mxu0 0.0
  %1225 = vmatprep.subr.mxu0 0.0
  %1226 = vmatpush2.msra.mxu0 0.0
  %1227 = vmatprep.subr.mxu0 0.0
  %1228 = vmatpush2.msra.mxu0 0.0
  %1229 = vmatprep.subr.mxu0 0.0
  %1230 = vmatpush2.msra.mxu0 0.0
  %1231 = vmatprep.subr.mxu0 0.0
  %1232 = vmatpush2.msra.mxu0 0.0
  %1233 = vmatprep.mubr.f32.mxu0 0.0
  %1234 = vmatmul.mubr.f32.gmra.mxu0 %v46
  %v1235 = vpop.f32.mrf.mxu0
  %v1236 = vadd.f32 0.0, %v1235
  %v1237 = vpop.f32.mrf.mxu0
  %v1238 = vadd.f32 0.0, %v1237
  %1239 = vmatprep.mubr.f32.mxu0 0.0
  %1240 = vmatmul.mubr.f32.gmra.mxu0 %v49
  %v1241 = vpop.f32.mrf.mxu0
  %v1242 = vadd.f32 0.0, %v1241
  %v1243 = vpop.f32.mrf.mxu0
  %v1244 = vadd.f32 0.0, %v1243
  %1245 = vdwg.mxu0
  %1246 = vmatprep.subr.mxu0 0.0
  %1247 = vmatpush1.msra.mxu0 0.0
  %1248 = vmatprep.subr.mxu0 0.0
  %1249 = vmatpush1.msra.mxu0 0.0
  %1250 = vmatprep.subr.mxu0 0.0
  %1251 = vmatpush1.msra.mxu0 0.0
  %1252 = vmatprep.subr.mxu0 0.0
  %1253 = vmatpush1.msra.mxu0 0.0
  %1254 = vmatprep.subr.mxu0 0.0
  %1255 = vmatpush1.msra.mxu0 0.0
  %1256 = vmatprep.subr.mxu0 0.0
  %1257 = vmatpush1.msra.mxu0 0.0
  %1258 = vmatprep.subr.mxu0 0.0
  %1259 = vmatpush1.msra.mxu0 0.0
  %1260 = vmatprep.subr.mxu0 0.0
  %1261 = vmatpush1.msra.mxu0 0.0
  %1262 = vmatprep.subr.mxu0 0.0
  %1263 = vmatpush1.msra.mxu0 0.0
  %1264 = vmatprep.subr.mxu0 0.0
  %1265 = vmatpush1.msra.mxu0 0.0
  %1266 = vmatprep.subr.mxu0 0.0
  %1267 = vmatpush1.msra.mxu0 0.0
  %1268 = vmatprep.subr.mxu0 0.0
  %1269 = vmatpush1.msra.mxu0 0.0
  %1270 = vmatprep.subr.mxu0 %v1158
  %1271 = vmatpush1.msra.mxu0 %v1155
  %1272 = vmatprep.subr.mxu0 %v1137
  %1273 = vmatpush1.msra.mxu0 %v1136
  %1274 = vmatprep.subr.mxu0 %v1130
  %1275 = vmatpush1.msra.mxu0 %v1129
  %1276 = vmatprep.subr.mxu0 %v1123
  %1277 = vmatpush1.msra.mxu0 %v1122
  %1278 = vmatprep.subr.mxu0 0.0
  %1279 = vmatpush2.msra.mxu0 0.0
  %1280 = vmatprep.subr.mxu0 0.0
  %1281 = vmatpush2.msra.mxu0 0.0
  %1282 = vmatprep.subr.mxu0 0.0
  %1283 = vmatpush2.msra.mxu0 0.0
  %1284 = vmatprep.subr.mxu0 0.0
  %1285 = vmatpush2.msra.mxu0 0.0
  %1286 = vmatprep.subr.mxu0 0.0
  %1287 = vmatpush2.msra.mxu0 0.0
  %1288 = vmatprep.subr.mxu0 0.0
  %1289 = vmatpush2.msra.mxu0 0.0
  %1290 = vmatprep.subr.mxu0 0.0
  %1291 = vmatpush2.msra.mxu0 0.0
  %1292 = vmatprep.subr.mxu0 0.0
  %1293 = vmatpush2.msra.mxu0 0.0
  %1294 = vmatprep.subr.mxu0 0.0
  %1295 = vmatpush2.msra.mxu0 0.0
  %1296 = vmatprep.subr.mxu0 0.0
  %1297 = vmatpush2.msra.mxu0 0.0
  %1298 = vmatprep.subr.mxu0 0.0
  %1299 = vmatpush2.msra.mxu0 0.0
  %1300 = vmatprep.subr.mxu0 0.0
  %1301 = vmatpush2.msra.mxu0 0.0
  %1302 = vmatprep.subr.mxu0 0.0
  %1303 = vmatpush2.msra.mxu0 0.0
  %1304 = vmatprep.subr.mxu0 0.0
  %1305 = vmatpush2.msra.mxu0 0.0
  %1306 = vmatprep.subr.mxu0 0.0
  %1307 = vmatpush2.msra.mxu0 0.0
  %1308 = vmatprep.subr.mxu0 0.0
  %1309 = vmatpush2.msra.mxu0 0.0
  %1310 = vmatprep.mubr.f32.mxu0 0.0
  %1311 = vmatmul.mubr.f32.gmra.mxu0 %v46
  %v1312 = vpop.f32.mrf.mxu0
  %v1313 = vadd.f32 0.0, %v1312
  %v1314 = vpop.f32.mrf.mxu0
  %v1315 = vadd.f32 0.0, %v1314
  %1316 = vmatprep.mubr.f32.mxu0 0.0
  %1317 = vmatmul.mubr.f32.gmra.mxu0 %v49
  %v1318 = vpop.f32.mrf.mxu0
  %v1319 = vadd.f32 0.0, %v1318
  %v1320 = vpop.f32.mrf.mxu0
  %v1321 = vadd.f32 0.0, %v1320
  %1322 = vdwg.mxu0
  %1323 = vmatprep.subr.mxu0 0.0
  %1324 = vmatpush1.msra.mxu0 0.0
  %1325 = vmatprep.subr.mxu0 0.0
  %1326 = vmatpush1.msra.mxu0 0.0
  %1327 = vmatprep.subr.mxu0 0.0
  %1328 = vmatpush1.msra.mxu0 0.0
  %1329 = vmatprep.subr.mxu0 0.0
  %1330 = vmatpush1.msra.mxu0 0.0
  %1331 = vmatprep.subr.mxu0 0.0
  %1332 = vmatpush1.msra.mxu0 0.0
  %1333 = vmatprep.subr.mxu0 0.0
  %1334 = vmatpush1.msra.mxu0 0.0
  %1335 = vmatprep.subr.mxu0 0.0
  %1336 = vmatpush1.msra.mxu0 0.0
  %1337 = vmatprep.subr.mxu0 0.0
  %1338 = vmatpush1.msra.mxu0 0.0
  %1339 = vmatprep.subr.mxu0 0.0
  %1340 = vmatpush1.msra.mxu0 0.0
  %1341 = vmatprep.subr.mxu0 0.0
  %1342 = vmatpush1.msra.mxu0 0.0
  %1343 = vmatprep.subr.mxu0 0.0
  %1344 = vmatpush1.msra.mxu0 0.0
  %1345 = vmatprep.subr.mxu0 0.0
  %1346 = vmatpush1.msra.mxu0 0.0
  %1347 = vmatprep.subr.mxu0 %v1164
  %1348 = vmatpush1.msra.mxu0 %v1161
  %1349 = vmatprep.subr.mxu0 %v1139
  %1350 = vmatpush1.msra.mxu0 %v1138
  %1351 = vmatprep.subr.mxu0 %v1132
  %1352 = vmatpush1.msra.mxu0 %v1131
  %1353 = vmatprep.subr.mxu0 %v1125
  %1354 = vmatpush1.msra.mxu0 %v1124
  %1355 = vmatprep.subr.mxu0 0.0
  %1356 = vmatpush2.msra.mxu0 0.0
  %1357 = vmatprep.subr.mxu0 0.0
  %1358 = vmatpush2.msra.mxu0 0.0
  %1359 = vmatprep.subr.mxu0 0.0
  %1360 = vmatpush2.msra.mxu0 0.0
  %1361 = vmatprep.subr.mxu0 0.0
  %1362 = vmatpush2.msra.mxu0 0.0
  %1363 = vmatprep.subr.mxu0 0.0
  %1364 = vmatpush2.msra.mxu0 0.0
  %1365 = vmatprep.subr.mxu0 0.0
  %1366 = vmatpush2.msra.mxu0 0.0
  %1367 = vmatprep.subr.mxu0 0.0
  %1368 = vmatpush2.msra.mxu0 0.0
  %1369 = vmatprep.subr.mxu0 0.0
  %1370 = vmatpush2.msra.mxu0 0.0
  %1371 = vmatprep.subr.mxu0 0.0
  %1372 = vmatpush2.msra.mxu0 0.0
  %1373 = vmatprep.subr.mxu0 0.0
  %1374 = vmatpush2.msra.mxu0 0.0
  %1375 = vmatprep.subr.mxu0 0.0
  %1376 = vmatpush2.msra.mxu0 0.0
  %1377 = vmatprep.subr.mxu0 0.0
  %1378 = vmatpush2.msra.mxu0 0.0
  %1379 = vmatprep.subr.mxu0 0.0
  %1380 = vmatpush2.msra.mxu0 0.0
  %1381 = vmatprep.subr.mxu0 0.0
  %1382 = vmatpush2.msra.mxu0 0.0
  %1383 = vmatprep.subr.mxu0 0.0
  %1384 = vmatpush2.msra.mxu0 0.0
  %1385 = vmatprep.subr.mxu0 0.0
  %1386 = vmatpush2.msra.mxu0 0.0
  %1387 = vmatprep.mubr.f32.mxu0 0.0
  %1388 = vmatmul.mubr.f32.gmra.mxu0 %v46
  %v1389 = vpop.f32.mrf.mxu0
  %v1390 = vadd.f32 0.0, %v1389
  %v1391 = vpop.f32.mrf.mxu0
  %v1392 = vadd.f32 0.0, %v1391
  %1393 = vmatprep.mubr.f32.mxu0 0.0
  %1394 = vmatmul.mubr.f32.gmra.mxu0 %v49
  %v1395 = vpop.f32.mrf.mxu0
  %v1396 = vadd.f32 0.0, %v1395
  %v1397 = vpop.f32.mrf.mxu0
  %v1398 = vadd.f32 0.0, %v1397
  %1399 = vdwg.mxu0
  %1400 = vmatprep.subr.mxu0 0.0
  %1401 = vmatpush1.msra.mxu0 0.0
  %1402 = vmatprep.subr.mxu0 0.0
  %1403 = vmatpush1.msra.mxu0 0.0
  %1404 = vmatprep.subr.mxu0 0.0
  %1405 = vmatpush1.msra.mxu0 0.0
  %1406 = vmatprep.subr.mxu0 0.0
  %1407 = vmatpush1.msra.mxu0 0.0
  %1408 = vmatprep.subr.mxu0 0.0
  %1409 = vmatpush1.msra.mxu0 0.0
  %1410 = vmatprep.subr.mxu0 0.0
  %1411 = vmatpush1.msra.mxu0 0.0
  %1412 = vmatprep.subr.mxu0 0.0
  %1413 = vmatpush1.msra.mxu0 0.0
  %1414 = vmatprep.subr.mxu0 0.0
  %1415 = vmatpush1.msra.mxu0 0.0
  %1416 = vmatprep.subr.mxu0 0.0
  %1417 = vmatpush1.msra.mxu0 0.0
  %1418 = vmatprep.subr.mxu0 0.0
  %1419 = vmatpush1.msra.mxu0 0.0
  %1420 = vmatprep.subr.mxu0 0.0
  %1421 = vmatpush1.msra.mxu0 0.0
  %1422 = vmatprep.subr.mxu0 0.0
  %1423 = vmatpush1.msra.mxu0 0.0
  %1424 = vmatprep.subr.mxu0 0.0
  %1425 = vmatpush1.msra.mxu0 %v1167
  %1426 = vmatprep.subr.mxu0 0.0
  %1427 = vmatpush1.msra.mxu0 %v1140
  %1428 = vmatprep.subr.mxu0 0.0
  %1429 = vmatpush1.msra.mxu0 %v1133
  %1430 = vmatprep.subr.mxu0 0.0
  %1431 = vmatpush1.msra.mxu0 %v1126
  %1432 = vmatprep.subr.mxu0 0.0
  %1433 = vmatpush2.msra.mxu0 0.0
  %1434 = vmatprep.subr.mxu0 0.0
  %1435 = vmatpush2.msra.mxu0 0.0
  %1436 = vmatprep.subr.mxu0 0.0
  %1437 = vmatpush2.msra.mxu0 0.0
  %1438 = vmatprep.subr.mxu0 0.0
  %1439 = vmatpush2.msra.mxu0 0.0
  %1440 = vmatprep.subr.mxu0 0.0
  %1441 = vmatpush2.msra.mxu0 0.0
  %1442 = vmatprep.subr.mxu0 0.0
  %1443 = vmatpush2.msra.mxu0 0.0
  %1444 = vmatprep.subr.mxu0 0.0
  %1445 = vmatpush2.msra.mxu0 0.0
  %1446 = vmatprep.subr.mxu0 0.0
  %1447 = vmatpush2.msra.mxu0 0.0
  %1448 = vmatprep.subr.mxu0 0.0
  %1449 = vmatpush2.msra.mxu0 0.0
  %1450 = vmatprep.subr.mxu0 0.0
  %1451 = vmatpush2.msra.mxu0 0.0
  %1452 = vmatprep.subr.mxu0 0.0
  %1453 = vmatpush2.msra.mxu0 0.0
  %1454 = vmatprep.subr.mxu0 0.0
  %1455 = vmatpush2.msra.mxu0 0.0
  %1456 = vmatprep.subr.mxu0 0.0
  %1457 = vmatpush2.msra.mxu0 0.0
  %1458 = vmatprep.subr.mxu0 0.0
  %1459 = vmatpush2.msra.mxu0 0.0
  %1460 = vmatprep.subr.mxu0 0.0
  %1461 = vmatpush2.msra.mxu0 0.0
  %1462 = vmatprep.subr.mxu0 0.0
  %1463 = vmatpush2.msra.mxu0 0.0
  %1464 = vmatprep.mubr.f32.mxu0 0.0
  %1465 = vmatmul.mubr.f32.gmra.mxu0 %v46
  %v1466 = vpop.f32.mrf.mxu0
  %v1467 = vadd.f32 0.0, %v1466
  %v1468 = vpop.f32.mrf.mxu0
  %1469 = vmatprep.mubr.f32.mxu0 0.0
  %1470 = vmatmul.mubr.f32.gmra.mxu0 %v49
  %v1471 = vpop.f32.mrf.mxu0
  %v1472 = vadd.f32 0.0, %v1471
  %v1473 = vpop.f32.mrf.mxu0
  %1474 = vdwg.mxu0
  %v1475 = vmax.f32 %v1105, %v1236
  %v1476 = vmax.f32 %v1106, %v1238
  %v1477 = vmax.f32 %v1107, %v1313
  %v1478 = vmax.f32 %v1108, %v1315
  %v1479 = vmax.f32 %v1109, %v1390
  %v1480 = vmax.f32 %v1110, %v1392
  %v1481 = vmax.f32 %v1111, %v1467
  %v1482 = vmax.f32 %v1112, %v1242
  %v1483 = vmax.f32 %v1113, %v1244
  %v1484 = vmax.f32 %v1114, %v1319
  %v1485 = vmax.f32 %v1115, %v1321
  %v1486 = vmax.f32 %v1116, %v1396
  %v1487 = vmax.f32 %v1117, %v1398
  %v1488 = vmax.f32 %v1118, %v1472
  %s1489 = scalar_lea.vmem %s0, 896
  %v1490 = vld [vmem:[%s1489] sm:$0xff]
  %v1491 = vld [vmem:[%s1489 + $0x8] sm:$0xff]
  %v1492 = vld [vmem:[%s1489 + $0x10] sm:$0xff]
  %v1493 = vld [vmem:[%s1489 + $0x18] sm:$0xff]
  %v1494 = vld [vmem:[%s1489 + $0x20] sm:$0xff]
  %v1495 = vld [vmem:[%s1489 + $0x28] sm:$0xff]
  %v1496 = vld [vmem:[%s1489 + $0x30] sm:$0xff]
  %v1497 = vld [vmem:[%s1489 + $0x38] sm:$0xff]
  %v1498 = vld [vmem:[%s1489 + $0x40] sm:$0xff]
  %v1499 = vld [vmem:[%s1489 + $0x48] sm:$0xff]
  %v1500 = vld [vmem:[%s1489 + $0x50] sm:$0xff]
  %v1501 = vld [vmem:[%s1489 + $0x58] sm:$0xff]
  %v1502 = vld [vmem:[%s1489 + $0x60] sm:$0xff]
  %v1503 = vld [vmem:[%s1489 + $0x68] sm:$0xff]
  %v1504 = vld [vmem:[%s1489 + $0x70] sm:$0xff]
  %v1505 = vld [vmem:[%s1489 + $0x78] sm:$0xff]
  %v1506 = vld [vmem:[%s1489 + $0x80] sm:$0xff]
  %v1507 = vld [vmem:[%s1489 + $0x88] sm:$0xff]
  %v1508 = vld [vmem:[%s1489 + $0x90] sm:$0xff]
  %v1509 = vld [vmem:[%s1489 + $0x98] sm:$0xff]
  %v1510 = vld [vmem:[%s1489 + $0xa0] sm:$0xff]
  %v1511 = vld [vmem:[%s1489 + $0xa8] sm:$0x1]
  %v1512 = vld [vmem:[%s1489 + $0xb0] sm:$0x1]
  %v1513 = vld [vmem:[%s1489 + $0xb8] sm:$0x1]
  %v1514 = vld [vmem:[%s1489 + $0xc0] sm:$0x1]
  %v1515 = vld [vmem:[%s1489 + $0xc8] sm:$0x1]
  %v1516 = vld [vmem:[%s1489 + $0xd0] sm:$0x1]
  %v1517 = vld [vmem:[%s1489 + $0xd8] sm:$0x1]
  %v1519 = vsel %vm51, %v1511, 0
  %v1522 = vsel %vm51, %v1512, 0
  %v1525 = vsel %vm51, %v1513, 0
  %v1528 = vsel %vm51, %v1514, 0
  %v1531 = vsel %vm51, %v1515, 0
  %v1534 = vsel %vm51, %v1516, 0
  %v1537 = vsel %vm51, %v1517, 0
  %1539 = vmatprep.subr.mxu0 0.0
  %1540 = vmatpush1.msra.mxu0 0.0
  %1541 = vmatprep.subr.mxu0 0.0
  %1542 = vmatpush1.msra.mxu0 0.0
  %1543 = vmatprep.subr.mxu0 0.0
  %1544 = vmatpush1.msra.mxu0 0.0
  %1545 = vmatprep.subr.mxu0 0.0
  %1546 = vmatpush1.msra.mxu0 0.0
  %1547 = vmatprep.subr.mxu0 0.0
  %1548 = vmatpush1.msra.mxu0 0.0
  %1549 = vmatprep.subr.mxu0 0.0
  %1550 = vmatpush1.msra.mxu0 0.0
  %1551 = vmatprep.subr.mxu0 0.0
  %1552 = vmatpush1.msra.mxu0 0.0
  %1553 = vmatprep.subr.mxu0 0.0
  %1554 = vmatpush1.msra.mxu0 0.0
  %1555 = vmatprep.subr.mxu0 0.0
  %1556 = vmatpush1.msra.mxu0 0.0
  %1557 = vmatprep.subr.mxu0 0.0
  %1558 = vmatpush1.msra.mxu0 0.0
  %1559 = vmatprep.subr.mxu0 0.0
  %1560 = vmatpush1.msra.mxu0 0.0
  %1561 = vmatprep.subr.mxu0 0.0
  %1562 = vmatpush1.msra.mxu0 0.0
  %1563 = vmatprep.subr.mxu0 %v1522
  %1564 = vmatpush1.msra.mxu0 %v1519
  %1565 = vmatprep.subr.mxu0 %v1505
  %1566 = vmatpush1.msra.mxu0 %v1504
  %1567 = vmatprep.subr.mxu0 %v1498
  %1568 = vmatpush1.msra.mxu0 %v1497
  %1569 = vmatprep.subr.mxu0 %v1491
  %1570 = vmatpush1.msra.mxu0 %v1490
  %1571 = vmatprep.subr.mxu0 0.0
  %1572 = vmatpush2.msra.mxu0 0.0
  %1573 = vmatprep.subr.mxu0 0.0
  %1574 = vmatpush2.msra.mxu0 0.0
  %1575 = vmatprep.subr.mxu0 0.0
  %1576 = vmatpush2.msra.mxu0 0.0
  %1577 = vmatprep.subr.mxu0 0.0
  %1578 = vmatpush2.msra.mxu0 0.0
  %1579 = vmatprep.subr.mxu0 0.0
  %1580 = vmatpush2.msra.mxu0 0.0
  %1581 = vmatprep.subr.mxu0 0.0
  %1582 = vmatpush2.msra.mxu0 0.0
  %1583 = vmatprep.subr.mxu0 0.0
  %1584 = vmatpush2.msra.mxu0 0.0
  %1585 = vmatprep.subr.mxu0 0.0
  %1586 = vmatpush2.msra.mxu0 0.0
  %1587 = vmatprep.subr.mxu0 0.0
  %1588 = vmatpush2.msra.mxu0 0.0
  %1589 = vmatprep.subr.mxu0 0.0
  %1590 = vmatpush2.msra.mxu0 0.0
  %1591 = vmatprep.subr.mxu0 0.0
  %1592 = vmatpush2.msra.mxu0 0.0
  %1593 = vmatprep.subr.mxu0 0.0
  %1594 = vmatpush2.msra.mxu0 0.0
  %1595 = vmatprep.subr.mxu0 0.0
  %1596 = vmatpush2.msra.mxu0 0.0
  %1597 = vmatprep.subr.mxu0 0.0
  %1598 = vmatpush2.msra.mxu0 0.0
  %1599 = vmatprep.subr.mxu0 0.0
  %1600 = vmatpush2.msra.mxu0 0.0
  %1601 = vmatprep.subr.mxu0 0.0
  %1602 = vmatpush2.msra.mxu0 0.0
  %1603 = vmatprep.mubr.f32.mxu0 0.0
  %1604 = vmatmul.mubr.f32.gmra.mxu0 %v46
  %v1605 = vpop.f32.mrf.mxu0
  %v1606 = vadd.f32 0.0, %v1605
  %v1607 = vpop.f32.mrf.mxu0
  %v1608 = vadd.f32 0.0, %v1607
  %1609 = vmatprep.mubr.f32.mxu0 0.0
  %1610 = vmatmul.mubr.f32.gmra.mxu0 %v49
  %v1611 = vpop.f32.mrf.mxu0
  %v1612 = vadd.f32 0.0, %v1611
  %v1613 = vpop.f32.mrf.mxu0
  %v1614 = vadd.f32 0.0, %v1613
  %1615 = vdwg.mxu0
  %1616 = vmatprep.subr.mxu0 0.0
  %1617 = vmatpush1.msra.mxu0 0.0
  %1618 = vmatprep.subr.mxu0 0.0
  %1619 = vmatpush1.msra.mxu0 0.0
  %1620 = vmatprep.subr.mxu0 0.0
  %1621 = vmatpush1.msra.mxu0 0.0
  %1622 = vmatprep.subr.mxu0 0.0
  %1623 = vmatpush1.msra.mxu0 0.0
  %1624 = vmatprep.subr.mxu0 0.0
  %1625 = vmatpush1.msra.mxu0 0.0
  %1626 = vmatprep.subr.mxu0 0.0
  %1627 = vmatpush1.msra.mxu0 0.0
  %1628 = vmatprep.subr.mxu0 0.0
  %1629 = vmatpush1.msra.mxu0 0.0
  %1630 = vmatprep.subr.mxu0 0.0
  %1631 = vmatpush1.msra.mxu0 0.0
  %1632 = vmatprep.subr.mxu0 0.0
  %1633 = vmatpush1.msra.mxu0 0.0
  %1634 = vmatprep.subr.mxu0 0.0
  %1635 = vmatpush1.msra.mxu0 0.0
  %1636 = vmatprep.subr.mxu0 0.0
  %1637 = vmatpush1.msra.mxu0 0.0
  %1638 = vmatprep.subr.mxu0 0.0
  %1639 = vmatpush1.msra.mxu0 0.0
  %1640 = vmatprep.subr.mxu0 %v1528
  %1641 = vmatpush1.msra.mxu0 %v1525
  %1642 = vmatprep.subr.mxu0 %v1507
  %1643 = vmatpush1.msra.mxu0 %v1506
  %1644 = vmatprep.subr.mxu0 %v1500
  %1645 = vmatpush1.msra.mxu0 %v1499
  %1646 = vmatprep.subr.mxu0 %v1493
  %1647 = vmatpush1.msra.mxu0 %v1492
  %1648 = vmatprep.subr.mxu0 0.0
  %1649 = vmatpush2.msra.mxu0 0.0
  %1650 = vmatprep.subr.mxu0 0.0
  %1651 = vmatpush2.msra.mxu0 0.0
  %1652 = vmatprep.subr.mxu0 0.0
  %1653 = vmatpush2.msra.mxu0 0.0
  %1654 = vmatprep.subr.mxu0 0.0
  %1655 = vmatpush2.msra.mxu0 0.0
  %1656 = vmatprep.subr.mxu0 0.0
  %1657 = vmatpush2.msra.mxu0 0.0
  %1658 = vmatprep.subr.mxu0 0.0
  %1659 = vmatpush2.msra.mxu0 0.0
  %1660 = vmatprep.subr.mxu0 0.0
  %1661 = vmatpush2.msra.mxu0 0.0
  %1662 = vmatprep.subr.mxu0 0.0
  %1663 = vmatpush2.msra.mxu0 0.0
  %1664 = vmatprep.subr.mxu0 0.0
  %1665 = vmatpush2.msra.mxu0 0.0
  %1666 = vmatprep.subr.mxu0 0.0
  %1667 = vmatpush2.msra.mxu0 0.0
  %1668 = vmatprep.subr.mxu0 0.0
  %1669 = vmatpush2.msra.mxu0 0.0
  %1670 = vmatprep.subr.mxu0 0.0
  %1671 = vmatpush2.msra.mxu0 0.0
  %1672 = vmatprep.subr.mxu0 0.0
  %1673 = vmatpush2.msra.mxu0 0.0
  %1674 = vmatprep.subr.mxu0 0.0
  %1675 = vmatpush2.msra.mxu0 0.0
  %1676 = vmatprep.subr.mxu0 0.0
  %1677 = vmatpush2.msra.mxu0 0.0
  %1678 = vmatprep.subr.mxu0 0.0
  %1679 = vmatpush2.msra.mxu0 0.0
  %1680 = vmatprep.mubr.f32.mxu0 0.0
  %1681 = vmatmul.mubr.f32.gmra.mxu0 %v46
  %v1682 = vpop.f32.mrf.mxu0
  %v1683 = vadd.f32 0.0, %v1682
  %v1684 = vpop.f32.mrf.mxu0
  %v1685 = vadd.f32 0.0, %v1684
  %1686 = vmatprep.mubr.f32.mxu0 0.0
  %1687 = vmatmul.mubr.f32.gmra.mxu0 %v49
  %v1688 = vpop.f32.mrf.mxu0
  %v1689 = vadd.f32 0.0, %v1688
  %v1690 = vpop.f32.mrf.mxu0
  %v1691 = vadd.f32 0.0, %v1690
  %1692 = vdwg.mxu0
  %1693 = vmatprep.subr.mxu0 0.0
  %1694 = vmatpush1.msra.mxu0 0.0
  %1695 = vmatprep.subr.mxu0 0.0
  %1696 = vmatpush1.msra.mxu0 0.0
  %1697 = vmatprep.subr.mxu0 0.0
  %1698 = vmatpush1.msra.mxu0 0.0
  %1699 = vmatprep.subr.mxu0 0.0
  %1700 = vmatpush1.msra.mxu0 0.0
  %1701 = vmatprep.subr.mxu0 0.0
  %1702 = vmatpush1.msra.mxu0 0.0
  %1703 = vmatprep.subr.mxu0 0.0
  %1704 = vmatpush1.msra.mxu0 0.0
  %1705 = vmatprep.subr.mxu0 0.0
  %1706 = vmatpush1.msra.mxu0 0.0
  %1707 = vmatprep.subr.mxu0 0.0
  %1708 = vmatpush1.msra.mxu0 0.0
  %1709 = vmatprep.subr.mxu0 0.0
  %1710 = vmatpush1.msra.mxu0 0.0
  %1711 = vmatprep.subr.mxu0 0.0
  %1712 = vmatpush1.msra.mxu0 0.0
  %1713 = vmatprep.subr.mxu0 0.0
  %1714 = vmatpush1.msra.mxu0 0.0
  %1715 = vmatprep.subr.mxu0 0.0
  %1716 = vmatpush1.msra.mxu0 0.0
  %1717 = vmatprep.subr.mxu0 %v1534
  %1718 = vmatpush1.msra.mxu0 %v1531
  %1719 = vmatprep.subr.mxu0 %v1509
  %1720 = vmatpush1.msra.mxu0 %v1508
  %1721 = vmatprep.subr.mxu0 %v1502
  %1722 = vmatpush1.msra.mxu0 %v1501
  %1723 = vmatprep.subr.mxu0 %v1495
  %1724 = vmatpush1.msra.mxu0 %v1494
  %1725 = vmatprep.subr.mxu0 0.0
  %1726 = vmatpush2.msra.mxu0 0.0
  %1727 = vmatprep.subr.mxu0 0.0
  %1728 = vmatpush2.msra.mxu0 0.0
  %1729 = vmatprep.subr.mxu0 0.0
  %1730 = vmatpush2.msra.mxu0 0.0
  %1731 = vmatprep.subr.mxu0 0.0
  %1732 = vmatpush2.msra.mxu0 0.0
  %1733 = vmatprep.subr.mxu0 0.0
  %1734 = vmatpush2.msra.mxu0 0.0
  %1735 = vmatprep.subr.mxu0 0.0
  %1736 = vmatpush2.msra.mxu0 0.0
  %1737 = vmatprep.subr.mxu0 0.0
  %1738 = vmatpush2.msra.mxu0 0.0
  %1739 = vmatprep.subr.mxu0 0.0
  %1740 = vmatpush2.msra.mxu0 0.0
  %1741 = vmatprep.subr.mxu0 0.0
  %1742 = vmatpush2.msra.mxu0 0.0
  %1743 = vmatprep.subr.mxu0 0.0
  %1744 = vmatpush2.msra.mxu0 0.0
  %1745 = vmatprep.subr.mxu0 0.0
  %1746 = vmatpush2.msra.mxu0 0.0
  %1747 = vmatprep.subr.mxu0 0.0
  %1748 = vmatpush2.msra.mxu0 0.0
  %1749 = vmatprep.subr.mxu0 0.0
  %1750 = vmatpush2.msra.mxu0 0.0
  %1751 = vmatprep.subr.mxu0 0.0
  %1752 = vmatpush2.msra.mxu0 0.0
  %1753 = vmatprep.subr.mxu0 0.0
  %1754 = vmatpush2.msra.mxu0 0.0
  %1755 = vmatprep.subr.mxu0 0.0
  %1756 = vmatpush2.msra.mxu0 0.0
  %1757 = vmatprep.mubr.f32.mxu0 0.0
  %1758 = vmatmul.mubr.f32.gmra.mxu0 %v46
  %v1759 = vpop.f32.mrf.mxu0
  %v1760 = vadd.f32 0.0, %v1759
  %v1761 = vpop.f32.mrf.mxu0
  %v1762 = vadd.f32 0.0, %v1761
  %1763 = vmatprep.mubr.f32.mxu0 0.0
  %1764 = vmatmul.mubr.f32.gmra.mxu0 %v49
  %v1765 = vpop.f32.mrf.mxu0
  %v1766 = vadd.f32 0.0, %v1765
  %v1767 = vpop.f32.mrf.mxu0
  %v1768 = vadd.f32 0.0, %v1767
  %1769 = vdwg.mxu0
  %1770 = vmatprep.subr.mxu0 0.0
  %1771 = vmatpush1.msra.mxu0 0.0
  %1772 = vmatprep.subr.mxu0 0.0
  %1773 = vmatpush1.msra.mxu0 0.0
  %1774 = vmatprep.subr.mxu0 0.0
  %1775 = vmatpush1.msra.mxu0 0.0
  %1776 = vmatprep.subr.mxu0 0.0
  %1777 = vmatpush1.msra.mxu0 0.0
  %1778 = vmatprep.subr.mxu0 0.0
  %1779 = vmatpush1.msra.mxu0 0.0
  %1780 = vmatprep.subr.mxu0 0.0
  %1781 = vmatpush1.msra.mxu0 0.0
  %1782 = vmatprep.subr.mxu0 0.0
  %1783 = vmatpush1.msra.mxu0 0.0
  %1784 = vmatprep.subr.mxu0 0.0
  %1785 = vmatpush1.msra.mxu0 0.0
  %1786 = vmatprep.subr.mxu0 0.0
  %1787 = vmatpush1.msra.mxu0 0.0
  %1788 = vmatprep.subr.mxu0 0.0
  %1789 = vmatpush1.msra.mxu0 0.0
  %1790 = vmatprep.subr.mxu0 0.0
  %1791 = vmatpush1.msra.mxu0 0.0
  %1792 = vmatprep.subr.mxu0 0.0
  %1793 = vmatpush1.msra.mxu0 0.0
  %1794 = vmatprep.subr.mxu0 0.0
  %1795 = vmatpush1.msra.mxu0 %v1537
  %1796 = vmatprep.subr.mxu0 0.0
  %1797 = vmatpush1.msra.mxu0 %v1510
  %1798 = vmatprep.subr.mxu0 0.0
  %1799 = vmatpush1.msra.mxu0 %v1503
  %1800 = vmatprep.subr.mxu0 0.0
  %1801 = vmatpush1.msra.mxu0 %v1496
  %1802 = vmatprep.subr.mxu0 0.0
  %1803 = vmatpush2.msra.mxu0 0.0
  %1804 = vmatprep.subr.mxu0 0.0
  %1805 = vmatpush2.msra.mxu0 0.0
  %1806 = vmatprep.subr.mxu0 0.0
  %1807 = vmatpush2.msra.mxu0 0.0
  %1808 = vmatprep.subr.mxu0 0.0
  %1809 = vmatpush2.msra.mxu0 0.0
  %1810 = vmatprep.subr.mxu0 0.0
  %1811 = vmatpush2.msra.mxu0 0.0
  %1812 = vmatprep.subr.mxu0 0.0
  %1813 = vmatpush2.msra.mxu0 0.0
  %1814 = vmatprep.subr.mxu0 0.0
  %1815 = vmatpush2.msra.mxu0 0.0
  %1816 = vmatprep.subr.mxu0 0.0
  %1817 = vmatpush2.msra.mxu0 0.0
  %1818 = vmatprep.subr.mxu0 0.0
  %1819 = vmatpush2.msra.mxu0 0.0
  %1820 = vmatprep.subr.mxu0 0.0
  %1821 = vmatpush2.msra.mxu0 0.0
  %1822 = vmatprep.subr.mxu0 0.0
  %1823 = vmatpush2.msra.mxu0 0.0
  %1824 = vmatprep.subr.mxu0 0.0
  %1825 = vmatpush2.msra.mxu0 0.0
  %1826 = vmatprep.subr.mxu0 0.0
  %1827 = vmatpush2.msra.mxu0 0.0
  %1828 = vmatprep.subr.mxu0 0.0
  %1829 = vmatpush2.msra.mxu0 0.0
  %1830 = vmatprep.subr.mxu0 0.0
  %1831 = vmatpush2.msra.mxu0 0.0
  %1832 = vmatprep.subr.mxu0 0.0
  %1833 = vmatpush2.msra.mxu0 0.0
  %1834 = vmatprep.mubr.f32.mxu0 0.0
  %1835 = vmatmul.mubr.f32.gmra.mxu0 %v46
  %v1836 = vpop.f32.mrf.mxu0
  %v1837 = vadd.f32 0.0, %v1836
  %v1838 = vpop.f32.mrf.mxu0
  %1839 = vmatprep.mubr.f32.mxu0 0.0
  %1840 = vmatmul.mubr.f32.gmra.mxu0 %v49
  %v1841 = vpop.f32.mrf.mxu0
  %v1842 = vadd.f32 0.0, %v1841
  %v1843 = vpop.f32.mrf.mxu0
  %1844 = vdwg.mxu0
  %v1845 = vmax.f32 %v1475, %v1606
  %v1846 = vmax.f32 %v1476, %v1608
  %v1847 = vmax.f32 %v1477, %v1683
  %v1848 = vmax.f32 %v1478, %v1685
  %v1849 = vmax.f32 %v1479, %v1760
  %v1850 = vmax.f32 %v1480, %v1762
  %v1851 = vmax.f32 %v1481, %v1837
  %v1852 = vmax.f32 %v1482, %v1612
  %v1853 = vmax.f32 %v1483, %v1614
  %v1854 = vmax.f32 %v1484, %v1689
  %v1855 = vmax.f32 %v1485, %v1691
  %v1856 = vmax.f32 %v1486, %v1766
  %v1857 = vmax.f32 %v1487, %v1768
  %v1858 = vmax.f32 %v1488, %v1842
  %s1859 = scalar_lea.vmem %s0, 1120
  %v1860 = vld [vmem:[%s1859] sm:$0xff]
  %v1861 = vld [vmem:[%s1859 + $0x8] sm:$0xff]
  %v1862 = vld [vmem:[%s1859 + $0x10] sm:$0xff]
  %v1863 = vld [vmem:[%s1859 + $0x18] sm:$0xff]
  %v1864 = vld [vmem:[%s1859 + $0x20] sm:$0xff]
  %v1865 = vld [vmem:[%s1859 + $0x28] sm:$0xff]
  %v1866 = vld [vmem:[%s1859 + $0x30] sm:$0xff]
  %v1867 = vld [vmem:[%s1859 + $0x38] sm:$0xff]
  %v1868 = vld [vmem:[%s1859 + $0x40] sm:$0xff]
  %v1869 = vld [vmem:[%s1859 + $0x48] sm:$0xff]
  %v1870 = vld [vmem:[%s1859 + $0x50] sm:$0xff]
  %v1871 = vld [vmem:[%s1859 + $0x58] sm:$0xff]
  %v1872 = vld [vmem:[%s1859 + $0x60] sm:$0xff]
  %v1873 = vld [vmem:[%s1859 + $0x68] sm:$0xff]
  %v1874 = vld [vmem:[%s1859 + $0x70] sm:$0xff]
  %v1875 = vld [vmem:[%s1859 + $0x78] sm:$0xff]
  %v1876 = vld [vmem:[%s1859 + $0x80] sm:$0xff]
  %v1877 = vld [vmem:[%s1859 + $0x88] sm:$0xff]
  %v1878 = vld [vmem:[%s1859 + $0x90] sm:$0xff]
  %v1879 = vld [vmem:[%s1859 + $0x98] sm:$0xff]
  %v1880 = vld [vmem:[%s1859 + $0xa0] sm:$0xff]
  %v1881 = vld [vmem:[%s1859 + $0xa8] sm:$0x1]
  %v1882 = vld [vmem:[%s1859 + $0xb0] sm:$0x1]
  %v1883 = vld [vmem:[%s1859 + $0xb8] sm:$0x1]
  %v1884 = vld [vmem:[%s1859 + $0xc0] sm:$0x1]
  %v1885 = vld [vmem:[%s1859 + $0xc8] sm:$0x1]
  %v1886 = vld [vmem:[%s1859 + $0xd0] sm:$0x1]
  %v1887 = vld [vmem:[%s1859 + $0xd8] sm:$0x1]
  %v1889 = vsel %vm51, %v1881, 0
  %v1892 = vsel %vm51, %v1882, 0
  %v1895 = vsel %vm51, %v1883, 0
  %v1898 = vsel %vm51, %v1884, 0
  %v1901 = vsel %vm51, %v1885, 0
  %v1904 = vsel %vm51, %v1886, 0
  %v1907 = vsel %vm51, %v1887, 0
  %1909 = vmatprep.subr.mxu0 0.0
  %1910 = vmatpush1.msra.mxu0 0.0
  %1911 = vmatprep.subr.mxu0 0.0
  %1912 = vmatpush1.msra.mxu0 0.0
  %1913 = vmatprep.subr.mxu0 0.0
  %1914 = vmatpush1.msra.mxu0 0.0
  %1915 = vmatprep.subr.mxu0 0.0
  %1916 = vmatpush1.msra.mxu0 0.0
  %1917 = vmatprep.subr.mxu0 0.0
  %1918 = vmatpush1.msra.mxu0 0.0
  %1919 = vmatprep.subr.mxu0 0.0
  %1920 = vmatpush1.msra.mxu0 0.0
  %1921 = vmatprep.subr.mxu0 0.0
  %1922 = vmatpush1.msra.mxu0 0.0
  %1923 = vmatprep.subr.mxu0 0.0
  %1924 = vmatpush1.msra.mxu0 0.0
  %1925 = vmatprep.subr.mxu0 0.0
  %1926 = vmatpush1.msra.mxu0 0.0
  %1927 = vmatprep.subr.mxu0 0.0
  %1928 = vmatpush1.msra.mxu0 0.0
  %1929 = vmatprep.subr.mxu0 0.0
  %1930 = vmatpush1.msra.mxu0 0.0
  %1931 = vmatprep.subr.mxu0 0.0
  %1932 = vmatpush1.msra.mxu0 0.0
  %1933 = vmatprep.subr.mxu0 %v1892
  %1934 = vmatpush1.msra.mxu0 %v1889
  %1935 = vmatprep.subr.mxu0 %v1875
  %1936 = vmatpush1.msra.mxu0 %v1874
  %1937 = vmatprep.subr.mxu0 %v1868
  %1938 = vmatpush1.msra.mxu0 %v1867
  %1939 = vmatprep.subr.mxu0 %v1861
  %1940 = vmatpush1.msra.mxu0 %v1860
  %1941 = vmatprep.subr.mxu0 0.0
  %1942 = vmatpush2.msra.mxu0 0.0
  %1943 = vmatprep.subr.mxu0 0.0
  %1944 = vmatpush2.msra.mxu0 0.0
  %1945 = vmatprep.subr.mxu0 0.0
  %1946 = vmatpush2.msra.mxu0 0.0
  %1947 = vmatprep.subr.mxu0 0.0
  %1948 = vmatpush2.msra.mxu0 0.0
  %1949 = vmatprep.subr.mxu0 0.0
  %1950 = vmatpush2.msra.mxu0 0.0
  %1951 = vmatprep.subr.mxu0 0.0
  %1952 = vmatpush2.msra.mxu0 0.0
  %1953 = vmatprep.subr.mxu0 0.0
  %1954 = vmatpush2.msra.mxu0 0.0
  %1955 = vmatprep.subr.mxu0 0.0
  %1956 = vmatpush2.msra.mxu0 0.0
  %1957 = vmatprep.subr.mxu0 0.0
  %1958 = vmatpush2.msra.mxu0 0.0
  %1959 = vmatprep.subr.mxu0 0.0
  %1960 = vmatpush2.msra.mxu0 0.0
  %1961 = vmatprep.subr.mxu0 0.0
  %1962 = vmatpush2.msra.mxu0 0.0
  %1963 = vmatprep.subr.mxu0 0.0
  %1964 = vmatpush2.msra.mxu0 0.0
  %1965 = vmatprep.subr.mxu0 0.0
  %1966 = vmatpush2.msra.mxu0 0.0
  %1967 = vmatprep.subr.mxu0 0.0
  %1968 = vmatpush2.msra.mxu0 0.0
  %1969 = vmatprep.subr.mxu0 0.0
  %1970 = vmatpush2.msra.mxu0 0.0
  %1971 = vmatprep.subr.mxu0 0.0
  %1972 = vmatpush2.msra.mxu0 0.0
  %1973 = vmatprep.mubr.f32.mxu0 0.0
  %1974 = vmatmul.mubr.f32.gmra.mxu0 %v46
  %v1975 = vpop.f32.mrf.mxu0
  %v1976 = vadd.f32 0.0, %v1975
  %v1977 = vpop.f32.mrf.mxu0
  %v1978 = vadd.f32 0.0, %v1977
  %1979 = vmatprep.mubr.f32.mxu0 0.0
  %1980 = vmatmul.mubr.f32.gmra.mxu0 %v49
  %v1981 = vpop.f32.mrf.mxu0
  %v1982 = vadd.f32 0.0, %v1981
  %v1983 = vpop.f32.mrf.mxu0
  %v1984 = vadd.f32 0.0, %v1983
  %1985 = vdwg.mxu0
  %1986 = vmatprep.subr.mxu0 0.0
  %1987 = vmatpush1.msra.mxu0 0.0
  %1988 = vmatprep.subr.mxu0 0.0
  %1989 = vmatpush1.msra.mxu0 0.0
  %1990 = vmatprep.subr.mxu0 0.0
  %1991 = vmatpush1.msra.mxu0 0.0
  %1992 = vmatprep.subr.mxu0 0.0
  %1993 = vmatpush1.msra.mxu0 0.0
  %1994 = vmatprep.subr.mxu0 0.0
  %1995 = vmatpush1.msra.mxu0 0.0
  %1996 = vmatprep.subr.mxu0 0.0
  %1997 = vmatpush1.msra.mxu0 0.0
  %1998 = vmatprep.subr.mxu0 0.0
  %1999 = vmatpush1.msra.mxu0 0.0
  %2000 = vmatprep.subr.mxu0 0.0
  %2001 = vmatpush1.msra.mxu0 0.0
  %2002 = vmatprep.subr.mxu0 0.0
  %2003 = vmatpush1.msra.mxu0 0.0
  %2004 = vmatprep.subr.mxu0 0.0
  %2005 = vmatpush1.msra.mxu0 0.0
  %2006 = vmatprep.subr.mxu0 0.0
  %2007 = vmatpush1.msra.mxu0 0.0
  %2008 = vmatprep.subr.mxu0 0.0
  %2009 = vmatpush1.msra.mxu0 0.0
  %2010 = vmatprep.subr.mxu0 %v1898
  %2011 = vmatpush1.msra.mxu0 %v1895
  %2012 = vmatprep.subr.mxu0 %v1877
  %2013 = vmatpush1.msra.mxu0 %v1876
  %2014 = vmatprep.subr.mxu0 %v1870
  %2015 = vmatpush1.msra.mxu0 %v1869
  %2016 = vmatprep.subr.mxu0 %v1863
  %2017 = vmatpush1.msra.mxu0 %v1862
  %2018 = vmatprep.subr.mxu0 0.0
  %2019 = vmatpush2.msra.mxu0 0.0
  %2020 = vmatprep.subr.mxu0 0.0
  %2021 = vmatpush2.msra.mxu0 0.0
  %2022 = vmatprep.subr.mxu0 0.0
  %2023 = vmatpush2.msra.mxu0 0.0
  %2024 = vmatprep.subr.mxu0 0.0
  %2025 = vmatpush2.msra.mxu0 0.0
  %2026 = vmatprep.subr.mxu0 0.0
  %2027 = vmatpush2.msra.mxu0 0.0
  %2028 = vmatprep.subr.mxu0 0.0
  %2029 = vmatpush2.msra.mxu0 0.0
  %2030 = vmatprep.subr.mxu0 0.0
  %2031 = vmatpush2.msra.mxu0 0.0
  %2032 = vmatprep.subr.mxu0 0.0
  %2033 = vmatpush2.msra.mxu0 0.0
  %2034 = vmatprep.subr.mxu0 0.0
  %2035 = vmatpush2.msra.mxu0 0.0
  %2036 = vmatprep.subr.mxu0 0.0
  %2037 = vmatpush2.msra.mxu0 0.0
  %2038 = vmatprep.subr.mxu0 0.0
  %2039 = vmatpush2.msra.mxu0 0.0
  %2040 = vmatprep.subr.mxu0 0.0
  %2041 = vmatpush2.msra.mxu0 0.0
  %2042 = vmatprep.subr.mxu0 0.0
  %2043 = vmatpush2.msra.mxu0 0.0
  %2044 = vmatprep.subr.mxu0 0.0
  %2045 = vmatpush2.msra.mxu0 0.0
  %2046 = vmatprep.subr.mxu0 0.0
  %2047 = vmatpush2.msra.mxu0 0.0
  %2048 = vmatprep.subr.mxu0 0.0
  %2049 = vmatpush2.msra.mxu0 0.0
  %2050 = vmatprep.mubr.f32.mxu0 0.0
  %2051 = vmatmul.mubr.f32.gmra.mxu0 %v46
  %v2052 = vpop.f32.mrf.mxu0
  %v2053 = vadd.f32 0.0, %v2052
  %v2054 = vpop.f32.mrf.mxu0
  %v2055 = vadd.f32 0.0, %v2054
  %2056 = vmatprep.mubr.f32.mxu0 0.0
  %2057 = vmatmul.mubr.f32.gmra.mxu0 %v49
  %v2058 = vpop.f32.mrf.mxu0
  %v2059 = vadd.f32 0.0, %v2058
  %v2060 = vpop.f32.mrf.mxu0
  %v2061 = vadd.f32 0.0, %v2060
  %2062 = vdwg.mxu0
  %2063 = vmatprep.subr.mxu0 0.0
  %2064 = vmatpush1.msra.mxu0 0.0
  %2065 = vmatprep.subr.mxu0 0.0
  %2066 = vmatpush1.msra.mxu0 0.0
  %2067 = vmatprep.subr.mxu0 0.0
  %2068 = vmatpush1.msra.mxu0 0.0
  %2069 = vmatprep.subr.mxu0 0.0
  %2070 = vmatpush1.msra.mxu0 0.0
  %2071 = vmatprep.subr.mxu0 0.0
  %2072 = vmatpush1.msra.mxu0 0.0
  %2073 = vmatprep.subr.mxu0 0.0
  %2074 = vmatpush1.msra.mxu0 0.0
  %2075 = vmatprep.subr.mxu0 0.0
  %2076 = vmatpush1.msra.mxu0 0.0
  %2077 = vmatprep.subr.mxu0 0.0
  %2078 = vmatpush1.msra.mxu0 0.0
  %2079 = vmatprep.subr.mxu0 0.0
  %2080 = vmatpush1.msra.mxu0 0.0
  %2081 = vmatprep.subr.mxu0 0.0
  %2082 = vmatpush1.msra.mxu0 0.0
  %2083 = vmatprep.subr.mxu0 0.0
  %2084 = vmatpush1.msra.mxu0 0.0
  %2085 = vmatprep.subr.mxu0 0.0
  %2086 = vmatpush1.msra.mxu0 0.0
  %2087 = vmatprep.subr.mxu0 %v1904
  %2088 = vmatpush1.msra.mxu0 %v1901
  %2089 = vmatprep.subr.mxu0 %v1879
  %2090 = vmatpush1.msra.mxu0 %v1878
  %2091 = vmatprep.subr.mxu0 %v1872
  %2092 = vmatpush1.msra.mxu0 %v1871
  %2093 = vmatprep.subr.mxu0 %v1865
  %2094 = vmatpush1.msra.mxu0 %v1864
  %2095 = vmatprep.subr.mxu0 0.0
  %2096 = vmatpush2.msra.mxu0 0.0
  %2097 = vmatprep.subr.mxu0 0.0
  %2098 = vmatpush2.msra.mxu0 0.0
  %2099 = vmatprep.subr.mxu0 0.0
  %2100 = vmatpush2.msra.mxu0 0.0
  %2101 = vmatprep.subr.mxu0 0.0
  %2102 = vmatpush2.msra.mxu0 0.0
  %2103 = vmatprep.subr.mxu0 0.0
  %2104 = vmatpush2.msra.mxu0 0.0
  %2105 = vmatprep.subr.mxu0 0.0
  %2106 = vmatpush2.msra.mxu0 0.0
  %2107 = vmatprep.subr.mxu0 0.0
  %2108 = vmatpush2.msra.mxu0 0.0
  %2109 = vmatprep.subr.mxu0 0.0
  %2110 = vmatpush2.msra.mxu0 0.0
  %2111 = vmatprep.subr.mxu0 0.0
  %2112 = vmatpush2.msra.mxu0 0.0
  %2113 = vmatprep.subr.mxu0 0.0
  %2114 = vmatpush2.msra.mxu0 0.0
  %2115 = vmatprep.subr.mxu0 0.0
  %2116 = vmatpush2.msra.mxu0 0.0
  %2117 = vmatprep.subr.mxu0 0.0
  %2118 = vmatpush2.msra.mxu0 0.0
  %2119 = vmatprep.subr.mxu0 0.0
  %2120 = vmatpush2.msra.mxu0 0.0
  %2121 = vmatprep.subr.mxu0 0.0
  %2122 = vmatpush2.msra.mxu0 0.0
  %2123 = vmatprep.subr.mxu0 0.0
  %2124 = vmatpush2.msra.mxu0 0.0
  %2125 = vmatprep.subr.mxu0 0.0
  %2126 = vmatpush2.msra.mxu0 0.0
  %2127 = vmatprep.mubr.f32.mxu0 0.0
  %2128 = vmatmul.mubr.f32.gmra.mxu0 %v46
  %v2129 = vpop.f32.mrf.mxu0
  %v2130 = vadd.f32 0.0, %v2129
  %v2131 = vpop.f32.mrf.mxu0
  %v2132 = vadd.f32 0.0, %v2131
  %2133 = vmatprep.mubr.f32.mxu0 0.0
  %2134 = vmatmul.mubr.f32.gmra.mxu0 %v49
  %v2135 = vpop.f32.mrf.mxu0
  %v2136 = vadd.f32 0.0, %v2135
  %v2137 = vpop.f32.mrf.mxu0
  %v2138 = vadd.f32 0.0, %v2137
  %2139 = vdwg.mxu0
  %2140 = vmatprep.subr.mxu0 0.0
  %2141 = vmatpush1.msra.mxu0 0.0
  %2142 = vmatprep.subr.mxu0 0.0
  %2143 = vmatpush1.msra.mxu0 0.0
  %2144 = vmatprep.subr.mxu0 0.0
  %2145 = vmatpush1.msra.mxu0 0.0
  %2146 = vmatprep.subr.mxu0 0.0
  %2147 = vmatpush1.msra.mxu0 0.0
  %2148 = vmatprep.subr.mxu0 0.0
  %2149 = vmatpush1.msra.mxu0 0.0
  %2150 = vmatprep.subr.mxu0 0.0
  %2151 = vmatpush1.msra.mxu0 0.0
  %2152 = vmatprep.subr.mxu0 0.0
  %2153 = vmatpush1.msra.mxu0 0.0
  %2154 = vmatprep.subr.mxu0 0.0
  %2155 = vmatpush1.msra.mxu0 0.0
  %2156 = vmatprep.subr.mxu0 0.0
  %2157 = vmatpush1.msra.mxu0 0.0
  %2158 = vmatprep.subr.mxu0 0.0
  %2159 = vmatpush1.msra.mxu0 0.0
  %2160 = vmatprep.subr.mxu0 0.0
  %2161 = vmatpush1.msra.mxu0 0.0
  %2162 = vmatprep.subr.mxu0 0.0
  %2163 = vmatpush1.msra.mxu0 0.0
  %2164 = vmatprep.subr.mxu0 0.0
  %2165 = vmatpush1.msra.mxu0 %v1907
  %2166 = vmatprep.subr.mxu0 0.0
  %2167 = vmatpush1.msra.mxu0 %v1880
  %2168 = vmatprep.subr.mxu0 0.0
  %2169 = vmatpush1.msra.mxu0 %v1873
  %2170 = vmatprep.subr.mxu0 0.0
  %2171 = vmatpush1.msra.mxu0 %v1866
  %2172 = vmatprep.subr.mxu0 0.0
  %2173 = vmatpush2.msra.mxu0 0.0
  %2174 = vmatprep.subr.mxu0 0.0
  %2175 = vmatpush2.msra.mxu0 0.0
  %2176 = vmatprep.subr.mxu0 0.0
  %2177 = vmatpush2.msra.mxu0 0.0
  %2178 = vmatprep.subr.mxu0 0.0
  %2179 = vmatpush2.msra.mxu0 0.0
  %2180 = vmatprep.subr.mxu0 0.0
  %2181 = vmatpush2.msra.mxu0 0.0
  %2182 = vmatprep.subr.mxu0 0.0
  %2183 = vmatpush2.msra.mxu0 0.0
  %2184 = vmatprep.subr.mxu0 0.0
  %2185 = vmatpush2.msra.mxu0 0.0
  %2186 = vmatprep.subr.mxu0 0.0
  %2187 = vmatpush2.msra.mxu0 0.0
  %2188 = vmatprep.subr.mxu0 0.0
  %2189 = vmatpush2.msra.mxu0 0.0
  %2190 = vmatprep.subr.mxu0 0.0
  %2191 = vmatpush2.msra.mxu0 0.0
  %2192 = vmatprep.subr.mxu0 0.0
  %2193 = vmatpush2.msra.mxu0 0.0
  %2194 = vmatprep.subr.mxu0 0.0
  %2195 = vmatpush2.msra.mxu0 0.0
  %2196 = vmatprep.subr.mxu0 0.0
  %2197 = vmatpush2.msra.mxu0 0.0
  %2198 = vmatprep.subr.mxu0 0.0
  %2199 = vmatpush2.msra.mxu0 0.0
  %2200 = vmatprep.subr.mxu0 0.0
  %2201 = vmatpush2.msra.mxu0 0.0
  %2202 = vmatprep.subr.mxu0 0.0
  %2203 = vmatpush2.msra.mxu0 0.0
  %2204 = vmatprep.mubr.f32.mxu0 0.0
  %2205 = vmatmul.mubr.f32.gmra.mxu0 %v46
  %v2206 = vpop.f32.mrf.mxu0
  %v2207 = vadd.f32 0.0, %v2206
  %v2208 = vpop.f32.mrf.mxu0
  %2209 = vmatprep.mubr.f32.mxu0 0.0
  %2210 = vmatmul.mubr.f32.gmra.mxu0 %v49
  %v2211 = vpop.f32.mrf.mxu0
  %v2212 = vadd.f32 0.0, %v2211
  %v2213 = vpop.f32.mrf.mxu0
  %2214 = vdwg.mxu0
  %v2215 = vmax.f32 %v1845, %v1976
  %v2216 = vmax.f32 %v1846, %v1978
  %v2217 = vmax.f32 %v1847, %v2053
  %v2218 = vmax.f32 %v1848, %v2055
  %v2219 = vmax.f32 %v1849, %v2130
  %v2220 = vmax.f32 %v1850, %v2132
  %v2221 = vmax.f32 %v1851, %v2207
  %v2222 = vmax.f32 %v1852, %v1982
  %v2223 = vmax.f32 %v1853, %v1984
  %v2224 = vmax.f32 %v1854, %v2059
  %v2225 = vmax.f32 %v1855, %v2061
  %v2226 = vmax.f32 %v1856, %v2136
  %v2227 = vmax.f32 %v1857, %v2138
  %v2228 = vmax.f32 %v1858, %v2212
  %s2229 = scalar_lea.vmem %s0, 1344
  %v2230 = vld [vmem:[%s2229] sm:$0xff]
  %v2231 = vld [vmem:[%s2229 + $0x8] sm:$0xff]
  %v2232 = vld [vmem:[%s2229 + $0x10] sm:$0xff]
  %v2233 = vld [vmem:[%s2229 + $0x18] sm:$0xff]
  %v2234 = vld [vmem:[%s2229 + $0x20] sm:$0xff]
  %v2235 = vld [vmem:[%s2229 + $0x28] sm:$0xff]
  %v2236 = vld [vmem:[%s2229 + $0x30] sm:$0xff]
  %v2237 = vld [vmem:[%s2229 + $0x38] sm:$0xff]
  %v2238 = vld [vmem:[%s2229 + $0x40] sm:$0xff]
  %v2239 = vld [vmem:[%s2229 + $0x48] sm:$0xff]
  %v2240 = vld [vmem:[%s2229 + $0x50] sm:$0xff]
  %v2241 = vld [vmem:[%s2229 + $0x58] sm:$0xff]
  %v2242 = vld [vmem:[%s2229 + $0x60] sm:$0xff]
  %v2243 = vld [vmem:[%s2229 + $0x68] sm:$0xff]
  %v2244 = vld [vmem:[%s2229 + $0x70] sm:$0xff]
  %v2245 = vld [vmem:[%s2229 + $0x78] sm:$0xff]
  %v2246 = vld [vmem:[%s2229 + $0x80] sm:$0xff]
  %v2247 = vld [vmem:[%s2229 + $0x88] sm:$0xff]
  %v2248 = vld [vmem:[%s2229 + $0x90] sm:$0xff]
  %v2249 = vld [vmem:[%s2229 + $0x98] sm:$0xff]
  %v2250 = vld [vmem:[%s2229 + $0xa0] sm:$0xff]
  %v2251 = vld [vmem:[%s2229 + $0xa8] sm:$0x1]
  %v2252 = vld [vmem:[%s2229 + $0xb0] sm:$0x1]
  %v2253 = vld [vmem:[%s2229 + $0xb8] sm:$0x1]
  %v2254 = vld [vmem:[%s2229 + $0xc0] sm:$0x1]
  %v2255 = vld [vmem:[%s2229 + $0xc8] sm:$0x1]
  %v2256 = vld [vmem:[%s2229 + $0xd0] sm:$0x1]
  %v2257 = vld [vmem:[%s2229 + $0xd8] sm:$0x1]
  %v2259 = vsel %vm51, %v2251, 0
  %v2262 = vsel %vm51, %v2252, 0
  %v2265 = vsel %vm51, %v2253, 0
  %v2268 = vsel %vm51, %v2254, 0
  %v2271 = vsel %vm51, %v2255, 0
  %v2274 = vsel %vm51, %v2256, 0
  %v2277 = vsel %vm51, %v2257, 0
  %2279 = vmatprep.subr.mxu0 0.0
  %2280 = vmatpush1.msra.mxu0 0.0
  %2281 = vmatprep.subr.mxu0 0.0
  %2282 = vmatpush1.msra.mxu0 0.0
  %2283 = vmatprep.subr.mxu0 0.0
  %2284 = vmatpush1.msra.mxu0 0.0
  %2285 = vmatprep.subr.mxu0 0.0
  %2286 = vmatpush1.msra.mxu0 0.0
  %2287 = vmatprep.subr.mxu0 0.0
  %2288 = vmatpush1.msra.mxu0 0.0
  %2289 = vmatprep.subr.mxu0 0.0
  %2290 = vmatpush1.msra.mxu0 0.0
  %2291 = vmatprep.subr.mxu0 0.0
  %2292 = vmatpush1.msra.mxu0 0.0
  %2293 = vmatprep.subr.mxu0 0.0
  %2294 = vmatpush1.msra.mxu0 0.0
  %2295 = vmatprep.subr.mxu0 0.0
  %2296 = vmatpush1.msra.mxu0 0.0
  %2297 = vmatprep.subr.mxu0 0.0
  %2298 = vmatpush1.msra.mxu0 0.0
  %2299 = vmatprep.subr.mxu0 0.0
  %2300 = vmatpush1.msra.mxu0 0.0
  %2301 = vmatprep.subr.mxu0 0.0
  %2302 = vmatpush1.msra.mxu0 0.0
  %2303 = vmatprep.subr.mxu0 %v2262
  %2304 = vmatpush1.msra.mxu0 %v2259
  %2305 = vmatprep.subr.mxu0 %v2245
  %2306 = vmatpush1.msra.mxu0 %v2244
  %2307 = vmatprep.subr.mxu0 %v2238
  %2308 = vmatpush1.msra.mxu0 %v2237
  %2309 = vmatprep.subr.mxu0 %v2231
  %2310 = vmatpush1.msra.mxu0 %v2230
  %2311 = vmatprep.subr.mxu0 0.0
  %2312 = vmatpush2.msra.mxu0 0.0
  %2313 = vmatprep.subr.mxu0 0.0
  %2314 = vmatpush2.msra.mxu0 0.0
  %2315 = vmatprep.subr.mxu0 0.0
  %2316 = vmatpush2.msra.mxu0 0.0
  %2317 = vmatprep.subr.mxu0 0.0
  %2318 = vmatpush2.msra.mxu0 0.0
  %2319 = vmatprep.subr.mxu0 0.0
  %2320 = vmatpush2.msra.mxu0 0.0
  %2321 = vmatprep.subr.mxu0 0.0
  %2322 = vmatpush2.msra.mxu0 0.0
  %2323 = vmatprep.subr.mxu0 0.0
  %2324 = vmatpush2.msra.mxu0 0.0
  %2325 = vmatprep.subr.mxu0 0.0
  %2326 = vmatpush2.msra.mxu0 0.0
  %2327 = vmatprep.subr.mxu0 0.0
  %2328 = vmatpush2.msra.mxu0 0.0
  %2329 = vmatprep.subr.mxu0 0.0
  %2330 = vmatpush2.msra.mxu0 0.0
  %2331 = vmatprep.subr.mxu0 0.0
  %2332 = vmatpush2.msra.mxu0 0.0
  %2333 = vmatprep.subr.mxu0 0.0
  %2334 = vmatpush2.msra.mxu0 0.0
  %2335 = vmatprep.subr.mxu0 0.0
  %2336 = vmatpush2.msra.mxu0 0.0
  %2337 = vmatprep.subr.mxu0 0.0
  %2338 = vmatpush2.msra.mxu0 0.0
  %2339 = vmatprep.subr.mxu0 0.0
  %2340 = vmatpush2.msra.mxu0 0.0
  %2341 = vmatprep.subr.mxu0 0.0
  %2342 = vmatpush2.msra.mxu0 0.0
  %2343 = vmatprep.mubr.f32.mxu0 0.0
  %2344 = vmatmul.mubr.f32.gmra.mxu0 %v46
  %v2345 = vpop.f32.mrf.mxu0
  %v2346 = vadd.f32 0.0, %v2345
  %v2347 = vpop.f32.mrf.mxu0
  %v2348 = vadd.f32 0.0, %v2347
  %2349 = vmatprep.mubr.f32.mxu0 0.0
  %2350 = vmatmul.mubr.f32.gmra.mxu0 %v49
  %v2351 = vpop.f32.mrf.mxu0
  %v2352 = vadd.f32 0.0, %v2351
  %v2353 = vpop.f32.mrf.mxu0
  %v2354 = vadd.f32 0.0, %v2353
  %2355 = vdwg.mxu0
  %2356 = vmatprep.subr.mxu0 0.0
  %2357 = vmatpush1.msra.mxu0 0.0
  %2358 = vmatprep.subr.mxu0 0.0
  %2359 = vmatpush1.msra.mxu0 0.0
  %2360 = vmatprep.subr.mxu0 0.0
  %2361 = vmatpush1.msra.mxu0 0.0
  %2362 = vmatprep.subr.mxu0 0.0
  %2363 = vmatpush1.msra.mxu0 0.0
  %2364 = vmatprep.subr.mxu0 0.0
  %2365 = vmatpush1.msra.mxu0 0.0
  %2366 = vmatprep.subr.mxu0 0.0
  %2367 = vmatpush1.msra.mxu0 0.0
  %2368 = vmatprep.subr.mxu0 0.0
  %2369 = vmatpush1.msra.mxu0 0.0
  %2370 = vmatprep.subr.mxu0 0.0
  %2371 = vmatpush1.msra.mxu0 0.0
  %2372 = vmatprep.subr.mxu0 0.0
  %2373 = vmatpush1.msra.mxu0 0.0
  %2374 = vmatprep.subr.mxu0 0.0
  %2375 = vmatpush1.msra.mxu0 0.0
  %2376 = vmatprep.subr.mxu0 0.0
  %2377 = vmatpush1.msra.mxu0 0.0
  %2378 = vmatprep.subr.mxu0 0.0
  %2379 = vmatpush1.msra.mxu0 0.0
  %2380 = vmatprep.subr.mxu0 %v2268
  %2381 = vmatpush1.msra.mxu0 %v2265
  %2382 = vmatprep.subr.mxu0 %v2247
  %2383 = vmatpush1.msra.mxu0 %v2246
  %2384 = vmatprep.subr.mxu0 %v2240
  %2385 = vmatpush1.msra.mxu0 %v2239
  %2386 = vmatprep.subr.mxu0 %v2233
  %2387 = vmatpush1.msra.mxu0 %v2232
  %2388 = vmatprep.subr.mxu0 0.0
  %2389 = vmatpush2.msra.mxu0 0.0
  %2390 = vmatprep.subr.mxu0 0.0
  %2391 = vmatpush2.msra.mxu0 0.0
  %2392 = vmatprep.subr.mxu0 0.0
  %2393 = vmatpush2.msra.mxu0 0.0
  %2394 = vmatprep.subr.mxu0 0.0
  %2395 = vmatpush2.msra.mxu0 0.0
  %2396 = vmatprep.subr.mxu0 0.0
  %2397 = vmatpush2.msra.mxu0 0.0
  %2398 = vmatprep.subr.mxu0 0.0
  %2399 = vmatpush2.msra.mxu0 0.0
  %2400 = vmatprep.subr.mxu0 0.0
  %2401 = vmatpush2.msra.mxu0 0.0
  %2402 = vmatprep.subr.mxu0 0.0
  %2403 = vmatpush2.msra.mxu0 0.0
  %2404 = vmatprep.subr.mxu0 0.0
  %2405 = vmatpush2.msra.mxu0 0.0
  %2406 = vmatprep.subr.mxu0 0.0
  %2407 = vmatpush2.msra.mxu0 0.0
  %2408 = vmatprep.subr.mxu0 0.0
  %2409 = vmatpush2.msra.mxu0 0.0
  %2410 = vmatprep.subr.mxu0 0.0
  %2411 = vmatpush2.msra.mxu0 0.0
  %2412 = vmatprep.subr.mxu0 0.0
  %2413 = vmatpush2.msra.mxu0 0.0
  %2414 = vmatprep.subr.mxu0 0.0
  %2415 = vmatpush2.msra.mxu0 0.0
  %2416 = vmatprep.subr.mxu0 0.0
  %2417 = vmatpush2.msra.mxu0 0.0
  %2418 = vmatprep.subr.mxu0 0.0
  %2419 = vmatpush2.msra.mxu0 0.0
  %2420 = vmatprep.mubr.f32.mxu0 0.0
  %2421 = vmatmul.mubr.f32.gmra.mxu0 %v46
  %v2422 = vpop.f32.mrf.mxu0
  %v2423 = vadd.f32 0.0, %v2422
  %v2424 = vpop.f32.mrf.mxu0
  %v2425 = vadd.f32 0.0, %v2424
  %2426 = vmatprep.mubr.f32.mxu0 0.0
  %2427 = vmatmul.mubr.f32.gmra.mxu0 %v49
  %v2428 = vpop.f32.mrf.mxu0
  %v2429 = vadd.f32 0.0, %v2428
  %v2430 = vpop.f32.mrf.mxu0
  %v2431 = vadd.f32 0.0, %v2430
  %2432 = vdwg.mxu0
  %2433 = vmatprep.subr.mxu0 0.0
  %2434 = vmatpush1.msra.mxu0 0.0
  %2435 = vmatprep.subr.mxu0 0.0
  %2436 = vmatpush1.msra.mxu0 0.0
  %2437 = vmatprep.subr.mxu0 0.0
  %2438 = vmatpush1.msra.mxu0 0.0
  %2439 = vmatprep.subr.mxu0 0.0
  %2440 = vmatpush1.msra.mxu0 0.0
  %2441 = vmatprep.subr.mxu0 0.0
  %2442 = vmatpush1.msra.mxu0 0.0
  %2443 = vmatprep.subr.mxu0 0.0
  %2444 = vmatpush1.msra.mxu0 0.0
  %2445 = vmatprep.subr.mxu0 0.0
  %2446 = vmatpush1.msra.mxu0 0.0
  %2447 = vmatprep.subr.mxu0 0.0
  %2448 = vmatpush1.msra.mxu0 0.0
  %2449 = vmatprep.subr.mxu0 0.0
  %2450 = vmatpush1.msra.mxu0 0.0
  %2451 = vmatprep.subr.mxu0 0.0
  %2452 = vmatpush1.msra.mxu0 0.0
  %2453 = vmatprep.subr.mxu0 0.0
  %2454 = vmatpush1.msra.mxu0 0.0
  %2455 = vmatprep.subr.mxu0 0.0
  %2456 = vmatpush1.msra.mxu0 0.0
  %2457 = vmatprep.subr.mxu0 %v2274
  %2458 = vmatpush1.msra.mxu0 %v2271
  %2459 = vmatprep.subr.mxu0 %v2249
  %2460 = vmatpush1.msra.mxu0 %v2248
  %2461 = vmatprep.subr.mxu0 %v2242
  %2462 = vmatpush1.msra.mxu0 %v2241
  %2463 = vmatprep.subr.mxu0 %v2235
  %2464 = vmatpush1.msra.mxu0 %v2234
  %2465 = vmatprep.subr.mxu0 0.0
  %2466 = vmatpush2.msra.mxu0 0.0
  %2467 = vmatprep.subr.mxu0 0.0
  %2468 = vmatpush2.msra.mxu0 0.0
  %2469 = vmatprep.subr.mxu0 0.0
  %2470 = vmatpush2.msra.mxu0 0.0
  %2471 = vmatprep.subr.mxu0 0.0
  %2472 = vmatpush2.msra.mxu0 0.0
  %2473 = vmatprep.subr.mxu0 0.0
  %2474 = vmatpush2.msra.mxu0 0.0
  %2475 = vmatprep.subr.mxu0 0.0
  %2476 = vmatpush2.msra.mxu0 0.0
  %2477 = vmatprep.subr.mxu0 0.0
  %2478 = vmatpush2.msra.mxu0 0.0
  %2479 = vmatprep.subr.mxu0 0.0
  %2480 = vmatpush2.msra.mxu0 0.0
  %2481 = vmatprep.subr.mxu0 0.0
  %2482 = vmatpush2.msra.mxu0 0.0
  %2483 = vmatprep.subr.mxu0 0.0
  %2484 = vmatpush2.msra.mxu0 0.0
  %2485 = vmatprep.subr.mxu0 0.0
  %2486 = vmatpush2.msra.mxu0 0.0
  %2487 = vmatprep.subr.mxu0 0.0
  %2488 = vmatpush2.msra.mxu0 0.0
  %2489 = vmatprep.subr.mxu0 0.0
  %2490 = vmatpush2.msra.mxu0 0.0
  %2491 = vmatprep.subr.mxu0 0.0
  %2492 = vmatpush2.msra.mxu0 0.0
  %2493 = vmatprep.subr.mxu0 0.0
  %2494 = vmatpush2.msra.mxu0 0.0
  %2495 = vmatprep.subr.mxu0 0.0
  %2496 = vmatpush2.msra.mxu0 0.0
  %2497 = vmatprep.mubr.f32.mxu0 0.0
  %2498 = vmatmul.mubr.f32.gmra.mxu0 %v46
  %v2499 = vpop.f32.mrf.mxu0
  %v2500 = vadd.f32 0.0, %v2499
  %v2501 = vpop.f32.mrf.mxu0
  %v2502 = vadd.f32 0.0, %v2501
  %2503 = vmatprep.mubr.f32.mxu0 0.0
  %2504 = vmatmul.mubr.f32.gmra.mxu0 %v49
  %v2505 = vpop.f32.mrf.mxu0
  %v2506 = vadd.f32 0.0, %v2505
  %v2507 = vpop.f32.mrf.mxu0
  %v2508 = vadd.f32 0.0, %v2507
  %2509 = vdwg.mxu0
  %2510 = vmatprep.subr.mxu0 0.0
  %2511 = vmatpush1.msra.mxu0 0.0
  %2512 = vmatprep.subr.mxu0 0.0
  %2513 = vmatpush1.msra.mxu0 0.0
  %2514 = vmatprep.subr.mxu0 0.0
  %2515 = vmatpush1.msra.mxu0 0.0
  %2516 = vmatprep.subr.mxu0 0.0
  %2517 = vmatpush1.msra.mxu0 0.0
  %2518 = vmatprep.subr.mxu0 0.0
  %2519 = vmatpush1.msra.mxu0 0.0
  %2520 = vmatprep.subr.mxu0 0.0
  %2521 = vmatpush1.msra.mxu0 0.0
  %2522 = vmatprep.subr.mxu0 0.0
  %2523 = vmatpush1.msra.mxu0 0.0
  %2524 = vmatprep.subr.mxu0 0.0
  %2525 = vmatpush1.msra.mxu0 0.0
  %2526 = vmatprep.subr.mxu0 0.0
  %2527 = vmatpush1.msra.mxu0 0.0
  %2528 = vmatprep.subr.mxu0 0.0
  %2529 = vmatpush1.msra.mxu0 0.0
  %2530 = vmatprep.subr.mxu0 0.0
  %2531 = vmatpush1.msra.mxu0 0.0
  %2532 = vmatprep.subr.mxu0 0.0
  %2533 = vmatpush1.msra.mxu0 0.0
  %2534 = vmatprep.subr.mxu0 0.0
  %2535 = vmatpush1.msra.mxu0 %v2277
  %2536 = vmatprep.subr.mxu0 0.0
  %2537 = vmatpush1.msra.mxu0 %v2250
  %2538 = vmatprep.subr.mxu0 0.0
  %2539 = vmatpush1.msra.mxu0 %v2243
  %2540 = vmatprep.subr.mxu0 0.0
  %2541 = vmatpush1.msra.mxu0 %v2236
  %2542 = vmatprep.subr.mxu0 0.0
  %2543 = vmatpush2.msra.mxu0 0.0
  %2544 = vmatprep.subr.mxu0 0.0
  %2545 = vmatpush2.msra.mxu0 0.0
  %2546 = vmatprep.subr.mxu0 0.0
  %2547 = vmatpush2.msra.mxu0 0.0
  %2548 = vmatprep.subr.mxu0 0.0
  %2549 = vmatpush2.msra.mxu0 0.0
  %2550 = vmatprep.subr.mxu0 0.0
  %2551 = vmatpush2.msra.mxu0 0.0
  %2552 = vmatprep.subr.mxu0 0.0
  %2553 = vmatpush2.msra.mxu0 0.0
  %2554 = vmatprep.subr.mxu0 0.0
  %2555 = vmatpush2.msra.mxu0 0.0
  %2556 = vmatprep.subr.mxu0 0.0
  %2557 = vmatpush2.msra.mxu0 0.0
  %2558 = vmatprep.subr.mxu0 0.0
  %2559 = vmatpush2.msra.mxu0 0.0
  %2560 = vmatprep.subr.mxu0 0.0
  %2561 = vmatpush2.msra.mxu0 0.0
  %2562 = vmatprep.subr.mxu0 0.0
  %2563 = vmatpush2.msra.mxu0 0.0
  %2564 = vmatprep.subr.mxu0 0.0
  %2565 = vmatpush2.msra.mxu0 0.0
  %2566 = vmatprep.subr.mxu0 0.0
  %2567 = vmatpush2.msra.mxu0 0.0
  %2568 = vmatprep.subr.mxu0 0.0
  %2569 = vmatpush2.msra.mxu0 0.0
  %2570 = vmatprep.subr.mxu0 0.0
  %2571 = vmatpush2.msra.mxu0 0.0
  %2572 = vmatprep.subr.mxu0 0.0
  %2573 = vmatpush2.msra.mxu0 0.0
  %2574 = vmatprep.mubr.f32.mxu0 0.0
  %2575 = vmatmul.mubr.f32.gmra.mxu0 %v46
  %v2576 = vpop.f32.mrf.mxu0
  %v2577 = vadd.f32 0.0, %v2576
  %v2578 = vpop.f32.mrf.mxu0
  %2579 = vmatprep.mubr.f32.mxu0 0.0
  %2580 = vmatmul.mubr.f32.gmra.mxu0 %v49
  %v2581 = vpop.f32.mrf.mxu0
  %v2582 = vadd.f32 0.0, %v2581
  %v2583 = vpop.f32.mrf.mxu0
  %2584 = vdwg.mxu0
  %v2585 = vmax.f32 %v2215, %v2346
  %v2586 = vmax.f32 %v2216, %v2348
  %v2587 = vmax.f32 %v2217, %v2423
  %v2588 = vmax.f32 %v2218, %v2425
  %v2589 = vmax.f32 %v2219, %v2500
  %v2590 = vmax.f32 %v2220, %v2502
  %v2591 = vmax.f32 %v2221, %v2577
  %v2592 = vmax.f32 %v2222, %v2352
  %v2593 = vmax.f32 %v2223, %v2354
  %v2594 = vmax.f32 %v2224, %v2429
  %v2595 = vmax.f32 %v2225, %v2431
  %v2596 = vmax.f32 %v2226, %v2506
  %v2597 = vmax.f32 %v2227, %v2508
  %v2598 = vmax.f32 %v2228, %v2582
  %s2599 = scalar_lea.vmem %s0, 1568
  %v2600 = vld [vmem:[%s2599] sm:$0xff]
  %v2601 = vld [vmem:[%s2599 + $0x8] sm:$0xff]
  %v2602 = vld [vmem:[%s2599 + $0x10] sm:$0xff]
  %v2603 = vld [vmem:[%s2599 + $0x18] sm:$0xff]
  %v2604 = vld [vmem:[%s2599 + $0x20] sm:$0xff]
  %v2605 = vld [vmem:[%s2599 + $0x28] sm:$0xff]
  %v2606 = vld [vmem:[%s2599 + $0x30] sm:$0xff]
  %v2607 = vld [vmem:[%s2599 + $0x38] sm:$0xff]
  %v2608 = vld [vmem:[%s2599 + $0x40] sm:$0xff]
  %v2609 = vld [vmem:[%s2599 + $0x48] sm:$0xff]
  %v2610 = vld [vmem:[%s2599 + $0x50] sm:$0xff]
  %v2611 = vld [vmem:[%s2599 + $0x58] sm:$0xff]
  %v2612 = vld [vmem:[%s2599 + $0x60] sm:$0xff]
  %v2613 = vld [vmem:[%s2599 + $0x68] sm:$0xff]
  %v2614 = vld [vmem:[%s2599 + $0x70] sm:$0xff]
  %v2615 = vld [vmem:[%s2599 + $0x78] sm:$0xff]
  %v2616 = vld [vmem:[%s2599 + $0x80] sm:$0xff]
  %v2617 = vld [vmem:[%s2599 + $0x88] sm:$0xff]
  %v2618 = vld [vmem:[%s2599 + $0x90] sm:$0xff]
  %v2619 = vld [vmem:[%s2599 + $0x98] sm:$0xff]
  %v2620 = vld [vmem:[%s2599 + $0xa0] sm:$0xff]
  %v2621 = vld [vmem:[%s2599 + $0xa8] sm:$0x1]
  %v2622 = vld [vmem:[%s2599 + $0xb0] sm:$0x1]
  %v2623 = vld [vmem:[%s2599 + $0xb8] sm:$0x1]
  %v2624 = vld [vmem:[%s2599 + $0xc0] sm:$0x1]
  %v2625 = vld [vmem:[%s2599 + $0xc8] sm:$0x1]
  %v2626 = vld [vmem:[%s2599 + $0xd0] sm:$0x1]
  %v2627 = vld [vmem:[%s2599 + $0xd8] sm:$0x1]
  %v2629 = vsel %vm51, %v2621, 0
  %v2632 = vsel %vm51, %v2622, 0
  %v2635 = vsel %vm51, %v2623, 0
  %v2638 = vsel %vm51, %v2624, 0
  %v2641 = vsel %vm51, %v2625, 0
  %v2644 = vsel %vm51, %v2626, 0
  %v2647 = vsel %vm51, %v2627, 0
  %2649 = vmatprep.subr.mxu0 0.0
  %2650 = vmatpush1.msra.mxu0 0.0
  %2651 = vmatprep.subr.mxu0 0.0
  %2652 = vmatpush1.msra.mxu0 0.0
  %2653 = vmatprep.subr.mxu0 0.0
  %2654 = vmatpush1.msra.mxu0 0.0
  %2655 = vmatprep.subr.mxu0 0.0
  %2656 = vmatpush1.msra.mxu0 0.0
  %2657 = vmatprep.subr.mxu0 0.0
  %2658 = vmatpush1.msra.mxu0 0.0
  %2659 = vmatprep.subr.mxu0 0.0
  %2660 = vmatpush1.msra.mxu0 0.0
  %2661 = vmatprep.subr.mxu0 0.0
  %2662 = vmatpush1.msra.mxu0 0.0
  %2663 = vmatprep.subr.mxu0 0.0
  %2664 = vmatpush1.msra.mxu0 0.0
  %2665 = vmatprep.subr.mxu0 0.0
  %2666 = vmatpush1.msra.mxu0 0.0
  %2667 = vmatprep.subr.mxu0 0.0
  %2668 = vmatpush1.msra.mxu0 0.0
  %2669 = vmatprep.subr.mxu0 0.0
  %2670 = vmatpush1.msra.mxu0 0.0
  %2671 = vmatprep.subr.mxu0 0.0
  %2672 = vmatpush1.msra.mxu0 0.0
  %2673 = vmatprep.subr.mxu0 %v2632
  %2674 = vmatpush1.msra.mxu0 %v2629
  %2675 = vmatprep.subr.mxu0 %v2615
  %2676 = vmatpush1.msra.mxu0 %v2614
  %2677 = vmatprep.subr.mxu0 %v2608
  %2678 = vmatpush1.msra.mxu0 %v2607
  %2679 = vmatprep.subr.mxu0 %v2601
  %2680 = vmatpush1.msra.mxu0 %v2600
  %2681 = vmatprep.subr.mxu0 0.0
  %2682 = vmatpush2.msra.mxu0 0.0
  %2683 = vmatprep.subr.mxu0 0.0
  %2684 = vmatpush2.msra.mxu0 0.0
  %2685 = vmatprep.subr.mxu0 0.0
  %2686 = vmatpush2.msra.mxu0 0.0
  %2687 = vmatprep.subr.mxu0 0.0
  %2688 = vmatpush2.msra.mxu0 0.0
  %2689 = vmatprep.subr.mxu0 0.0
  %2690 = vmatpush2.msra.mxu0 0.0
  %2691 = vmatprep.subr.mxu0 0.0
  %2692 = vmatpush2.msra.mxu0 0.0
  %2693 = vmatprep.subr.mxu0 0.0
  %2694 = vmatpush2.msra.mxu0 0.0
  %2695 = vmatprep.subr.mxu0 0.0
  %2696 = vmatpush2.msra.mxu0 0.0
  %2697 = vmatprep.subr.mxu0 0.0
  %2698 = vmatpush2.msra.mxu0 0.0
  %2699 = vmatprep.subr.mxu0 0.0
  %2700 = vmatpush2.msra.mxu0 0.0
  %2701 = vmatprep.subr.mxu0 0.0
  %2702 = vmatpush2.msra.mxu0 0.0
  %2703 = vmatprep.subr.mxu0 0.0
  %2704 = vmatpush2.msra.mxu0 0.0
  %2705 = vmatprep.subr.mxu0 0.0
  %2706 = vmatpush2.msra.mxu0 0.0
  %2707 = vmatprep.subr.mxu0 0.0
  %2708 = vmatpush2.msra.mxu0 0.0
  %2709 = vmatprep.subr.mxu0 0.0
  %2710 = vmatpush2.msra.mxu0 0.0
  %2711 = vmatprep.subr.mxu0 0.0
  %2712 = vmatpush2.msra.mxu0 0.0
  %2713 = vmatprep.mubr.f32.mxu0 0.0
  %2714 = vmatmul.mubr.f32.gmra.mxu0 %v46
  %v2715 = vpop.f32.mrf.mxu0
  %v2716 = vadd.f32 0.0, %v2715
  %v2717 = vpop.f32.mrf.mxu0
  %v2718 = vadd.f32 0.0, %v2717
  %2719 = vmatprep.mubr.f32.mxu0 0.0
  %2720 = vmatmul.mubr.f32.gmra.mxu0 %v49
  %v2721 = vpop.f32.mrf.mxu0
  %v2722 = vadd.f32 0.0, %v2721
  %v2723 = vpop.f32.mrf.mxu0
  %v2724 = vadd.f32 0.0, %v2723
  %2725 = vdwg.mxu0
  %2726 = vmatprep.subr.mxu0 0.0
  %2727 = vmatpush1.msra.mxu0 0.0
  %2728 = vmatprep.subr.mxu0 0.0
  %2729 = vmatpush1.msra.mxu0 0.0
  %2730 = vmatprep.subr.mxu0 0.0
  %2731 = vmatpush1.msra.mxu0 0.0
  %2732 = vmatprep.subr.mxu0 0.0
  %2733 = vmatpush1.msra.mxu0 0.0
  %2734 = vmatprep.subr.mxu0 0.0
  %2735 = vmatpush1.msra.mxu0 0.0
  %2736 = vmatprep.subr.mxu0 0.0
  %2737 = vmatpush1.msra.mxu0 0.0
  %2738 = vmatprep.subr.mxu0 0.0
  %2739 = vmatpush1.msra.mxu0 0.0
  %2740 = vmatprep.subr.mxu0 0.0
  %2741 = vmatpush1.msra.mxu0 0.0
  %2742 = vmatprep.subr.mxu0 0.0
  %2743 = vmatpush1.msra.mxu0 0.0
  %2744 = vmatprep.subr.mxu0 0.0
  %2745 = vmatpush1.msra.mxu0 0.0
  %2746 = vmatprep.subr.mxu0 0.0
  %2747 = vmatpush1.msra.mxu0 0.0
  %2748 = vmatprep.subr.mxu0 0.0
  %2749 = vmatpush1.msra.mxu0 0.0
  %2750 = vmatprep.subr.mxu0 %v2638
  %2751 = vmatpush1.msra.mxu0 %v2635
  %2752 = vmatprep.subr.mxu0 %v2617
  %2753 = vmatpush1.msra.mxu0 %v2616
  %2754 = vmatprep.subr.mxu0 %v2610
  %2755 = vmatpush1.msra.mxu0 %v2609
  %2756 = vmatprep.subr.mxu0 %v2603
  %2757 = vmatpush1.msra.mxu0 %v2602
  %2758 = vmatprep.subr.mxu0 0.0
  %2759 = vmatpush2.msra.mxu0 0.0
  %2760 = vmatprep.subr.mxu0 0.0
  %2761 = vmatpush2.msra.mxu0 0.0
  %2762 = vmatprep.subr.mxu0 0.0
  %2763 = vmatpush2.msra.mxu0 0.0
  %2764 = vmatprep.subr.mxu0 0.0
  %2765 = vmatpush2.msra.mxu0 0.0
  %2766 = vmatprep.subr.mxu0 0.0
  %2767 = vmatpush2.msra.mxu0 0.0
  %2768 = vmatprep.subr.mxu0 0.0
  %2769 = vmatpush2.msra.mxu0 0.0
  %2770 = vmatprep.subr.mxu0 0.0
  %2771 = vmatpush2.msra.mxu0 0.0
  %2772 = vmatprep.subr.mxu0 0.0
  %2773 = vmatpush2.msra.mxu0 0.0
  %2774 = vmatprep.subr.mxu0 0.0
  %2775 = vmatpush2.msra.mxu0 0.0
  %2776 = vmatprep.subr.mxu0 0.0
  %2777 = vmatpush2.msra.mxu0 0.0
  %2778 = vmatprep.subr.mxu0 0.0
  %2779 = vmatpush2.msra.mxu0 0.0
  %2780 = vmatprep.subr.mxu0 0.0
  %2781 = vmatpush2.msra.mxu0 0.0
  %2782 = vmatprep.subr.mxu0 0.0
  %2783 = vmatpush2.msra.mxu0 0.0
  %2784 = vmatprep.subr.mxu0 0.0
  %2785 = vmatpush2.msra.mxu0 0.0
  %2786 = vmatprep.subr.mxu0 0.0
  %2787 = vmatpush2.msra.mxu0 0.0
  %2788 = vmatprep.subr.mxu0 0.0
  %2789 = vmatpush2.msra.mxu0 0.0
  %2790 = vmatprep.mubr.f32.mxu0 0.0
  %2791 = vmatmul.mubr.f32.gmra.mxu0 %v46
  %v2792 = vpop.f32.mrf.mxu0
  %v2793 = vadd.f32 0.0, %v2792
  %v2794 = vpop.f32.mrf.mxu0
  %v2795 = vadd.f32 0.0, %v2794
  %2796 = vmatprep.mubr.f32.mxu0 0.0
  %2797 = vmatmul.mubr.f32.gmra.mxu0 %v49
  %v2798 = vpop.f32.mrf.mxu0
  %v2799 = vadd.f32 0.0, %v2798
  %v2800 = vpop.f32.mrf.mxu0
  %v2801 = vadd.f32 0.0, %v2800
  %2802 = vdwg.mxu0
  %2803 = vmatprep.subr.mxu0 0.0
  %2804 = vmatpush1.msra.mxu0 0.0
  %2805 = vmatprep.subr.mxu0 0.0
  %2806 = vmatpush1.msra.mxu0 0.0
  %2807 = vmatprep.subr.mxu0 0.0
  %2808 = vmatpush1.msra.mxu0 0.0
  %2809 = vmatprep.subr.mxu0 0.0
  %2810 = vmatpush1.msra.mxu0 0.0
  %2811 = vmatprep.subr.mxu0 0.0
  %2812 = vmatpush1.msra.mxu0 0.0
  %2813 = vmatprep.subr.mxu0 0.0
  %2814 = vmatpush1.msra.mxu0 0.0
  %2815 = vmatprep.subr.mxu0 0.0
  %2816 = vmatpush1.msra.mxu0 0.0
  %2817 = vmatprep.subr.mxu0 0.0
  %2818 = vmatpush1.msra.mxu0 0.0
  %2819 = vmatprep.subr.mxu0 0.0
  %2820 = vmatpush1.msra.mxu0 0.0
  %2821 = vmatprep.subr.mxu0 0.0
  %2822 = vmatpush1.msra.mxu0 0.0
  %2823 = vmatprep.subr.mxu0 0.0
  %2824 = vmatpush1.msra.mxu0 0.0
  %2825 = vmatprep.subr.mxu0 0.0
  %2826 = vmatpush1.msra.mxu0 0.0
  %2827 = vmatprep.subr.mxu0 %v2644
  %2828 = vmatpush1.msra.mxu0 %v2641
  %2829 = vmatprep.subr.mxu0 %v2619
  %2830 = vmatpush1.msra.mxu0 %v2618
  %2831 = vmatprep.subr.mxu0 %v2612
  %2832 = vmatpush1.msra.mxu0 %v2611
  %2833 = vmatprep.subr.mxu0 %v2605
  %2834 = vmatpush1.msra.mxu0 %v2604
  %2835 = vmatprep.subr.mxu0 0.0
  %2836 = vmatpush2.msra.mxu0 0.0
  %2837 = vmatprep.subr.mxu0 0.0
  %2838 = vmatpush2.msra.mxu0 0.0
  %2839 = vmatprep.subr.mxu0 0.0
  %2840 = vmatpush2.msra.mxu0 0.0
  %2841 = vmatprep.subr.mxu0 0.0
  %2842 = vmatpush2.msra.mxu0 0.0
  %2843 = vmatprep.subr.mxu0 0.0
  %2844 = vmatpush2.msra.mxu0 0.0
  %2845 = vmatprep.subr.mxu0 0.0
  %2846 = vmatpush2.msra.mxu0 0.0
  %2847 = vmatprep.subr.mxu0 0.0
  %2848 = vmatpush2.msra.mxu0 0.0
  %2849 = vmatprep.subr.mxu0 0.0
  %2850 = vmatpush2.msra.mxu0 0.0
  %2851 = vmatprep.subr.mxu0 0.0
  %2852 = vmatpush2.msra.mxu0 0.0
  %2853 = vmatprep.subr.mxu0 0.0
  %2854 = vmatpush2.msra.mxu0 0.0
  %2855 = vmatprep.subr.mxu0 0.0
  %2856 = vmatpush2.msra.mxu0 0.0
  %2857 = vmatprep.subr.mxu0 0.0
  %2858 = vmatpush2.msra.mxu0 0.0
  %2859 = vmatprep.subr.mxu0 0.0
  %2860 = vmatpush2.msra.mxu0 0.0
  %2861 = vmatprep.subr.mxu0 0.0
  %2862 = vmatpush2.msra.mxu0 0.0
  %2863 = vmatprep.subr.mxu0 0.0
  %2864 = vmatpush2.msra.mxu0 0.0
  %2865 = vmatprep.subr.mxu0 0.0
  %2866 = vmatpush2.msra.mxu0 0.0
  %2867 = vmatprep.mubr.f32.mxu0 0.0
  %2868 = vmatmul.mubr.f32.gmra.mxu0 %v46
  %v2869 = vpop.f32.mrf.mxu0
  %v2870 = vadd.f32 0.0, %v2869
  %v2871 = vpop.f32.mrf.mxu0
  %v2872 = vadd.f32 0.0, %v2871
  %2873 = vmatprep.mubr.f32.mxu0 0.0
  %2874 = vmatmul.mubr.f32.gmra.mxu0 %v49
  %v2875 = vpop.f32.mrf.mxu0
  %v2876 = vadd.f32 0.0, %v2875
  %v2877 = vpop.f32.mrf.mxu0
  %v2878 = vadd.f32 0.0, %v2877
  %2879 = vdwg.mxu0
  %2880 = vmatprep.subr.mxu0 0.0
  %2881 = vmatpush1.msra.mxu0 0.0
  %2882 = vmatprep.subr.mxu0 0.0
  %2883 = vmatpush1.msra.mxu0 0.0
  %2884 = vmatprep.subr.mxu0 0.0
  %2885 = vmatpush1.msra.mxu0 0.0
  %2886 = vmatprep.subr.mxu0 0.0
  %2887 = vmatpush1.msra.mxu0 0.0
  %2888 = vmatprep.subr.mxu0 0.0
  %2889 = vmatpush1.msra.mxu0 0.0
  %2890 = vmatprep.subr.mxu0 0.0
  %2891 = vmatpush1.msra.mxu0 0.0
  %2892 = vmatprep.subr.mxu0 0.0
  %2893 = vmatpush1.msra.mxu0 0.0
  %2894 = vmatprep.subr.mxu0 0.0
  %2895 = vmatpush1.msra.mxu0 0.0
  %2896 = vmatprep.subr.mxu0 0.0
  %2897 = vmatpush1.msra.mxu0 0.0
  %2898 = vmatprep.subr.mxu0 0.0
  %2899 = vmatpush1.msra.mxu0 0.0
  %2900 = vmatprep.subr.mxu0 0.0
  %2901 = vmatpush1.msra.mxu0 0.0
  %2902 = vmatprep.subr.mxu0 0.0
  %2903 = vmatpush1.msra.mxu0 0.0
  %2904 = vmatprep.subr.mxu0 0.0
  %2905 = vmatpush1.msra.mxu0 %v2647
  %2906 = vmatprep.subr.mxu0 0.0
  %2907 = vmatpush1.msra.mxu0 %v2620
  %2908 = vmatprep.subr.mxu0 0.0
  %2909 = vmatpush1.msra.mxu0 %v2613
  %2910 = vmatprep.subr.mxu0 0.0
  %2911 = vmatpush1.msra.mxu0 %v2606
  %2912 = vmatprep.subr.mxu0 0.0
  %2913 = vmatpush2.msra.mxu0 0.0
  %2914 = vmatprep.subr.mxu0 0.0
  %2915 = vmatpush2.msra.mxu0 0.0
  %2916 = vmatprep.subr.mxu0 0.0
  %2917 = vmatpush2.msra.mxu0 0.0
  %2918 = vmatprep.subr.mxu0 0.0
  %2919 = vmatpush2.msra.mxu0 0.0
  %2920 = vmatprep.subr.mxu0 0.0
  %2921 = vmatpush2.msra.mxu0 0.0
  %2922 = vmatprep.subr.mxu0 0.0
  %2923 = vmatpush2.msra.mxu0 0.0
  %2924 = vmatprep.subr.mxu0 0.0
  %2925 = vmatpush2.msra.mxu0 0.0
  %2926 = vmatprep.subr.mxu0 0.0
  %2927 = vmatpush2.msra.mxu0 0.0
  %2928 = vmatprep.subr.mxu0 0.0
  %2929 = vmatpush2.msra.mxu0 0.0
  %2930 = vmatprep.subr.mxu0 0.0
  %2931 = vmatpush2.msra.mxu0 0.0
  %2932 = vmatprep.subr.mxu0 0.0
  %2933 = vmatpush2.msra.mxu0 0.0
  %2934 = vmatprep.subr.mxu0 0.0
  %2935 = vmatpush2.msra.mxu0 0.0
  %2936 = vmatprep.subr.mxu0 0.0
  %2937 = vmatpush2.msra.mxu0 0.0
  %2938 = vmatprep.subr.mxu0 0.0
  %2939 = vmatpush2.msra.mxu0 0.0
  %2940 = vmatprep.subr.mxu0 0.0
  %2941 = vmatpush2.msra.mxu0 0.0
  %2942 = vmatprep.subr.mxu0 0.0
  %2943 = vmatpush2.msra.mxu0 0.0
  %2944 = vmatprep.mubr.f32.mxu0 0.0
  %2945 = vmatmul.mubr.f32.gmra.mxu0 %v46
  %v2946 = vpop.f32.mrf.mxu0
  %v2947 = vadd.f32 0.0, %v2946
  %v2948 = vpop.f32.mrf.mxu0
  %2949 = vmatprep.mubr.f32.mxu0 0.0
  %2950 = vmatmul.mubr.f32.gmra.mxu0 %v49
  %v2951 = vpop.f32.mrf.mxu0
  %v2952 = vadd.f32 0.0, %v2951
  %v2953 = vpop.f32.mrf.mxu0
  %2954 = vdwg.mxu0
  %v2955 = vmax.f32 %v2585, %v2716
  %v2956 = vmax.f32 %v2586, %v2718
  %v2957 = vmax.f32 %v2587, %v2793
  %v2958 = vmax.f32 %v2588, %v2795
  %v2959 = vmax.f32 %v2589, %v2870
  %v2960 = vmax.f32 %v2590, %v2872
  %v2961 = vmax.f32 %v2591, %v2947
  %v2962 = vmax.f32 %v2592, %v2722
  %v2963 = vmax.f32 %v2593, %v2724
  %v2964 = vmax.f32 %v2594, %v2799
  %v2965 = vmax.f32 %v2595, %v2801
  %v2966 = vmax.f32 %v2596, %v2876
  %v2967 = vmax.f32 %v2597, %v2878
  %v2968 = vmax.f32 %v2598, %v2952
  %s2969 = scalar_lea.vmem %s0, 1792
  %v2970 = vld [vmem:[%s2969] sm:$0xff]
  %v2971 = vld [vmem:[%s2969 + $0x8] sm:$0xff]
  %v2972 = vld [vmem:[%s2969 + $0x10] sm:$0xff]
  %v2973 = vld [vmem:[%s2969 + $0x18] sm:$0xff]
  %v2974 = vld [vmem:[%s2969 + $0x20] sm:$0xff]
  %v2975 = vld [vmem:[%s2969 + $0x28] sm:$0xff]
  %v2976 = vld [vmem:[%s2969 + $0x30] sm:$0xff]
  %v2977 = vld [vmem:[%s2969 + $0x38] sm:$0xff]
  %v2978 = vld [vmem:[%s2969 + $0x40] sm:$0xff]
  %v2979 = vld [vmem:[%s2969 + $0x48] sm:$0xff]
  %v2980 = vld [vmem:[%s2969 + $0x50] sm:$0xff]
  %v2981 = vld [vmem:[%s2969 + $0x58] sm:$0xff]
  %v2982 = vld [vmem:[%s2969 + $0x60] sm:$0xff]
  %v2983 = vld [vmem:[%s2969 + $0x68] sm:$0xff]
  %v2984 = vld [vmem:[%s2969 + $0x70] sm:$0xff]
  %v2985 = vld [vmem:[%s2969 + $0x78] sm:$0xff]
  %v2986 = vld [vmem:[%s2969 + $0x80] sm:$0xff]
  %v2987 = vld [vmem:[%s2969 + $0x88] sm:$0xff]
  %v2988 = vld [vmem:[%s2969 + $0x90] sm:$0xff]
  %v2989 = vld [vmem:[%s2969 + $0x98] sm:$0xff]
  %v2990 = vld [vmem:[%s2969 + $0xa0] sm:$0xff]
  %v2991 = vld [vmem:[%s2969 + $0xa8] sm:$0x1]
  %v2992 = vld [vmem:[%s2969 + $0xb0] sm:$0x1]
  %v2993 = vld [vmem:[%s2969 + $0xb8] sm:$0x1]
  %v2994 = vld [vmem:[%s2969 + $0xc0] sm:$0x1]
  %v2995 = vld [vmem:[%s2969 + $0xc8] sm:$0x1]
  %v2996 = vld [vmem:[%s2969 + $0xd0] sm:$0x1]
  %v2997 = vld [vmem:[%s2969 + $0xd8] sm:$0x1]
  %v2999 = vsel %vm51, %v2991, 0
  %v3002 = vsel %vm51, %v2992, 0
  %v3005 = vsel %vm51, %v2993, 0
  %v3008 = vsel %vm51, %v2994, 0
  %v3011 = vsel %vm51, %v2995, 0
  %v3014 = vsel %vm51, %v2996, 0
  %v3017 = vsel %vm51, %v2997, 0
  %3019 = vmatprep.subr.mxu0 0.0
  %3020 = vmatpush1.msra.mxu0 0.0
  %3021 = vmatprep.subr.mxu0 0.0
  %3022 = vmatpush1.msra.mxu0 0.0
  %3023 = vmatprep.subr.mxu0 0.0
  %3024 = vmatpush1.msra.mxu0 0.0
  %3025 = vmatprep.subr.mxu0 0.0
  %3026 = vmatpush1.msra.mxu0 0.0
  %3027 = vmatprep.subr.mxu0 0.0
  %3028 = vmatpush1.msra.mxu0 0.0
  %3029 = vmatprep.subr.mxu0 0.0
  %3030 = vmatpush1.msra.mxu0 0.0
  %3031 = vmatprep.subr.mxu0 0.0
  %3032 = vmatpush1.msra.mxu0 0.0
  %3033 = vmatprep.subr.mxu0 0.0
  %3034 = vmatpush1.msra.mxu0 0.0
  %3035 = vmatprep.subr.mxu0 0.0
  %3036 = vmatpush1.msra.mxu0 0.0
  %3037 = vmatprep.subr.mxu0 0.0
  %3038 = vmatpush1.msra.mxu0 0.0
  %3039 = vmatprep.subr.mxu0 0.0
  %3040 = vmatpush1.msra.mxu0 0.0
  %3041 = vmatprep.subr.mxu0 0.0
  %3042 = vmatpush1.msra.mxu0 0.0
  %3043 = vmatprep.subr.mxu0 %v3002
  %3044 = vmatpush1.msra.mxu0 %v2999
  %3045 = vmatprep.subr.mxu0 %v2985
  %3046 = vmatpush1.msra.mxu0 %v2984
  %3047 = vmatprep.subr.mxu0 %v2978
  %3048 = vmatpush1.msra.mxu0 %v2977
  %3049 = vmatprep.subr.mxu0 %v2971
  %3050 = vmatpush1.msra.mxu0 %v2970
  %3051 = vmatprep.subr.mxu0 0.0
  %3052 = vmatpush2.msra.mxu0 0.0
  %3053 = vmatprep.subr.mxu0 0.0
  %3054 = vmatpush2.msra.mxu0 0.0
  %3055 = vmatprep.subr.mxu0 0.0
  %3056 = vmatpush2.msra.mxu0 0.0
  %3057 = vmatprep.subr.mxu0 0.0
  %3058 = vmatpush2.msra.mxu0 0.0
  %3059 = vmatprep.subr.mxu0 0.0
  %3060 = vmatpush2.msra.mxu0 0.0
  %3061 = vmatprep.subr.mxu0 0.0
  %3062 = vmatpush2.msra.mxu0 0.0
  %3063 = vmatprep.subr.mxu0 0.0
  %3064 = vmatpush2.msra.mxu0 0.0
  %3065 = vmatprep.subr.mxu0 0.0
  %3066 = vmatpush2.msra.mxu0 0.0
  %3067 = vmatprep.subr.mxu0 0.0
  %3068 = vmatpush2.msra.mxu0 0.0
  %3069 = vmatprep.subr.mxu0 0.0
  %3070 = vmatpush2.msra.mxu0 0.0
  %3071 = vmatprep.subr.mxu0 0.0
  %3072 = vmatpush2.msra.mxu0 0.0
  %3073 = vmatprep.subr.mxu0 0.0
  %3074 = vmatpush2.msra.mxu0 0.0
  %3075 = vmatprep.subr.mxu0 0.0
  %3076 = vmatpush2.msra.mxu0 0.0
  %3077 = vmatprep.subr.mxu0 0.0
  %3078 = vmatpush2.msra.mxu0 0.0
  %3079 = vmatprep.subr.mxu0 0.0
  %3080 = vmatpush2.msra.mxu0 0.0
  %3081 = vmatprep.subr.mxu0 0.0
  %3082 = vmatpush2.msra.mxu0 0.0
  %3083 = vmatprep.mubr.f32.mxu0 0.0
  %3084 = vmatmul.mubr.f32.gmra.mxu0 %v46
  %v3085 = vpop.f32.mrf.mxu0
  %v3086 = vadd.f32 0.0, %v3085
  %v3087 = vpop.f32.mrf.mxu0
  %v3088 = vadd.f32 0.0, %v3087
  %3089 = vmatprep.mubr.f32.mxu0 0.0
  %3090 = vmatmul.mubr.f32.gmra.mxu0 %v49
  %v3091 = vpop.f32.mrf.mxu0
  %v3092 = vadd.f32 0.0, %v3091
  %v3093 = vpop.f32.mrf.mxu0
  %v3094 = vadd.f32 0.0, %v3093
  %3095 = vdwg.mxu0
  %3096 = vmatprep.subr.mxu0 0.0
  %3097 = vmatpush1.msra.mxu0 0.0
  %3098 = vmatprep.subr.mxu0 0.0
  %3099 = vmatpush1.msra.mxu0 0.0
  %3100 = vmatprep.subr.mxu0 0.0
  %3101 = vmatpush1.msra.mxu0 0.0
  %3102 = vmatprep.subr.mxu0 0.0
  %3103 = vmatpush1.msra.mxu0 0.0
  %3104 = vmatprep.subr.mxu0 0.0
  %3105 = vmatpush1.msra.mxu0 0.0
  %3106 = vmatprep.subr.mxu0 0.0
  %3107 = vmatpush1.msra.mxu0 0.0
  %3108 = vmatprep.subr.mxu0 0.0
  %3109 = vmatpush1.msra.mxu0 0.0
  %3110 = vmatprep.subr.mxu0 0.0
  %3111 = vmatpush1.msra.mxu0 0.0
  %3112 = vmatprep.subr.mxu0 0.0
  %3113 = vmatpush1.msra.mxu0 0.0
  %3114 = vmatprep.subr.mxu0 0.0
  %3115 = vmatpush1.msra.mxu0 0.0
  %3116 = vmatprep.subr.mxu0 0.0
  %3117 = vmatpush1.msra.mxu0 0.0
  %3118 = vmatprep.subr.mxu0 0.0
  %3119 = vmatpush1.msra.mxu0 0.0
  %3120 = vmatprep.subr.mxu0 %v3008
  %3121 = vmatpush1.msra.mxu0 %v3005
  %3122 = vmatprep.subr.mxu0 %v2987
  %3123 = vmatpush1.msra.mxu0 %v2986
  %3124 = vmatprep.subr.mxu0 %v2980
  %3125 = vmatpush1.msra.mxu0 %v2979
  %3126 = vmatprep.subr.mxu0 %v2973
  %3127 = vmatpush1.msra.mxu0 %v2972
  %3128 = vmatprep.subr.mxu0 0.0
  %3129 = vmatpush2.msra.mxu0 0.0
  %3130 = vmatprep.subr.mxu0 0.0
  %3131 = vmatpush2.msra.mxu0 0.0
  %3132 = vmatprep.subr.mxu0 0.0
  %3133 = vmatpush2.msra.mxu0 0.0
  %3134 = vmatprep.subr.mxu0 0.0
  %3135 = vmatpush2.msra.mxu0 0.0
  %3136 = vmatprep.subr.mxu0 0.0
  %3137 = vmatpush2.msra.mxu0 0.0
  %3138 = vmatprep.subr.mxu0 0.0
  %3139 = vmatpush2.msra.mxu0 0.0
  %3140 = vmatprep.subr.mxu0 0.0
  %3141 = vmatpush2.msra.mxu0 0.0
  %3142 = vmatprep.subr.mxu0 0.0
  %3143 = vmatpush2.msra.mxu0 0.0
  %3144 = vmatprep.subr.mxu0 0.0
  %3145 = vmatpush2.msra.mxu0 0.0
  %3146 = vmatprep.subr.mxu0 0.0
  %3147 = vmatpush2.msra.mxu0 0.0
  %3148 = vmatprep.subr.mxu0 0.0
  %3149 = vmatpush2.msra.mxu0 0.0
  %3150 = vmatprep.subr.mxu0 0.0
  %3151 = vmatpush2.msra.mxu0 0.0
  %3152 = vmatprep.subr.mxu0 0.0
  %3153 = vmatpush2.msra.mxu0 0.0
  %3154 = vmatprep.subr.mxu0 0.0
  %3155 = vmatpush2.msra.mxu0 0.0
  %3156 = vmatprep.subr.mxu0 0.0
  %3157 = vmatpush2.msra.mxu0 0.0
  %3158 = vmatprep.subr.mxu0 0.0
  %3159 = vmatpush2.msra.mxu0 0.0
  %3160 = vmatprep.mubr.f32.mxu0 0.0
  %3161 = vmatmul.mubr.f32.gmra.mxu0 %v46
  %v3162 = vpop.f32.mrf.mxu0
  %v3163 = vadd.f32 0.0, %v3162
  %v3164 = vpop.f32.mrf.mxu0
  %v3165 = vadd.f32 0.0, %v3164
  %3166 = vmatprep.mubr.f32.mxu0 0.0
  %3167 = vmatmul.mubr.f32.gmra.mxu0 %v49
  %v3168 = vpop.f32.mrf.mxu0
  %v3169 = vadd.f32 0.0, %v3168
  %v3170 = vpop.f32.mrf.mxu0
  %v3171 = vadd.f32 0.0, %v3170
  %3172 = vdwg.mxu0
  %3173 = vmatprep.subr.mxu0 0.0
  %3174 = vmatpush1.msra.mxu0 0.0
  %3175 = vmatprep.subr.mxu0 0.0
  %3176 = vmatpush1.msra.mxu0 0.0
  %3177 = vmatprep.subr.mxu0 0.0
  %3178 = vmatpush1.msra.mxu0 0.0
  %3179 = vmatprep.subr.mxu0 0.0
  %3180 = vmatpush1.msra.mxu0 0.0
  %3181 = vmatprep.subr.mxu0 0.0
  %3182 = vmatpush1.msra.mxu0 0.0
  %3183 = vmatprep.subr.mxu0 0.0
  %3184 = vmatpush1.msra.mxu0 0.0
  %3185 = vmatprep.subr.mxu0 0.0
  %3186 = vmatpush1.msra.mxu0 0.0
  %3187 = vmatprep.subr.mxu0 0.0
  %3188 = vmatpush1.msra.mxu0 0.0
  %3189 = vmatprep.subr.mxu0 0.0
  %3190 = vmatpush1.msra.mxu0 0.0
  %3191 = vmatprep.subr.mxu0 0.0
  %3192 = vmatpush1.msra.mxu0 0.0
  %3193 = vmatprep.subr.mxu0 0.0
  %3194 = vmatpush1.msra.mxu0 0.0
  %3195 = vmatprep.subr.mxu0 0.0
  %3196 = vmatpush1.msra.mxu0 0.0
  %3197 = vmatprep.subr.mxu0 %v3014
  %3198 = vmatpush1.msra.mxu0 %v3011
  %3199 = vmatprep.subr.mxu0 %v2989
  %3200 = vmatpush1.msra.mxu0 %v2988
  %3201 = vmatprep.subr.mxu0 %v2982
  %3202 = vmatpush1.msra.mxu0 %v2981
  %3203 = vmatprep.subr.mxu0 %v2975
  %3204 = vmatpush1.msra.mxu0 %v2974
  %3205 = vmatprep.subr.mxu0 0.0
  %3206 = vmatpush2.msra.mxu0 0.0
  %3207 = vmatprep.subr.mxu0 0.0
  %3208 = vmatpush2.msra.mxu0 0.0
  %3209 = vmatprep.subr.mxu0 0.0
  %3210 = vmatpush2.msra.mxu0 0.0
  %3211 = vmatprep.subr.mxu0 0.0
  %3212 = vmatpush2.msra.mxu0 0.0
  %3213 = vmatprep.subr.mxu0 0.0
  %3214 = vmatpush2.msra.mxu0 0.0
  %3215 = vmatprep.subr.mxu0 0.0
  %3216 = vmatpush2.msra.mxu0 0.0
  %3217 = vmatprep.subr.mxu0 0.0
  %3218 = vmatpush2.msra.mxu0 0.0
  %3219 = vmatprep.subr.mxu0 0.0
  %3220 = vmatpush2.msra.mxu0 0.0
  %3221 = vmatprep.subr.mxu0 0.0
  %3222 = vmatpush2.msra.mxu0 0.0
  %3223 = vmatprep.subr.mxu0 0.0
  %3224 = vmatpush2.msra.mxu0 0.0
  %3225 = vmatprep.subr.mxu0 0.0
  %3226 = vmatpush2.msra.mxu0 0.0
  %3227 = vmatprep.subr.mxu0 0.0
  %3228 = vmatpush2.msra.mxu0 0.0
  %3229 = vmatprep.subr.mxu0 0.0
  %3230 = vmatpush2.msra.mxu0 0.0
  %3231 = vmatprep.subr.mxu0 0.0
  %3232 = vmatpush2.msra.mxu0 0.0
  %3233 = vmatprep.subr.mxu0 0.0
  %3234 = vmatpush2.msra.mxu0 0.0
  %3235 = vmatprep.subr.mxu0 0.0
  %3236 = vmatpush2.msra.mxu0 0.0
  %3237 = vmatprep.mubr.f32.mxu0 0.0
  %3238 = vmatmul.mubr.f32.gmra.mxu0 %v46
  %v3239 = vpop.f32.mrf.mxu0
  %v3240 = vadd.f32 0.0, %v3239
  %v3241 = vpop.f32.mrf.mxu0
  %v3242 = vadd.f32 0.0, %v3241
  %3243 = vmatprep.mubr.f32.mxu0 0.0
  %3244 = vmatmul.mubr.f32.gmra.mxu0 %v49
  %v3245 = vpop.f32.mrf.mxu0
  %v3246 = vadd.f32 0.0, %v3245
  %v3247 = vpop.f32.mrf.mxu0
  %v3248 = vadd.f32 0.0, %v3247
  %3249 = vdwg.mxu0
  %3250 = vmatprep.subr.mxu0 0.0
  %3251 = vmatpush1.msra.mxu0 0.0
  %3252 = vmatprep.subr.mxu0 0.0
  %3253 = vmatpush1.msra.mxu0 0.0
  %3254 = vmatprep.subr.mxu0 0.0
  %3255 = vmatpush1.msra.mxu0 0.0
  %3256 = vmatprep.subr.mxu0 0.0
  %3257 = vmatpush1.msra.mxu0 0.0
  %3258 = vmatprep.subr.mxu0 0.0
  %3259 = vmatpush1.msra.mxu0 0.0
  %3260 = vmatprep.subr.mxu0 0.0
  %3261 = vmatpush1.msra.mxu0 0.0
  %3262 = vmatprep.subr.mxu0 0.0
  %3263 = vmatpush1.msra.mxu0 0.0
  %3264 = vmatprep.subr.mxu0 0.0
  %3265 = vmatpush1.msra.mxu0 0.0
  %3266 = vmatprep.subr.mxu0 0.0
  %3267 = vmatpush1.msra.mxu0 0.0
  %3268 = vmatprep.subr.mxu0 0.0
  %3269 = vmatpush1.msra.mxu0 0.0
  %3270 = vmatprep.subr.mxu0 0.0
  %3271 = vmatpush1.msra.mxu0 0.0
  %3272 = vmatprep.subr.mxu0 0.0
  %3273 = vmatpush1.msra.mxu0 0.0
  %3274 = vmatprep.subr.mxu0 0.0
  %3275 = vmatpush1.msra.mxu0 %v3017
  %3276 = vmatprep.subr.mxu0 0.0
  %3277 = vmatpush1.msra.mxu0 %v2990
  %3278 = vmatprep.subr.mxu0 0.0
  %3279 = vmatpush1.msra.mxu0 %v2983
  %3280 = vmatprep.subr.mxu0 0.0
  %3281 = vmatpush1.msra.mxu0 %v2976
  %3282 = vmatprep.subr.mxu0 0.0
  %3283 = vmatpush2.msra.mxu0 0.0
  %3284 = vmatprep.subr.mxu0 0.0
  %3285 = vmatpush2.msra.mxu0 0.0
  %3286 = vmatprep.subr.mxu0 0.0
  %3287 = vmatpush2.msra.mxu0 0.0
  %3288 = vmatprep.subr.mxu0 0.0
  %3289 = vmatpush2.msra.mxu0 0.0
  %3290 = vmatprep.subr.mxu0 0.0
  %3291 = vmatpush2.msra.mxu0 0.0
  %3292 = vmatprep.subr.mxu0 0.0
  %3293 = vmatpush2.msra.mxu0 0.0
  %3294 = vmatprep.subr.mxu0 0.0
  %3295 = vmatpush2.msra.mxu0 0.0
  %3296 = vmatprep.subr.mxu0 0.0
  %3297 = vmatpush2.msra.mxu0 0.0
  %3298 = vmatprep.subr.mxu0 0.0
  %3299 = vmatpush2.msra.mxu0 0.0
  %3300 = vmatprep.subr.mxu0 0.0
  %3301 = vmatpush2.msra.mxu0 0.0
  %3302 = vmatprep.subr.mxu0 0.0
  %3303 = vmatpush2.msra.mxu0 0.0
  %3304 = vmatprep.subr.mxu0 0.0
  %3305 = vmatpush2.msra.mxu0 0.0
  %3306 = vmatprep.subr.mxu0 0.0
  %3307 = vmatpush2.msra.mxu0 0.0
  %3308 = vmatprep.subr.mxu0 0.0
  %3309 = vmatpush2.msra.mxu0 0.0
  %3310 = vmatprep.subr.mxu0 0.0
  %3311 = vmatpush2.msra.mxu0 0.0
  %3312 = vmatprep.subr.mxu0 0.0
  %3313 = vmatpush2.msra.mxu0 0.0
  %3314 = vmatprep.mubr.f32.mxu0 0.0
  %3315 = vmatmul.mubr.f32.gmra.mxu0 %v46
  %v3316 = vpop.f32.mrf.mxu0
  %v3317 = vadd.f32 0.0, %v3316
  %v3318 = vpop.f32.mrf.mxu0
  %3319 = vmatprep.mubr.f32.mxu0 0.0
  %3320 = vmatmul.mubr.f32.gmra.mxu0 %v49
  %v3321 = vpop.f32.mrf.mxu0
  %v3322 = vadd.f32 0.0, %v3321
  %v3323 = vpop.f32.mrf.mxu0
  %3324 = vdwg.mxu0
  %v3325 = vmax.f32 %v2955, %v3086
  %v3326 = vmax.f32 %v2956, %v3088
  %v3327 = vmax.f32 %v2957, %v3163
  %v3328 = vmax.f32 %v2958, %v3165
  %v3329 = vmax.f32 %v2959, %v3240
  %v3330 = vmax.f32 %v2960, %v3242
  %v3331 = vmax.f32 %v2961, %v3317
  %v3332 = vmax.f32 %v2962, %v3092
  %v3333 = vmax.f32 %v2963, %v3094
  %v3334 = vmax.f32 %v2964, %v3169
  %v3335 = vmax.f32 %v2965, %v3171
  %v3336 = vmax.f32 %v2966, %v3246
  %v3337 = vmax.f32 %v2967, %v3248
  %v3338 = vmax.f32 %v2968, %v3322
  %v3339 = vld [vmem:[%s2] sm:$0xff]
  %v3340 = vld [vmem:[%s2 + $0x8] sm:$0x3]
  %3342 = vset.pattern.permute.xlu0 0
  %3343 = vperm.xlu0 %3342, %v3339
  %v3344 = vpop.permute.xlu0 %3343
  %3347 = vset.pattern.permute.xlu0 0
  %3348 = vperm.xlu0 %3347, %v3340
  %v3349 = vpop.permute.xlu0 %3348
  %v3351 = vadd.f32 %v3325, %v3344
  %v3352 = vadd.f32 %v3326, %v3344
  %v3353 = vadd.f32 %v3327, %v3344
  %v3354 = vadd.f32 %v3328, %v3344
  %v3355 = vadd.f32 %v3329, %v3344
  %v3356 = vadd.f32 %v3330, %v3344
  %v3357 = vadd.f32 %v3331, %v3344
  %v3358 = vadd.f32 %v3332, %v3349
  %v3359 = vadd.f32 %v3333, %v3349
  %v3360 = vadd.f32 %v3334, %v3349
  %v3361 = vadd.f32 %v3335, %v3349
  %v3362 = vadd.f32 %v3336, %v3349
  %v3363 = vadd.f32 %v3337, %v3349
  %v3364 = vadd.f32 %v3338, %v3349
  %v3365 = vmax.f32 %v3351, 0.0
  %v3366 = vmax.f32 %v3352, 0.0
  %v3367 = vmax.f32 %v3353, 0.0
  %v3368 = vmax.f32 %v3354, 0.0
  %v3369 = vmax.f32 %v3355, 0.0
  %v3370 = vmax.f32 %v3356, 0.0
  %v3371 = vmax.f32 %v3357, 0.0
  %v3372 = vmax.f32 %v3358, 0.0
  %v3373 = vmax.f32 %v3359, 0.0
  %v3374 = vmax.f32 %v3360, 0.0
  %v3375 = vmax.f32 %v3361, 0.0
  %v3376 = vmax.f32 %v3362, 0.0
  %v3377 = vmax.f32 %v3363, 0.0
  %v3378 = vmax.f32 %v3364, 0.0
  %3379 = vst [vmem:[%s3] sm:$0xff] %v3365
  %3380 = vst [vmem:[%s3 + $0x8] sm:$0xff] %v3366
  %3381 = vst [vmem:[%s3 + $0x10] sm:$0xff] %v3367
  %3382 = vst [vmem:[%s3 + $0x18] sm:$0xff] %v3368
  %3383 = vst [vmem:[%s3 + $0x20] sm:$0xff] %v3369
  %3384 = vst [vmem:[%s3 + $0x28] sm:$0xff] %v3370
  %vm3385 = vcmask 261120
  %3386 = vst.msk [vmem:[%s3 + $0x30] sm:$0xff] %vm3385, %v3371
  %3387 = vst [vmem:[%s3 + $0x38] sm:$0x3] %v3372
  %3388 = vst [vmem:[%s3 + $0x40] sm:$0x3] %v3373
  %3389 = vst [vmem:[%s3 + $0x48] sm:$0x3] %v3374
  %3390 = vst [vmem:[%s3 + $0x50] sm:$0x3] %v3375
  %3391 = vst [vmem:[%s3 + $0x58] sm:$0x3] %v3376
  %3392 = vst [vmem:[%s3 + $0x60] sm:$0x3] %v3377
  %vm3393 = vcmask 254976
  %3394 = vst.msk [vmem:[%s3 + $0x68] sm:$0x3] %vm3393, %v3378
  // Predicated region
  $region14: #{simplenet_dropout_forward.3} parent=0 // pred_check
    _
  $region15: #{simplenet_dropout_forward.3} parent=0 // pred_check_branch
    %3396 = sbr.rel (0) target = $region17
  $region16: #{simplenet_dropout_forward.3} parent=0 // pred_region
    _
  $region17: #{simplenet_dropout_forward.3} parent=0 // pred_fallthru
    _
  // Predicated region
  $region18: #{simplenet_dropout_forward.3} parent=0 // pred_check
    _
  $region19: #{simplenet_dropout_forward.3} parent=0 // pred_check_branch
    %3398 = sbr.rel (0) target = $region21
  $region20: #{simplenet_dropout_forward.3} parent=0 // pred_region
    _
  $region21: #{simplenet_dropout_forward.3} parent=0 // pred_fallthru
    _

// kernel: simplenet_dropout_forward.4
$region0: #{simplenet_dropout_forward.4}
  #allocation0 [shape = 'u32[]', space=smem, size = 0x4, offset = 0x4, fixed_abs, tag = 'smem constant byte address 0x4 - core index']
  #allocation1 [shape = 'u32[144,128]{1,0:T(1,128)}', space=vmem, size = 0x12000, scoped, tag = 'internal scratch']
  %s0 = inlined_call_operand.vmem [shape: f32[9,250,50], index: 0, kind: input, shape index: {}]
  %s1 = inlined_call_operand.vmem [shape: f32[20,250], index: 1, kind: input, shape index: {}]
  %s2 = inlined_call_operand.vmem [shape: f32[20,1], index: 2, kind: input, shape index: {}]
  %s3 = inlined_call_operand.vmem [shape: f32[20,50], index: 3, kind: output, shape index: {}]
  %s4 = sld [smem:[#allocation0]]
  $region22: #{simplenet_dropout_forward.4} parent=0
    _
  %s6 = ssub.s32 1, %s4
  %s7 = scalar_select 0, %s6, %s4
  // Predicated region
  $region2: #{simplenet_dropout_forward.4} parent=0 // pred_check
    _
  $region3: #{simplenet_dropout_forward.4} parent=0 // pred_check_branch
    %9 = sbr.rel (0) target = $region5
  $region4: #{simplenet_dropout_forward.4} parent=0 // pred_region
    _
  $region5: #{simplenet_dropout_forward.4} parent=0 // pred_fallthru
    _
  // Predicated region
  $region6: #{simplenet_dropout_forward.4} parent=0 // pred_check
    _
  $region7: #{simplenet_dropout_forward.4} parent=0 // pred_check_branch
    %11 = sbr.rel (0) target = $region9
  $region8: #{simplenet_dropout_forward.4} parent=0 // pred_region
    _
  $region9: #{simplenet_dropout_forward.4} parent=0 // pred_fallthru
    _
  // Predicated region
  $region10: #{simplenet_dropout_forward.4} parent=0 // pred_check
    _
  $region11: #{simplenet_dropout_forward.4} parent=0 // pred_check_branch
    %13 = sbr.rel (0) target = $region13
  $region12: #{simplenet_dropout_forward.4} parent=0 // pred_region
    _
  $region13: #{simplenet_dropout_forward.4} parent=0 // pred_fallthru
    _
  %v14 = vld [vmem:[%s1] sm:$0xff]
  %v15 = vld [vmem:[%s1 + $0x8] sm:$0xff]
  %v16 = vld [vmem:[%s1 + $0x10] sm:$0xff]
  %v17 = vld [vmem:[%s1 + $0x18] sm:$0xff]
  %v18 = vld [vmem:[%s1 + $0x20] sm:$0xf]
  %v19 = vld [vmem:[%s1 + $0x28] sm:$0xf]
  %v20 = vld [vmem:[%s0] sm:$0xff]
  %v21 = vld [vmem:[%s0 + $0x8] sm:$0xff]
  %v22 = vld [vmem:[%s0 + $0x10] sm:$0xff]
  %v23 = vld [vmem:[%s0 + $0x18] sm:$0xff]
  %v24 = vld [vmem:[%s0 + $0x20] sm:$0xff]
  %v25 = vld [vmem:[%s0 + $0x28] sm:$0xff]
  %v26 = vld [vmem:[%s0 + $0x30] sm:$0xff]
  %v27 = vld [vmem:[%s0 + $0x38] sm:$0xff]
  %v28 = vld [vmem:[%s0 + $0x40] sm:$0xff]
  %v29 = vld [vmem:[%s0 + $0x48] sm:$0xff]
  %v30 = vld [vmem:[%s0 + $0x50] sm:$0xff]
  %v31 = vld [vmem:[%s0 + $0x58] sm:$0xff]
  %v32 = vld [vmem:[%s0 + $0x60] sm:$0xff]
  %v33 = vld [vmem:[%s0 + $0x68] sm:$0xff]
  %v34 = vld [vmem:[%s0 + $0x70] sm:$0xff]
  %v35 = vld [vmem:[%s0 + $0x78] sm:$0xff]
  %v36 = vld [vmem:[%s0 + $0x80] sm:$0xff]
  %v37 = vld [vmem:[%s0 + $0x88] sm:$0xff]
  %v38 = vld [vmem:[%s0 + $0x90] sm:$0xff]
  %v39 = vld [vmem:[%s0 + $0x98] sm:$0xff]
  %v40 = vld [vmem:[%s0 + $0xa0] sm:$0xff]
  %v41 = vld [vmem:[%s0 + $0xa8] sm:$0xff]
  %v42 = vld [vmem:[%s0 + $0xb0] sm:$0xff]
  %v43 = vld [vmem:[%s0 + $0xb8] sm:$0xff]
  %v44 = vld [vmem:[%s0 + $0xc0] sm:$0xff]
  %v45 = vld [vmem:[%s0 + $0xc8] sm:$0xff]
  %v46 = vld [vmem:[%s0 + $0xd0] sm:$0xff]
  %v47 = vld [vmem:[%s0 + $0xd8] sm:$0xff]
  %v48 = vld [vmem:[%s0 + $0xe0] sm:$0xff]
  %v49 = vld [vmem:[%s0 + $0xe8] sm:$0xff]
  %v50 = vld [vmem:[%s0 + $0xf0] sm:$0xff]
  %v51 = vld [vmem:[%s0 + $0xf8] sm:$0x3]
  %vm52 = vcmask 998400
  %v54 = vsel %vm52, %v15, 0
  %v57 = vsel %vm52, %v17, 0
  %v60 = vsel %vm52, %v19, 0
  %vm62 = vcmask 1041408
  %v64 = vsel %vm62, %v51, 0
  %66 = vmatprep.subr.mxu0 0.0
  %67 = vmatpush1.msra.mxu0 %v35
  %68 = vmatprep.subr.mxu0 0.0
  %69 = vmatpush1.msra.mxu0 %v34
  %70 = vmatprep.subr.mxu0 0.0
  %71 = vmatpush1.msra.mxu0 %v33
  %72 = vmatprep.subr.mxu0 0.0
  %73 = vmatpush1.msra.mxu0 %v32
  %74 = vmatprep.subr.mxu0 0.0
  %75 = vmatpush1.msra.mxu0 %v31
  %76 = vmatprep.subr.mxu0 0.0
  %77 = vmatpush1.msra.mxu0 %v30
  %78 = vmatprep.subr.mxu0 0.0
  %79 = vmatpush1.msra.mxu0 %v29
  %80 = vmatprep.subr.mxu0 0.0
  %81 = vmatpush1.msra.mxu0 %v28
  %82 = vmatprep.subr.mxu0 0.0
  %83 = vmatpush1.msra.mxu0 %v27
  %84 = vmatprep.subr.mxu0 0.0
  %85 = vmatpush1.msra.mxu0 %v26
  %86 = vmatprep.subr.mxu0 0.0
  %87 = vmatpush1.msra.mxu0 %v25
  %88 = vmatprep.subr.mxu0 0.0
  %89 = vmatpush1.msra.mxu0 %v24
  %90 = vmatprep.subr.mxu0 0.0
  %91 = vmatpush1.msra.mxu0 %v23
  %92 = vmatprep.subr.mxu0 0.0
  %93 = vmatpush1.msra.mxu0 %v22
  %94 = vmatprep.subr.mxu0 0.0
  %95 = vmatpush1.msra.mxu0 %v21
  %96 = vmatprep.subr.mxu0 0.0
  %97 = vmatpush1.msra.mxu0 %v20
  %98 = vmatprep.subr.mxu0 0.0
  %99 = vmatpush2.msra.mxu0 %v64
  %100 = vmatprep.subr.mxu0 0.0
  %101 = vmatpush2.msra.mxu0 %v50
  %102 = vmatprep.subr.mxu0 0.0
  %103 = vmatpush2.msra.mxu0 %v49
  %104 = vmatprep.subr.mxu0 0.0
  %105 = vmatpush2.msra.mxu0 %v48
  %106 = vmatprep.subr.mxu0 0.0
  %107 = vmatpush2.msra.mxu0 %v47
  %108 = vmatprep.subr.mxu0 0.0
  %109 = vmatpush2.msra.mxu0 %v46
  %110 = vmatprep.subr.mxu0 0.0
  %111 = vmatpush2.msra.mxu0 %v45
  %112 = vmatprep.subr.mxu0 0.0
  %113 = vmatpush2.msra.mxu0 %v44
  %114 = vmatprep.subr.mxu0 0.0
  %115 = vmatpush2.msra.mxu0 %v43
  %116 = vmatprep.subr.mxu0 0.0
  %117 = vmatpush2.msra.mxu0 %v42
  %118 = vmatprep.subr.mxu0 0.0
  %119 = vmatpush2.msra.mxu0 %v41
  %120 = vmatprep.subr.mxu0 0.0
  %121 = vmatpush2.msra.mxu0 %v40
  %122 = vmatprep.subr.mxu0 0.0
  %123 = vmatpush2.msra.mxu0 %v39
  %124 = vmatprep.subr.mxu0 0.0
  %125 = vmatpush2.msra.mxu0 %v38
  %126 = vmatprep.subr.mxu0 0.0
  %127 = vmatpush2.msra.mxu0 %v37
  %128 = vmatprep.subr.mxu0 0.0
  %129 = vmatpush2.msra.mxu0 %v36
  %130 = vmatprep.mubr.f32.mxu0 %v54
  %131 = vmatmul.mubr.f32.gmra.mxu0 %v14
  %v132 = vpop.f32.mrf.mxu0
  %v133 = vadd.f32 0.0, %v132
  %v134 = vpop.f32.mrf.mxu0
  %135 = vmatprep.mubr.f32.mxu0 %v57
  %136 = vmatmul.mubr.f32.gmra.mxu0 %v16
  %v137 = vpop.f32.mrf.mxu0
  %v138 = vadd.f32 0.0, %v137
  %v139 = vpop.f32.mrf.mxu0
  %140 = vmatprep.mubr.f32.mxu0 %v60
  %141 = vmatmul.mubr.f32.gmra.mxu0 %v18
  %v142 = vpop.f32.mrf.mxu0
  %v143 = vadd.f32 0.0, %v142
  %v144 = vpop.f32.mrf.mxu0
  %145 = vdwg.mxu0
  %s146 = scalar_lea.vmem %s0, 256
  %v147 = vld [vmem:[%s146] sm:$0xff]
  %v148 = vld [vmem:[%s146 + $0x8] sm:$0xff]
  %v149 = vld [vmem:[%s146 + $0x10] sm:$0xff]
  %v150 = vld [vmem:[%s146 + $0x18] sm:$0xff]
  %v151 = vld [vmem:[%s146 + $0x20] sm:$0xff]
  %v152 = vld [vmem:[%s146 + $0x28] sm:$0xff]
  %v153 = vld [vmem:[%s146 + $0x30] sm:$0xff]
  %v154 = vld [vmem:[%s146 + $0x38] sm:$0xff]
  %v155 = vld [vmem:[%s146 + $0x40] sm:$0xff]
  %v156 = vld [vmem:[%s146 + $0x48] sm:$0xff]
  %v157 = vld [vmem:[%s146 + $0x50] sm:$0xff]
  %v158 = vld [vmem:[%s146 + $0x58] sm:$0xff]
  %v159 = vld [vmem:[%s146 + $0x60] sm:$0xff]
  %v160 = vld [vmem:[%s146 + $0x68] sm:$0xff]
  %v161 = vld [vmem:[%s146 + $0x70] sm:$0xff]
  %v162 = vld [vmem:[%s146 + $0x78] sm:$0xff]
  %v163 = vld [vmem:[%s146 + $0x80] sm:$0xff]
  %v164 = vld [vmem:[%s146 + $0x88] sm:$0xff]
  %v165 = vld [vmem:[%s146 + $0x90] sm:$0xff]
  %v166 = vld [vmem:[%s146 + $0x98] sm:$0xff]
  %v167 = vld [vmem:[%s146 + $0xa0] sm:$0xff]
  %v168 = vld [vmem:[%s146 + $0xa8] sm:$0xff]
  %v169 = vld [vmem:[%s146 + $0xb0] sm:$0xff]
  %v170 = vld [vmem:[%s146 + $0xb8] sm:$0xff]
  %v171 = vld [vmem:[%s146 + $0xc0] sm:$0xff]
  %v172 = vld [vmem:[%s146 + $0xc8] sm:$0xff]
  %v173 = vld [vmem:[%s146 + $0xd0] sm:$0xff]
  %v174 = vld [vmem:[%s146 + $0xd8] sm:$0xff]
  %v175 = vld [vmem:[%s146 + $0xe0] sm:$0xff]
  %v176 = vld [vmem:[%s146 + $0xe8] sm:$0xff]
  %v177 = vld [vmem:[%s146 + $0xf0] sm:$0xff]
  %v178 = vld [vmem:[%s146 + $0xf8] sm:$0x3]
  %v180 = vsel %vm62, %v178, 0
  %182 = vmatprep.subr.mxu0 0.0
  %183 = vmatpush1.msra.mxu0 %v162
  %184 = vmatprep.subr.mxu0 0.0
  %185 = vmatpush1.msra.mxu0 %v161
  %186 = vmatprep.subr.mxu0 0.0
  %187 = vmatpush1.msra.mxu0 %v160
  %188 = vmatprep.subr.mxu0 0.0
  %189 = vmatpush1.msra.mxu0 %v159
  %190 = vmatprep.subr.mxu0 0.0
  %191 = vmatpush1.msra.mxu0 %v158
  %192 = vmatprep.subr.mxu0 0.0
  %193 = vmatpush1.msra.mxu0 %v157
  %194 = vmatprep.subr.mxu0 0.0
  %195 = vmatpush1.msra.mxu0 %v156
  %196 = vmatprep.subr.mxu0 0.0
  %197 = vmatpush1.msra.mxu0 %v155
  %198 = vmatprep.subr.mxu0 0.0
  %199 = vmatpush1.msra.mxu0 %v154
  %200 = vmatprep.subr.mxu0 0.0
  %201 = vmatpush1.msra.mxu0 %v153
  %202 = vmatprep.subr.mxu0 0.0
  %203 = vmatpush1.msra.mxu0 %v152
  %204 = vmatprep.subr.mxu0 0.0
  %205 = vmatpush1.msra.mxu0 %v151
  %206 = vmatprep.subr.mxu0 0.0
  %207 = vmatpush1.msra.mxu0 %v150
  %208 = vmatprep.subr.mxu0 0.0
  %209 = vmatpush1.msra.mxu0 %v149
  %210 = vmatprep.subr.mxu0 0.0
  %211 = vmatpush1.msra.mxu0 %v148
  %212 = vmatprep.subr.mxu0 0.0
  %213 = vmatpush1.msra.mxu0 %v147
  %214 = vmatprep.subr.mxu0 0.0
  %215 = vmatpush2.msra.mxu0 %v180
  %216 = vmatprep.subr.mxu0 0.0
  %217 = vmatpush2.msra.mxu0 %v177
  %218 = vmatprep.subr.mxu0 0.0
  %219 = vmatpush2.msra.mxu0 %v176
  %220 = vmatprep.subr.mxu0 0.0
  %221 = vmatpush2.msra.mxu0 %v175
  %222 = vmatprep.subr.mxu0 0.0
  %223 = vmatpush2.msra.mxu0 %v174
  %224 = vmatprep.subr.mxu0 0.0
  %225 = vmatpush2.msra.mxu0 %v173
  %226 = vmatprep.subr.mxu0 0.0
  %227 = vmatpush2.msra.mxu0 %v172
  %228 = vmatprep.subr.mxu0 0.0
  %229 = vmatpush2.msra.mxu0 %v171
  %230 = vmatprep.subr.mxu0 0.0
  %231 = vmatpush2.msra.mxu0 %v170
  %232 = vmatprep.subr.mxu0 0.0
  %233 = vmatpush2.msra.mxu0 %v169
  %234 = vmatprep.subr.mxu0 0.0
  %235 = vmatpush2.msra.mxu0 %v168
  %236 = vmatprep.subr.mxu0 0.0
  %237 = vmatpush2.msra.mxu0 %v167
  %238 = vmatprep.subr.mxu0 0.0
  %239 = vmatpush2.msra.mxu0 %v166
  %240 = vmatprep.subr.mxu0 0.0
  %241 = vmatpush2.msra.mxu0 %v165
  %242 = vmatprep.subr.mxu0 0.0
  %243 = vmatpush2.msra.mxu0 %v164
  %244 = vmatprep.subr.mxu0 0.0
  %245 = vmatpush2.msra.mxu0 %v163
  %246 = vmatprep.mubr.f32.mxu0 %v54
  %247 = vmatmul.mubr.f32.gmra.mxu0 %v14
  %v248 = vpop.f32.mrf.mxu0
  %v249 = vadd.f32 0.0, %v248
  %v250 = vpop.f32.mrf.mxu0
  %251 = vmatprep.mubr.f32.mxu0 %v57
  %252 = vmatmul.mubr.f32.gmra.mxu0 %v16
  %v253 = vpop.f32.mrf.mxu0
  %v254 = vadd.f32 0.0, %v253
  %v255 = vpop.f32.mrf.mxu0
  %256 = vmatprep.mubr.f32.mxu0 %v60
  %257 = vmatmul.mubr.f32.gmra.mxu0 %v18
  %v258 = vpop.f32.mrf.mxu0
  %v259 = vadd.f32 0.0, %v258
  %v260 = vpop.f32.mrf.mxu0
  %261 = vdwg.mxu0
  %v262 = vmax.f32 %v133, %v249
  %v263 = vmax.f32 %v138, %v254
  %v264 = vmax.f32 %v143, %v259
  %s265 = scalar_lea.vmem %s0, 512
  %v266 = vld [vmem:[%s265] sm:$0xff]
  %v267 = vld [vmem:[%s265 + $0x8] sm:$0xff]
  %v268 = vld [vmem:[%s265 + $0x10] sm:$0xff]
  %v269 = vld [vmem:[%s265 + $0x18] sm:$0xff]
  %v270 = vld [vmem:[%s265 + $0x20] sm:$0xff]
  %v271 = vld [vmem:[%s265 + $0x28] sm:$0xff]
  %v272 = vld [vmem:[%s265 + $0x30] sm:$0xff]
  %v273 = vld [vmem:[%s265 + $0x38] sm:$0xff]
  %v274 = vld [vmem:[%s265 + $0x40] sm:$0xff]
  %v275 = vld [vmem:[%s265 + $0x48] sm:$0xff]
  %v276 = vld [vmem:[%s265 + $0x50] sm:$0xff]
  %v277 = vld [vmem:[%s265 + $0x58] sm:$0xff]
  %v278 = vld [vmem:[%s265 + $0x60] sm:$0xff]
  %v279 = vld [vmem:[%s265 + $0x68] sm:$0xff]
  %v280 = vld [vmem:[%s265 + $0x70] sm:$0xff]
  %v281 = vld [vmem:[%s265 + $0x78] sm:$0xff]
  %v282 = vld [vmem:[%s265 + $0x80] sm:$0xff]
  %v283 = vld [vmem:[%s265 + $0x88] sm:$0xff]
  %v284 = vld [vmem:[%s265 + $0x90] sm:$0xff]
  %v285 = vld [vmem:[%s265 + $0x98] sm:$0xff]
  %v286 = vld [vmem:[%s265 + $0xa0] sm:$0xff]
  %v287 = vld [vmem:[%s265 + $0xa8] sm:$0xff]
  %v288 = vld [vmem:[%s265 + $0xb0] sm:$0xff]
  %v289 = vld [vmem:[%s265 + $0xb8] sm:$0xff]
  %v290 = vld [vmem:[%s265 + $0xc0] sm:$0xff]
  %v291 = vld [vmem:[%s265 + $0xc8] sm:$0xff]
  %v292 = vld [vmem:[%s265 + $0xd0] sm:$0xff]
  %v293 = vld [vmem:[%s265 + $0xd8] sm:$0xff]
  %v294 = vld [vmem:[%s265 + $0xe0] sm:$0xff]
  %v295 = vld [vmem:[%s265 + $0xe8] sm:$0xff]
  %v296 = vld [vmem:[%s265 + $0xf0] sm:$0xff]
  %v297 = vld [vmem:[%s265 + $0xf8] sm:$0x3]
  %v299 = vsel %vm62, %v297, 0
  %301 = vmatprep.subr.mxu0 0.0
  %302 = vmatpush1.msra.mxu0 %v281
  %303 = vmatprep.subr.mxu0 0.0
  %304 = vmatpush1.msra.mxu0 %v280
  %305 = vmatprep.subr.mxu0 0.0
  %306 = vmatpush1.msra.mxu0 %v279
  %307 = vmatprep.subr.mxu0 0.0
  %308 = vmatpush1.msra.mxu0 %v278
  %309 = vmatprep.subr.mxu0 0.0
  %310 = vmatpush1.msra.mxu0 %v277
  %311 = vmatprep.subr.mxu0 0.0
  %312 = vmatpush1.msra.mxu0 %v276
  %313 = vmatprep.subr.mxu0 0.0
  %314 = vmatpush1.msra.mxu0 %v275
  %315 = vmatprep.subr.mxu0 0.0
  %316 = vmatpush1.msra.mxu0 %v274
  %317 = vmatprep.subr.mxu0 0.0
  %318 = vmatpush1.msra.mxu0 %v273
  %319 = vmatprep.subr.mxu0 0.0
  %320 = vmatpush1.msra.mxu0 %v272
  %321 = vmatprep.subr.mxu0 0.0
  %322 = vmatpush1.msra.mxu0 %v271
  %323 = vmatprep.subr.mxu0 0.0
  %324 = vmatpush1.msra.mxu0 %v270
  %325 = vmatprep.subr.mxu0 0.0
  %326 = vmatpush1.msra.mxu0 %v269
  %327 = vmatprep.subr.mxu0 0.0
  %328 = vmatpush1.msra.mxu0 %v268
  %329 = vmatprep.subr.mxu0 0.0
  %330 = vmatpush1.msra.mxu0 %v267
  %331 = vmatprep.subr.mxu0 0.0
  %332 = vmatpush1.msra.mxu0 %v266
  %333 = vmatprep.subr.mxu0 0.0
  %334 = vmatpush2.msra.mxu0 %v299
  %335 = vmatprep.subr.mxu0 0.0
  %336 = vmatpush2.msra.mxu0 %v296
  %337 = vmatprep.subr.mxu0 0.0
  %338 = vmatpush2.msra.mxu0 %v295
  %339 = vmatprep.subr.mxu0 0.0
  %340 = vmatpush2.msra.mxu0 %v294
  %341 = vmatprep.subr.mxu0 0.0
  %342 = vmatpush2.msra.mxu0 %v293
  %343 = vmatprep.subr.mxu0 0.0
  %344 = vmatpush2.msra.mxu0 %v292
  %345 = vmatprep.subr.mxu0 0.0
  %346 = vmatpush2.msra.mxu0 %v291
  %347 = vmatprep.subr.mxu0 0.0
  %348 = vmatpush2.msra.mxu0 %v290
  %349 = vmatprep.subr.mxu0 0.0
  %350 = vmatpush2.msra.mxu0 %v289
  %351 = vmatprep.subr.mxu0 0.0
  %352 = vmatpush2.msra.mxu0 %v288
  %353 = vmatprep.subr.mxu0 0.0
  %354 = vmatpush2.msra.mxu0 %v287
  %355 = vmatprep.subr.mxu0 0.0
  %356 = vmatpush2.msra.mxu0 %v286
  %357 = vmatprep.subr.mxu0 0.0
  %358 = vmatpush2.msra.mxu0 %v285
  %359 = vmatprep.subr.mxu0 0.0
  %360 = vmatpush2.msra.mxu0 %v284
  %361 = vmatprep.subr.mxu0 0.0
  %362 = vmatpush2.msra.mxu0 %v283
  %363 = vmatprep.subr.mxu0 0.0
  %364 = vmatpush2.msra.mxu0 %v282
  %365 = vmatprep.mubr.f32.mxu0 %v54
  %366 = vmatmul.mubr.f32.gmra.mxu0 %v14
  %v367 = vpop.f32.mrf.mxu0
  %v368 = vadd.f32 0.0, %v367
  %v369 = vpop.f32.mrf.mxu0
  %370 = vmatprep.mubr.f32.mxu0 %v57
  %371 = vmatmul.mubr.f32.gmra.mxu0 %v16
  %v372 = vpop.f32.mrf.mxu0
  %v373 = vadd.f32 0.0, %v372
  %v374 = vpop.f32.mrf.mxu0
  %375 = vmatprep.mubr.f32.mxu0 %v60
  %376 = vmatmul.mubr.f32.gmra.mxu0 %v18
  %v377 = vpop.f32.mrf.mxu0
  %v378 = vadd.f32 0.0, %v377
  %v379 = vpop.f32.mrf.mxu0
  %380 = vdwg.mxu0
  %v381 = vmax.f32 %v262, %v368
  %v382 = vmax.f32 %v263, %v373
  %v383 = vmax.f32 %v264, %v378
  %s384 = scalar_lea.vmem %s0, 768
  %v385 = vld [vmem:[%s384] sm:$0xff]
  %v386 = vld [vmem:[%s384 + $0x8] sm:$0xff]
  %v387 = vld [vmem:[%s384 + $0x10] sm:$0xff]
  %v388 = vld [vmem:[%s384 + $0x18] sm:$0xff]
  %v389 = vld [vmem:[%s384 + $0x20] sm:$0xff]
  %v390 = vld [vmem:[%s384 + $0x28] sm:$0xff]
  %v391 = vld [vmem:[%s384 + $0x30] sm:$0xff]
  %v392 = vld [vmem:[%s384 + $0x38] sm:$0xff]
  %v393 = vld [vmem:[%s384 + $0x40] sm:$0xff]
  %v394 = vld [vmem:[%s384 + $0x48] sm:$0xff]
  %v395 = vld [vmem:[%s384 + $0x50] sm:$0xff]
  %v396 = vld [vmem:[%s384 + $0x58] sm:$0xff]
  %v397 = vld [vmem:[%s384 + $0x60] sm:$0xff]
  %v398 = vld [vmem:[%s384 + $0x68] sm:$0xff]
  %v399 = vld [vmem:[%s384 + $0x70] sm:$0xff]
  %v400 = vld [vmem:[%s384 + $0x78] sm:$0xff]
  %v401 = vld [vmem:[%s384 + $0x80] sm:$0xff]
  %v402 = vld [vmem:[%s384 + $0x88] sm:$0xff]
  %v403 = vld [vmem:[%s384 + $0x90] sm:$0xff]
  %v404 = vld [vmem:[%s384 + $0x98] sm:$0xff]
  %v405 = vld [vmem:[%s384 + $0xa0] sm:$0xff]
  %v406 = vld [vmem:[%s384 + $0xa8] sm:$0xff]
  %v407 = vld [vmem:[%s384 + $0xb0] sm:$0xff]
  %v408 = vld [vmem:[%s384 + $0xb8] sm:$0xff]
  %v409 = vld [vmem:[%s384 + $0xc0] sm:$0xff]
  %v410 = vld [vmem:[%s384 + $0xc8] sm:$0xff]
  %v411 = vld [vmem:[%s384 + $0xd0] sm:$0xff]
  %v412 = vld [vmem:[%s384 + $0xd8] sm:$0xff]
  %v413 = vld [vmem:[%s384 + $0xe0] sm:$0xff]
  %v414 = vld [vmem:[%s384 + $0xe8] sm:$0xff]
  %v415 = vld [vmem:[%s384 + $0xf0] sm:$0xff]
  %v416 = vld [vmem:[%s384 + $0xf8] sm:$0x3]
  %v418 = vsel %vm62, %v416, 0
  %420 = vmatprep.subr.mxu0 0.0
  %421 = vmatpush1.msra.mxu0 %v400
  %422 = vmatprep.subr.mxu0 0.0
  %423 = vmatpush1.msra.mxu0 %v399
  %424 = vmatprep.subr.mxu0 0.0
  %425 = vmatpush1.msra.mxu0 %v398
  %426 = vmatprep.subr.mxu0 0.0
  %427 = vmatpush1.msra.mxu0 %v397
  %428 = vmatprep.subr.mxu0 0.0
  %429 = vmatpush1.msra.mxu0 %v396
  %430 = vmatprep.subr.mxu0 0.0
  %431 = vmatpush1.msra.mxu0 %v395
  %432 = vmatprep.subr.mxu0 0.0
  %433 = vmatpush1.msra.mxu0 %v394
  %434 = vmatprep.subr.mxu0 0.0
  %435 = vmatpush1.msra.mxu0 %v393
  %436 = vmatprep.subr.mxu0 0.0
  %437 = vmatpush1.msra.mxu0 %v392
  %438 = vmatprep.subr.mxu0 0.0
  %439 = vmatpush1.msra.mxu0 %v391
  %440 = vmatprep.subr.mxu0 0.0
  %441 = vmatpush1.msra.mxu0 %v390
  %442 = vmatprep.subr.mxu0 0.0
  %443 = vmatpush1.msra.mxu0 %v389
  %444 = vmatprep.subr.mxu0 0.0
  %445 = vmatpush1.msra.mxu0 %v388
  %446 = vmatprep.subr.mxu0 0.0
  %447 = vmatpush1.msra.mxu0 %v387
  %448 = vmatprep.subr.mxu0 0.0
  %449 = vmatpush1.msra.mxu0 %v386
  %450 = vmatprep.subr.mxu0 0.0
  %451 = vmatpush1.msra.mxu0 %v385
  %452 = vmatprep.subr.mxu0 0.0
  %453 = vmatpush2.msra.mxu0 %v418
  %454 = vmatprep.subr.mxu0 0.0
  %455 = vmatpush2.msra.mxu0 %v415
  %456 = vmatprep.subr.mxu0 0.0
  %457 = vmatpush2.msra.mxu0 %v414
  %458 = vmatprep.subr.mxu0 0.0
  %459 = vmatpush2.msra.mxu0 %v413
  %460 = vmatprep.subr.mxu0 0.0
  %461 = vmatpush2.msra.mxu0 %v412
  %462 = vmatprep.subr.mxu0 0.0
  %463 = vmatpush2.msra.mxu0 %v411
  %464 = vmatprep.subr.mxu0 0.0
  %465 = vmatpush2.msra.mxu0 %v410
  %466 = vmatprep.subr.mxu0 0.0
  %467 = vmatpush2.msra.mxu0 %v409
  %468 = vmatprep.subr.mxu0 0.0
  %469 = vmatpush2.msra.mxu0 %v408
  %470 = vmatprep.subr.mxu0 0.0
  %471 = vmatpush2.msra.mxu0 %v407
  %472 = vmatprep.subr.mxu0 0.0
  %473 = vmatpush2.msra.mxu0 %v406
  %474 = vmatprep.subr.mxu0 0.0
  %475 = vmatpush2.msra.mxu0 %v405
  %476 = vmatprep.subr.mxu0 0.0
  %477 = vmatpush2.msra.mxu0 %v404
  %478 = vmatprep.subr.mxu0 0.0
  %479 = vmatpush2.msra.mxu0 %v403
  %480 = vmatprep.subr.mxu0 0.0
  %481 = vmatpush2.msra.mxu0 %v402
  %482 = vmatprep.subr.mxu0 0.0
  %483 = vmatpush2.msra.mxu0 %v401
  %484 = vmatprep.mubr.f32.mxu0 %v54
  %485 = vmatmul.mubr.f32.gmra.mxu0 %v14
  %v486 = vpop.f32.mrf.mxu0
  %v487 = vadd.f32 0.0, %v486
  %v488 = vpop.f32.mrf.mxu0
  %489 = vmatprep.mubr.f32.mxu0 %v57
  %490 = vmatmul.mubr.f32.gmra.mxu0 %v16
  %v491 = vpop.f32.mrf.mxu0
  %v492 = vadd.f32 0.0, %v491
  %v493 = vpop.f32.mrf.mxu0
  %494 = vmatprep.mubr.f32.mxu0 %v60
  %495 = vmatmul.mubr.f32.gmra.mxu0 %v18
  %v496 = vpop.f32.mrf.mxu0
  %v497 = vadd.f32 0.0, %v496
  %v498 = vpop.f32.mrf.mxu0
  %499 = vdwg.mxu0
  %v500 = vmax.f32 %v381, %v487
  %v501 = vmax.f32 %v382, %v492
  %v502 = vmax.f32 %v383, %v497
  %s503 = scalar_lea.vmem %s0, 1024
  %v504 = vld [vmem:[%s503] sm:$0xff]
  %v505 = vld [vmem:[%s503 + $0x8] sm:$0xff]
  %v506 = vld [vmem:[%s503 + $0x10] sm:$0xff]
  %v507 = vld [vmem:[%s503 + $0x18] sm:$0xff]
  %v508 = vld [vmem:[%s503 + $0x20] sm:$0xff]
  %v509 = vld [vmem:[%s503 + $0x28] sm:$0xff]
  %v510 = vld [vmem:[%s503 + $0x30] sm:$0xff]
  %v511 = vld [vmem:[%s503 + $0x38] sm:$0xff]
  %v512 = vld [vmem:[%s503 + $0x40] sm:$0xff]
  %v513 = vld [vmem:[%s503 + $0x48] sm:$0xff]
  %v514 = vld [vmem:[%s503 + $0x50] sm:$0xff]
  %v515 = vld [vmem:[%s503 + $0x58] sm:$0xff]
  %v516 = vld [vmem:[%s503 + $0x60] sm:$0xff]
  %v517 = vld [vmem:[%s503 + $0x68] sm:$0xff]
  %v518 = vld [vmem:[%s503 + $0x70] sm:$0xff]
  %v519 = vld [vmem:[%s503 + $0x78] sm:$0xff]
  %v520 = vld [vmem:[%s503 + $0x80] sm:$0xff]
  %v521 = vld [vmem:[%s503 + $0x88] sm:$0xff]
  %v522 = vld [vmem:[%s503 + $0x90] sm:$0xff]
  %v523 = vld [vmem:[%s503 + $0x98] sm:$0xff]
  %v524 = vld [vmem:[%s503 + $0xa0] sm:$0xff]
  %v525 = vld [vmem:[%s503 + $0xa8] sm:$0xff]
  %v526 = vld [vmem:[%s503 + $0xb0] sm:$0xff]
  %v527 = vld [vmem:[%s503 + $0xb8] sm:$0xff]
  %v528 = vld [vmem:[%s503 + $0xc0] sm:$0xff]
  %v529 = vld [vmem:[%s503 + $0xc8] sm:$0xff]
  %v530 = vld [vmem:[%s503 + $0xd0] sm:$0xff]
  %v531 = vld [vmem:[%s503 + $0xd8] sm:$0xff]
  %v532 = vld [vmem:[%s503 + $0xe0] sm:$0xff]
  %v533 = vld [vmem:[%s503 + $0xe8] sm:$0xff]
  %v534 = vld [vmem:[%s503 + $0xf0] sm:$0xff]
  %v535 = vld [vmem:[%s503 + $0xf8] sm:$0x3]
  %v537 = vsel %vm62, %v535, 0
  %539 = vmatprep.subr.mxu0 0.0
  %540 = vmatpush1.msra.mxu0 %v519
  %541 = vmatprep.subr.mxu0 0.0
  %542 = vmatpush1.msra.mxu0 %v518
  %543 = vmatprep.subr.mxu0 0.0
  %544 = vmatpush1.msra.mxu0 %v517
  %545 = vmatprep.subr.mxu0 0.0
  %546 = vmatpush1.msra.mxu0 %v516
  %547 = vmatprep.subr.mxu0 0.0
  %548 = vmatpush1.msra.mxu0 %v515
  %549 = vmatprep.subr.mxu0 0.0
  %550 = vmatpush1.msra.mxu0 %v514
  %551 = vmatprep.subr.mxu0 0.0
  %552 = vmatpush1.msra.mxu0 %v513
  %553 = vmatprep.subr.mxu0 0.0
  %554 = vmatpush1.msra.mxu0 %v512
  %555 = vmatprep.subr.mxu0 0.0
  %556 = vmatpush1.msra.mxu0 %v511
  %557 = vmatprep.subr.mxu0 0.0
  %558 = vmatpush1.msra.mxu0 %v510
  %559 = vmatprep.subr.mxu0 0.0
  %560 = vmatpush1.msra.mxu0 %v509
  %561 = vmatprep.subr.mxu0 0.0
  %562 = vmatpush1.msra.mxu0 %v508
  %563 = vmatprep.subr.mxu0 0.0
  %564 = vmatpush1.msra.mxu0 %v507
  %565 = vmatprep.subr.mxu0 0.0
  %566 = vmatpush1.msra.mxu0 %v506
  %567 = vmatprep.subr.mxu0 0.0
  %568 = vmatpush1.msra.mxu0 %v505
  %569 = vmatprep.subr.mxu0 0.0
  %570 = vmatpush1.msra.mxu0 %v504
  %571 = vmatprep.subr.mxu0 0.0
  %572 = vmatpush2.msra.mxu0 %v537
  %573 = vmatprep.subr.mxu0 0.0
  %574 = vmatpush2.msra.mxu0 %v534
  %575 = vmatprep.subr.mxu0 0.0
  %576 = vmatpush2.msra.mxu0 %v533
  %577 = vmatprep.subr.mxu0 0.0
  %578 = vmatpush2.msra.mxu0 %v532
  %579 = vmatprep.subr.mxu0 0.0
  %580 = vmatpush2.msra.mxu0 %v531
  %581 = vmatprep.subr.mxu0 0.0
  %582 = vmatpush2.msra.mxu0 %v530
  %583 = vmatprep.subr.mxu0 0.0
  %584 = vmatpush2.msra.mxu0 %v529
  %585 = vmatprep.subr.mxu0 0.0
  %586 = vmatpush2.msra.mxu0 %v528
  %587 = vmatprep.subr.mxu0 0.0
  %588 = vmatpush2.msra.mxu0 %v527
  %589 = vmatprep.subr.mxu0 0.0
  %590 = vmatpush2.msra.mxu0 %v526
  %591 = vmatprep.subr.mxu0 0.0
  %592 = vmatpush2.msra.mxu0 %v525
  %593 = vmatprep.subr.mxu0 0.0
  %594 = vmatpush2.msra.mxu0 %v524
  %595 = vmatprep.subr.mxu0 0.0
  %596 = vmatpush2.msra.mxu0 %v523
  %597 = vmatprep.subr.mxu0 0.0
  %598 = vmatpush2.msra.mxu0 %v522
  %599 = vmatprep.subr.mxu0 0.0
  %600 = vmatpush2.msra.mxu0 %v521
  %601 = vmatprep.subr.mxu0 0.0
  %602 = vmatpush2.msra.mxu0 %v520
  %603 = vmatprep.mubr.f32.mxu0 %v54
  %604 = vmatmul.mubr.f32.gmra.mxu0 %v14
  %v605 = vpop.f32.mrf.mxu0
  %v606 = vadd.f32 0.0, %v605
  %v607 = vpop.f32.mrf.mxu0
  %608 = vmatprep.mubr.f32.mxu0 %v57
  %609 = vmatmul.mubr.f32.gmra.mxu0 %v16
  %v610 = vpop.f32.mrf.mxu0
  %v611 = vadd.f32 0.0, %v610
  %v612 = vpop.f32.mrf.mxu0
  %613 = vmatprep.mubr.f32.mxu0 %v60
  %614 = vmatmul.mubr.f32.gmra.mxu0 %v18
  %v615 = vpop.f32.mrf.mxu0
  %v616 = vadd.f32 0.0, %v615
  %v617 = vpop.f32.mrf.mxu0
  %618 = vdwg.mxu0
  %v619 = vmax.f32 %v500, %v606
  %v620 = vmax.f32 %v501, %v611
  %v621 = vmax.f32 %v502, %v616
  %s622 = scalar_lea.vmem %s0, 1280
  %v623 = vld [vmem:[%s622] sm:$0xff]
  %v624 = vld [vmem:[%s622 + $0x8] sm:$0xff]
  %v625 = vld [vmem:[%s622 + $0x10] sm:$0xff]
  %v626 = vld [vmem:[%s622 + $0x18] sm:$0xff]
  %v627 = vld [vmem:[%s622 + $0x20] sm:$0xff]
  %v628 = vld [vmem:[%s622 + $0x28] sm:$0xff]
  %v629 = vld [vmem:[%s622 + $0x30] sm:$0xff]
  %v630 = vld [vmem:[%s622 + $0x38] sm:$0xff]
  %v631 = vld [vmem:[%s622 + $0x40] sm:$0xff]
  %v632 = vld [vmem:[%s622 + $0x48] sm:$0xff]
  %v633 = vld [vmem:[%s622 + $0x50] sm:$0xff]
  %v634 = vld [vmem:[%s622 + $0x58] sm:$0xff]
  %v635 = vld [vmem:[%s622 + $0x60] sm:$0xff]
  %v636 = vld [vmem:[%s622 + $0x68] sm:$0xff]
  %v637 = vld [vmem:[%s622 + $0x70] sm:$0xff]
  %v638 = vld [vmem:[%s622 + $0x78] sm:$0xff]
  %v639 = vld [vmem:[%s622 + $0x80] sm:$0xff]
  %v640 = vld [vmem:[%s622 + $0x88] sm:$0xff]
  %v641 = vld [vmem:[%s622 + $0x90] sm:$0xff]
  %v642 = vld [vmem:[%s622 + $0x98] sm:$0xff]
  %v643 = vld [vmem:[%s622 + $0xa0] sm:$0xff]
  %v644 = vld [vmem:[%s622 + $0xa8] sm:$0xff]
  %v645 = vld [vmem:[%s622 + $0xb0] sm:$0xff]
  %v646 = vld [vmem:[%s622 + $0xb8] sm:$0xff]
  %v647 = vld [vmem:[%s622 + $0xc0] sm:$0xff]
  %v648 = vld [vmem:[%s622 + $0xc8] sm:$0xff]
  %v649 = vld [vmem:[%s622 + $0xd0] sm:$0xff]
  %v650 = vld [vmem:[%s622 + $0xd8] sm:$0xff]
  %v651 = vld [vmem:[%s622 + $0xe0] sm:$0xff]
  %v652 = vld [vmem:[%s622 + $0xe8] sm:$0xff]
  %v653 = vld [vmem:[%s622 + $0xf0] sm:$0xff]
  %v654 = vld [vmem:[%s622 + $0xf8] sm:$0x3]
  %v656 = vsel %vm62, %v654, 0
  %658 = vmatprep.subr.mxu0 0.0
  %659 = vmatpush1.msra.mxu0 %v638
  %660 = vmatprep.subr.mxu0 0.0
  %661 = vmatpush1.msra.mxu0 %v637
  %662 = vmatprep.subr.mxu0 0.0
  %663 = vmatpush1.msra.mxu0 %v636
  %664 = vmatprep.subr.mxu0 0.0
  %665 = vmatpush1.msra.mxu0 %v635
  %666 = vmatprep.subr.mxu0 0.0
  %667 = vmatpush1.msra.mxu0 %v634
  %668 = vmatprep.subr.mxu0 0.0
  %669 = vmatpush1.msra.mxu0 %v633
  %670 = vmatprep.subr.mxu0 0.0
  %671 = vmatpush1.msra.mxu0 %v632
  %672 = vmatprep.subr.mxu0 0.0
  %673 = vmatpush1.msra.mxu0 %v631
  %674 = vmatprep.subr.mxu0 0.0
  %675 = vmatpush1.msra.mxu0 %v630
  %676 = vmatprep.subr.mxu0 0.0
  %677 = vmatpush1.msra.mxu0 %v629
  %678 = vmatprep.subr.mxu0 0.0
  %679 = vmatpush1.msra.mxu0 %v628
  %680 = vmatprep.subr.mxu0 0.0
  %681 = vmatpush1.msra.mxu0 %v627
  %682 = vmatprep.subr.mxu0 0.0
  %683 = vmatpush1.msra.mxu0 %v626
  %684 = vmatprep.subr.mxu0 0.0
  %685 = vmatpush1.msra.mxu0 %v625
  %686 = vmatprep.subr.mxu0 0.0
  %687 = vmatpush1.msra.mxu0 %v624
  %688 = vmatprep.subr.mxu0 0.0
  %689 = vmatpush1.msra.mxu0 %v623
  %690 = vmatprep.subr.mxu0 0.0
  %691 = vmatpush2.msra.mxu0 %v656
  %692 = vmatprep.subr.mxu0 0.0
  %693 = vmatpush2.msra.mxu0 %v653
  %694 = vmatprep.subr.mxu0 0.0
  %695 = vmatpush2.msra.mxu0 %v652
  %696 = vmatprep.subr.mxu0 0.0
  %697 = vmatpush2.msra.mxu0 %v651
  %698 = vmatprep.subr.mxu0 0.0
  %699 = vmatpush2.msra.mxu0 %v650
  %700 = vmatprep.subr.mxu0 0.0
  %701 = vmatpush2.msra.mxu0 %v649
  %702 = vmatprep.subr.mxu0 0.0
  %703 = vmatpush2.msra.mxu0 %v648
  %704 = vmatprep.subr.mxu0 0.0
  %705 = vmatpush2.msra.mxu0 %v647
  %706 = vmatprep.subr.mxu0 0.0
  %707 = vmatpush2.msra.mxu0 %v646
  %708 = vmatprep.subr.mxu0 0.0
  %709 = vmatpush2.msra.mxu0 %v645
  %710 = vmatprep.subr.mxu0 0.0
  %711 = vmatpush2.msra.mxu0 %v644
  %712 = vmatprep.subr.mxu0 0.0
  %713 = vmatpush2.msra.mxu0 %v643
  %714 = vmatprep.subr.mxu0 0.0
  %715 = vmatpush2.msra.mxu0 %v642
  %716 = vmatprep.subr.mxu0 0.0
  %717 = vmatpush2.msra.mxu0 %v641
  %718 = vmatprep.subr.mxu0 0.0
  %719 = vmatpush2.msra.mxu0 %v640
  %720 = vmatprep.subr.mxu0 0.0
  %721 = vmatpush2.msra.mxu0 %v639
  %722 = vmatprep.mubr.f32.mxu0 %v54
  %723 = vmatmul.mubr.f32.gmra.mxu0 %v14
  %v724 = vpop.f32.mrf.mxu0
  %v725 = vadd.f32 0.0, %v724
  %v726 = vpop.f32.mrf.mxu0
  %727 = vmatprep.mubr.f32.mxu0 %v57
  %728 = vmatmul.mubr.f32.gmra.mxu0 %v16
  %v729 = vpop.f32.mrf.mxu0
  %v730 = vadd.f32 0.0, %v729
  %v731 = vpop.f32.mrf.mxu0
  %732 = vmatprep.mubr.f32.mxu0 %v60
  %733 = vmatmul.mubr.f32.gmra.mxu0 %v18
  %v734 = vpop.f32.mrf.mxu0
  %v735 = vadd.f32 0.0, %v734
  %v736 = vpop.f32.mrf.mxu0
  %737 = vdwg.mxu0
  %v738 = vmax.f32 %v619, %v725
  %v739 = vmax.f32 %v620, %v730
  %v740 = vmax.f32 %v621, %v735
  %s741 = scalar_lea.vmem %s0, 1536
  %v742 = vld [vmem:[%s741] sm:$0xff]
  %v743 = vld [vmem:[%s741 + $0x8] sm:$0xff]
  %v744 = vld [vmem:[%s741 + $0x10] sm:$0xff]
  %v745 = vld [vmem:[%s741 + $0x18] sm:$0xff]
  %v746 = vld [vmem:[%s741 + $0x20] sm:$0xff]
  %v747 = vld [vmem:[%s741 + $0x28] sm:$0xff]
  %v748 = vld [vmem:[%s741 + $0x30] sm:$0xff]
  %v749 = vld [vmem:[%s741 + $0x38] sm:$0xff]
  %v750 = vld [vmem:[%s741 + $0x40] sm:$0xff]
  %v751 = vld [vmem:[%s741 + $0x48] sm:$0xff]
  %v752 = vld [vmem:[%s741 + $0x50] sm:$0xff]
  %v753 = vld [vmem:[%s741 + $0x58] sm:$0xff]
  %v754 = vld [vmem:[%s741 + $0x60] sm:$0xff]
  %v755 = vld [vmem:[%s741 + $0x68] sm:$0xff]
  %v756 = vld [vmem:[%s741 + $0x70] sm:$0xff]
  %v757 = vld [vmem:[%s741 + $0x78] sm:$0xff]
  %v758 = vld [vmem:[%s741 + $0x80] sm:$0xff]
  %v759 = vld [vmem:[%s741 + $0x88] sm:$0xff]
  %v760 = vld [vmem:[%s741 + $0x90] sm:$0xff]
  %v761 = vld [vmem:[%s741 + $0x98] sm:$0xff]
  %v762 = vld [vmem:[%s741 + $0xa0] sm:$0xff]
  %v763 = vld [vmem:[%s741 + $0xa8] sm:$0xff]
  %v764 = vld [vmem:[%s741 + $0xb0] sm:$0xff]
  %v765 = vld [vmem:[%s741 + $0xb8] sm:$0xff]
  %v766 = vld [vmem:[%s741 + $0xc0] sm:$0xff]
  %v767 = vld [vmem:[%s741 + $0xc8] sm:$0xff]
  %v768 = vld [vmem:[%s741 + $0xd0] sm:$0xff]
  %v769 = vld [vmem:[%s741 + $0xd8] sm:$0xff]
  %v770 = vld [vmem:[%s741 + $0xe0] sm:$0xff]
  %v771 = vld [vmem:[%s741 + $0xe8] sm:$0xff]
  %v772 = vld [vmem:[%s741 + $0xf0] sm:$0xff]
  %v773 = vld [vmem:[%s741 + $0xf8] sm:$0x3]
  %v775 = vsel %vm62, %v773, 0
  %777 = vmatprep.subr.mxu0 0.0
  %778 = vmatpush1.msra.mxu0 %v757
  %779 = vmatprep.subr.mxu0 0.0
  %780 = vmatpush1.msra.mxu0 %v756
  %781 = vmatprep.subr.mxu0 0.0
  %782 = vmatpush1.msra.mxu0 %v755
  %783 = vmatprep.subr.mxu0 0.0
  %784 = vmatpush1.msra.mxu0 %v754
  %785 = vmatprep.subr.mxu0 0.0
  %786 = vmatpush1.msra.mxu0 %v753
  %787 = vmatprep.subr.mxu0 0.0
  %788 = vmatpush1.msra.mxu0 %v752
  %789 = vmatprep.subr.mxu0 0.0
  %790 = vmatpush1.msra.mxu0 %v751
  %791 = vmatprep.subr.mxu0 0.0
  %792 = vmatpush1.msra.mxu0 %v750
  %793 = vmatprep.subr.mxu0 0.0
  %794 = vmatpush1.msra.mxu0 %v749
  %795 = vmatprep.subr.mxu0 0.0
  %796 = vmatpush1.msra.mxu0 %v748
  %797 = vmatprep.subr.mxu0 0.0
  %798 = vmatpush1.msra.mxu0 %v747
  %799 = vmatprep.subr.mxu0 0.0
  %800 = vmatpush1.msra.mxu0 %v746
  %801 = vmatprep.subr.mxu0 0.0
  %802 = vmatpush1.msra.mxu0 %v745
  %803 = vmatprep.subr.mxu0 0.0
  %804 = vmatpush1.msra.mxu0 %v744
  %805 = vmatprep.subr.mxu0 0.0
  %806 = vmatpush1.msra.mxu0 %v743
  %807 = vmatprep.subr.mxu0 0.0
  %808 = vmatpush1.msra.mxu0 %v742
  %809 = vmatprep.subr.mxu0 0.0
  %810 = vmatpush2.msra.mxu0 %v775
  %811 = vmatprep.subr.mxu0 0.0
  %812 = vmatpush2.msra.mxu0 %v772
  %813 = vmatprep.subr.mxu0 0.0
  %814 = vmatpush2.msra.mxu0 %v771
  %815 = vmatprep.subr.mxu0 0.0
  %816 = vmatpush2.msra.mxu0 %v770
  %817 = vmatprep.subr.mxu0 0.0
  %818 = vmatpush2.msra.mxu0 %v769
  %819 = vmatprep.subr.mxu0 0.0
  %820 = vmatpush2.msra.mxu0 %v768
  %821 = vmatprep.subr.mxu0 0.0
  %822 = vmatpush2.msra.mxu0 %v767
  %823 = vmatprep.subr.mxu0 0.0
  %824 = vmatpush2.msra.mxu0 %v766
  %825 = vmatprep.subr.mxu0 0.0
  %826 = vmatpush2.msra.mxu0 %v765
  %827 = vmatprep.subr.mxu0 0.0
  %828 = vmatpush2.msra.mxu0 %v764
  %829 = vmatprep.subr.mxu0 0.0
  %830 = vmatpush2.msra.mxu0 %v763
  %831 = vmatprep.subr.mxu0 0.0
  %832 = vmatpush2.msra.mxu0 %v762
  %833 = vmatprep.subr.mxu0 0.0
  %834 = vmatpush2.msra.mxu0 %v761
  %835 = vmatprep.subr.mxu0 0.0
  %836 = vmatpush2.msra.mxu0 %v760
  %837 = vmatprep.subr.mxu0 0.0
  %838 = vmatpush2.msra.mxu0 %v759
  %839 = vmatprep.subr.mxu0 0.0
  %840 = vmatpush2.msra.mxu0 %v758
  %841 = vmatprep.mubr.f32.mxu0 %v54
  %842 = vmatmul.mubr.f32.gmra.mxu0 %v14
  %v843 = vpop.f32.mrf.mxu0
  %v844 = vadd.f32 0.0, %v843
  %v845 = vpop.f32.mrf.mxu0
  %846 = vmatprep.mubr.f32.mxu0 %v57
  %847 = vmatmul.mubr.f32.gmra.mxu0 %v16
  %v848 = vpop.f32.mrf.mxu0
  %v849 = vadd.f32 0.0, %v848
  %v850 = vpop.f32.mrf.mxu0
  %851 = vmatprep.mubr.f32.mxu0 %v60
  %852 = vmatmul.mubr.f32.gmra.mxu0 %v18
  %v853 = vpop.f32.mrf.mxu0
  %v854 = vadd.f32 0.0, %v853
  %v855 = vpop.f32.mrf.mxu0
  %856 = vdwg.mxu0
  %v857 = vmax.f32 %v738, %v844
  %v858 = vmax.f32 %v739, %v849
  %v859 = vmax.f32 %v740, %v854
  %s860 = scalar_lea.vmem %s0, 1792
  %v861 = vld [vmem:[%s860] sm:$0xff]
  %v862 = vld [vmem:[%s860 + $0x8] sm:$0xff]
  %v863 = vld [vmem:[%s860 + $0x10] sm:$0xff]
  %v864 = vld [vmem:[%s860 + $0x18] sm:$0xff]
  %v865 = vld [vmem:[%s860 + $0x20] sm:$0xff]
  %v866 = vld [vmem:[%s860 + $0x28] sm:$0xff]
  %v867 = vld [vmem:[%s860 + $0x30] sm:$0xff]
  %v868 = vld [vmem:[%s860 + $0x38] sm:$0xff]
  %v869 = vld [vmem:[%s860 + $0x40] sm:$0xff]
  %v870 = vld [vmem:[%s860 + $0x48] sm:$0xff]
  %v871 = vld [vmem:[%s860 + $0x50] sm:$0xff]
  %v872 = vld [vmem:[%s860 + $0x58] sm:$0xff]
  %v873 = vld [vmem:[%s860 + $0x60] sm:$0xff]
  %v874 = vld [vmem:[%s860 + $0x68] sm:$0xff]
  %v875 = vld [vmem:[%s860 + $0x70] sm:$0xff]
  %v876 = vld [vmem:[%s860 + $0x78] sm:$0xff]
  %v877 = vld [vmem:[%s860 + $0x80] sm:$0xff]
  %v878 = vld [vmem:[%s860 + $0x88] sm:$0xff]
  %v879 = vld [vmem:[%s860 + $0x90] sm:$0xff]
  %v880 = vld [vmem:[%s860 + $0x98] sm:$0xff]
  %v881 = vld [vmem:[%s860 + $0xa0] sm:$0xff]
  %v882 = vld [vmem:[%s860 + $0xa8] sm:$0xff]
  %v883 = vld [vmem:[%s860 + $0xb0] sm:$0xff]
  %v884 = vld [vmem:[%s860 + $0xb8] sm:$0xff]
  %v885 = vld [vmem:[%s860 + $0xc0] sm:$0xff]
  %v886 = vld [vmem:[%s860 + $0xc8] sm:$0xff]
  %v887 = vld [vmem:[%s860 + $0xd0] sm:$0xff]
  %v888 = vld [vmem:[%s860 + $0xd8] sm:$0xff]
  %v889 = vld [vmem:[%s860 + $0xe0] sm:$0xff]
  %v890 = vld [vmem:[%s860 + $0xe8] sm:$0xff]
  %v891 = vld [vmem:[%s860 + $0xf0] sm:$0xff]
  %v892 = vld [vmem:[%s860 + $0xf8] sm:$0x3]
  %v894 = vsel %vm62, %v892, 0
  %896 = vmatprep.subr.mxu0 0.0
  %897 = vmatpush1.msra.mxu0 %v876
  %898 = vmatprep.subr.mxu0 0.0
  %899 = vmatpush1.msra.mxu0 %v875
  %900 = vmatprep.subr.mxu0 0.0
  %901 = vmatpush1.msra.mxu0 %v874
  %902 = vmatprep.subr.mxu0 0.0
  %903 = vmatpush1.msra.mxu0 %v873
  %904 = vmatprep.subr.mxu0 0.0
  %905 = vmatpush1.msra.mxu0 %v872
  %906 = vmatprep.subr.mxu0 0.0
  %907 = vmatpush1.msra.mxu0 %v871
  %908 = vmatprep.subr.mxu0 0.0
  %909 = vmatpush1.msra.mxu0 %v870
  %910 = vmatprep.subr.mxu0 0.0
  %911 = vmatpush1.msra.mxu0 %v869
  %912 = vmatprep.subr.mxu0 0.0
  %913 = vmatpush1.msra.mxu0 %v868
  %914 = vmatprep.subr.mxu0 0.0
  %915 = vmatpush1.msra.mxu0 %v867
  %916 = vmatprep.subr.mxu0 0.0
  %917 = vmatpush1.msra.mxu0 %v866
  %918 = vmatprep.subr.mxu0 0.0
  %919 = vmatpush1.msra.mxu0 %v865
  %920 = vmatprep.subr.mxu0 0.0
  %921 = vmatpush1.msra.mxu0 %v864
  %922 = vmatprep.subr.mxu0 0.0
  %923 = vmatpush1.msra.mxu0 %v863
  %924 = vmatprep.subr.mxu0 0.0
  %925 = vmatpush1.msra.mxu0 %v862
  %926 = vmatprep.subr.mxu0 0.0
  %927 = vmatpush1.msra.mxu0 %v861
  %928 = vmatprep.subr.mxu0 0.0
  %929 = vmatpush2.msra.mxu0 %v894
  %930 = vmatprep.subr.mxu0 0.0
  %931 = vmatpush2.msra.mxu0 %v891
  %932 = vmatprep.subr.mxu0 0.0
  %933 = vmatpush2.msra.mxu0 %v890
  %934 = vmatprep.subr.mxu0 0.0
  %935 = vmatpush2.msra.mxu0 %v889
  %936 = vmatprep.subr.mxu0 0.0
  %937 = vmatpush2.msra.mxu0 %v888
  %938 = vmatprep.subr.mxu0 0.0
  %939 = vmatpush2.msra.mxu0 %v887
  %940 = vmatprep.subr.mxu0 0.0
  %941 = vmatpush2.msra.mxu0 %v886
  %942 = vmatprep.subr.mxu0 0.0
  %943 = vmatpush2.msra.mxu0 %v885
  %944 = vmatprep.subr.mxu0 0.0
  %945 = vmatpush2.msra.mxu0 %v884
  %946 = vmatprep.subr.mxu0 0.0
  %947 = vmatpush2.msra.mxu0 %v883
  %948 = vmatprep.subr.mxu0 0.0
  %949 = vmatpush2.msra.mxu0 %v882
  %950 = vmatprep.subr.mxu0 0.0
  %951 = vmatpush2.msra.mxu0 %v881
  %952 = vmatprep.subr.mxu0 0.0
  %953 = vmatpush2.msra.mxu0 %v880
  %954 = vmatprep.subr.mxu0 0.0
  %955 = vmatpush2.msra.mxu0 %v879
  %956 = vmatprep.subr.mxu0 0.0
  %957 = vmatpush2.msra.mxu0 %v878
  %958 = vmatprep.subr.mxu0 0.0
  %959 = vmatpush2.msra.mxu0 %v877
  %960 = vmatprep.mubr.f32.mxu0 %v54
  %961 = vmatmul.mubr.f32.gmra.mxu0 %v14
  %v962 = vpop.f32.mrf.mxu0
  %v963 = vadd.f32 0.0, %v962
  %v964 = vpop.f32.mrf.mxu0
  %965 = vmatprep.mubr.f32.mxu0 %v57
  %966 = vmatmul.mubr.f32.gmra.mxu0 %v16
  %v967 = vpop.f32.mrf.mxu0
  %v968 = vadd.f32 0.0, %v967
  %v969 = vpop.f32.mrf.mxu0
  %970 = vmatprep.mubr.f32.mxu0 %v60
  %971 = vmatmul.mubr.f32.gmra.mxu0 %v18
  %v972 = vpop.f32.mrf.mxu0
  %v973 = vadd.f32 0.0, %v972
  %v974 = vpop.f32.mrf.mxu0
  %975 = vdwg.mxu0
  %v976 = vmax.f32 %v857, %v963
  %v977 = vmax.f32 %v858, %v968
  %v978 = vmax.f32 %v859, %v973
  %s979 = scalar_lea.vmem %s0, 2048
  %v980 = vld [vmem:[%s979] sm:$0xff]
  %v981 = vld [vmem:[%s979 + $0x8] sm:$0xff]
  %v982 = vld [vmem:[%s979 + $0x10] sm:$0xff]
  %v983 = vld [vmem:[%s979 + $0x18] sm:$0xff]
  %v984 = vld [vmem:[%s979 + $0x20] sm:$0xff]
  %v985 = vld [vmem:[%s979 + $0x28] sm:$0xff]
  %v986 = vld [vmem:[%s979 + $0x30] sm:$0xff]
  %v987 = vld [vmem:[%s979 + $0x38] sm:$0xff]
  %v988 = vld [vmem:[%s979 + $0x40] sm:$0xff]
  %v989 = vld [vmem:[%s979 + $0x48] sm:$0xff]
  %v990 = vld [vmem:[%s979 + $0x50] sm:$0xff]
  %v991 = vld [vmem:[%s979 + $0x58] sm:$0xff]
  %v992 = vld [vmem:[%s979 + $0x60] sm:$0xff]
  %v993 = vld [vmem:[%s979 + $0x68] sm:$0xff]
  %v994 = vld [vmem:[%s979 + $0x70] sm:$0xff]
  %v995 = vld [vmem:[%s979 + $0x78] sm:$0xff]
  %v996 = vld [vmem:[%s979 + $0x80] sm:$0xff]
  %v997 = vld [vmem:[%s979 + $0x88] sm:$0xff]
  %v998 = vld [vmem:[%s979 + $0x90] sm:$0xff]
  %v999 = vld [vmem:[%s979 + $0x98] sm:$0xff]
  %v1000 = vld [vmem:[%s979 + $0xa0] sm:$0xff]
  %v1001 = vld [vmem:[%s979 + $0xa8] sm:$0xff]
  %v1002 = vld [vmem:[%s979 + $0xb0] sm:$0xff]
  %v1003 = vld [vmem:[%s979 + $0xb8] sm:$0xff]
  %v1004 = vld [vmem:[%s979 + $0xc0] sm:$0xff]
  %v1005 = vld [vmem:[%s979 + $0xc8] sm:$0xff]
  %v1006 = vld [vmem:[%s979 + $0xd0] sm:$0xff]
  %v1007 = vld [vmem:[%s979 + $0xd8] sm:$0xff]
  %v1008 = vld [vmem:[%s979 + $0xe0] sm:$0xff]
  %v1009 = vld [vmem:[%s979 + $0xe8] sm:$0xff]
  %v1010 = vld [vmem:[%s979 + $0xf0] sm:$0xff]
  %v1011 = vld [vmem:[%s979 + $0xf8] sm:$0x3]
  %v1013 = vsel %vm62, %v1011, 0
  %1015 = vmatprep.subr.mxu0 0.0
  %1016 = vmatpush1.msra.mxu0 %v995
  %1017 = vmatprep.subr.mxu0 0.0
  %1018 = vmatpush1.msra.mxu0 %v994
  %1019 = vmatprep.subr.mxu0 0.0
  %1020 = vmatpush1.msra.mxu0 %v993
  %1021 = vmatprep.subr.mxu0 0.0
  %1022 = vmatpush1.msra.mxu0 %v992
  %1023 = vmatprep.subr.mxu0 0.0
  %1024 = vmatpush1.msra.mxu0 %v991
  %1025 = vmatprep.subr.mxu0 0.0
  %1026 = vmatpush1.msra.mxu0 %v990
  %1027 = vmatprep.subr.mxu0 0.0
  %1028 = vmatpush1.msra.mxu0 %v989
  %1029 = vmatprep.subr.mxu0 0.0
  %1030 = vmatpush1.msra.mxu0 %v988
  %1031 = vmatprep.subr.mxu0 0.0
  %1032 = vmatpush1.msra.mxu0 %v987
  %1033 = vmatprep.subr.mxu0 0.0
  %1034 = vmatpush1.msra.mxu0 %v986
  %1035 = vmatprep.subr.mxu0 0.0
  %1036 = vmatpush1.msra.mxu0 %v985
  %1037 = vmatprep.subr.mxu0 0.0
  %1038 = vmatpush1.msra.mxu0 %v984
  %1039 = vmatprep.subr.mxu0 0.0
  %1040 = vmatpush1.msra.mxu0 %v983
  %1041 = vmatprep.subr.mxu0 0.0
  %1042 = vmatpush1.msra.mxu0 %v982
  %1043 = vmatprep.subr.mxu0 0.0
  %1044 = vmatpush1.msra.mxu0 %v981
  %1045 = vmatprep.subr.mxu0 0.0
  %1046 = vmatpush1.msra.mxu0 %v980
  %1047 = vmatprep.subr.mxu0 0.0
  %1048 = vmatpush2.msra.mxu0 %v1013
  %1049 = vmatprep.subr.mxu0 0.0
  %1050 = vmatpush2.msra.mxu0 %v1010
  %1051 = vmatprep.subr.mxu0 0.0
  %1052 = vmatpush2.msra.mxu0 %v1009
  %1053 = vmatprep.subr.mxu0 0.0
  %1054 = vmatpush2.msra.mxu0 %v1008
  %1055 = vmatprep.subr.mxu0 0.0
  %1056 = vmatpush2.msra.mxu0 %v1007
  %1057 = vmatprep.subr.mxu0 0.0
  %1058 = vmatpush2.msra.mxu0 %v1006
  %1059 = vmatprep.subr.mxu0 0.0
  %1060 = vmatpush2.msra.mxu0 %v1005
  %1061 = vmatprep.subr.mxu0 0.0
  %1062 = vmatpush2.msra.mxu0 %v1004
  %1063 = vmatprep.subr.mxu0 0.0
  %1064 = vmatpush2.msra.mxu0 %v1003
  %1065 = vmatprep.subr.mxu0 0.0
  %1066 = vmatpush2.msra.mxu0 %v1002
  %1067 = vmatprep.subr.mxu0 0.0
  %1068 = vmatpush2.msra.mxu0 %v1001
  %1069 = vmatprep.subr.mxu0 0.0
  %1070 = vmatpush2.msra.mxu0 %v1000
  %1071 = vmatprep.subr.mxu0 0.0
  %1072 = vmatpush2.msra.mxu0 %v999
  %1073 = vmatprep.subr.mxu0 0.0
  %1074 = vmatpush2.msra.mxu0 %v998
  %1075 = vmatprep.subr.mxu0 0.0
  %1076 = vmatpush2.msra.mxu0 %v997
  %1077 = vmatprep.subr.mxu0 0.0
  %1078 = vmatpush2.msra.mxu0 %v996
  %1079 = vmatprep.mubr.f32.mxu0 %v54
  %1080 = vmatmul.mubr.f32.gmra.mxu0 %v14
  %v1081 = vpop.f32.mrf.mxu0
  %v1082 = vadd.f32 0.0, %v1081
  %v1083 = vpop.f32.mrf.mxu0
  %1084 = vmatprep.mubr.f32.mxu0 %v57
  %1085 = vmatmul.mubr.f32.gmra.mxu0 %v16
  %v1086 = vpop.f32.mrf.mxu0
  %v1087 = vadd.f32 0.0, %v1086
  %v1088 = vpop.f32.mrf.mxu0
  %1089 = vmatprep.mubr.f32.mxu0 %v60
  %1090 = vmatmul.mubr.f32.gmra.mxu0 %v18
  %v1091 = vpop.f32.mrf.mxu0
  %v1092 = vadd.f32 0.0, %v1091
  %v1093 = vpop.f32.mrf.mxu0
  %1094 = vdwg.mxu0
  %v1095 = vmax.f32 %v976, %v1082
  %v1096 = vmax.f32 %v977, %v1087
  %v1097 = vmax.f32 %v978, %v1092
  %v1098 = vld [vmem:[%s2] sm:$0xff]
  %v1099 = vld [vmem:[%s2 + $0x8] sm:$0xff]
  %v1100 = vld [vmem:[%s2 + $0x10] sm:$0xf]
  %1102 = vset.pattern.permute.xlu0 0
  %1103 = vperm.xlu0 %1102, %v1098
  %v1104 = vpop.permute.xlu0 %1103
  %1107 = vset.pattern.permute.xlu0 0
  %1108 = vperm.xlu0 %1107, %v1099
  %v1109 = vpop.permute.xlu0 %1108
  %1112 = vset.pattern.permute.xlu0 0
  %1113 = vperm.xlu0 %1112, %v1100
  %v1114 = vpop.permute.xlu0 %1113
  %v1116 = vadd.f32 %v1095, %v1104
  %v1117 = vadd.f32 %v1096, %v1109
  %v1118 = vadd.f32 %v1097, %v1114
  %v1119 = vmax.f32 %v1116, 0.0
  %v1120 = vmax.f32 %v1117, 0.0
  %v1121 = vmax.f32 %v1118, 0.0
  %vm1122 = vcmask 408576
  %1123 = vst.msk [vmem:[%s3] sm:$0xff] %vm1122, %v1119
  %1124 = vst.msk [vmem:[%s3 + $0x8] sm:$0xff] %vm1122, %v1120
  %vm1125 = vcmask 404480
  %1126 = vst.msk [vmem:[%s3 + $0x10] sm:$0xf] %vm1125, %v1121
  // Predicated region
  $region14: #{simplenet_dropout_forward.4} parent=0 // pred_check
    _
  $region15: #{simplenet_dropout_forward.4} parent=0 // pred_check_branch
    %1128 = sbr.rel (0) target = $region17
  $region16: #{simplenet_dropout_forward.4} parent=0 // pred_region
    _
  $region17: #{simplenet_dropout_forward.4} parent=0 // pred_fallthru
    _
  // Predicated region
  $region18: #{simplenet_dropout_forward.4} parent=0 // pred_check
    _
  $region19: #{simplenet_dropout_forward.4} parent=0 // pred_check_branch
    %1130 = sbr.rel (0) target = $region21
  $region20: #{simplenet_dropout_forward.4} parent=0 // pred_region
    _
  $region21: #{simplenet_dropout_forward.4} parent=0 // pred_fallthru
    _

// kernel: simplenet_dropout_forward.5
$region0: #{simplenet_dropout_forward.5}
  #allocation0 [shape = 'u32[]', space=smem, size = 0x4, offset = 0x4, fixed_abs, tag = 'smem constant byte address 0x4 - core index']
  #allocation1 [shape = 'u32[144,128]{1,0:T(1,128)}', space=vmem, size = 0x12000, scoped, tag = 'internal scratch']
  %s0 = inlined_call_operand.vmem [shape: f32[2,500], index: 0, kind: input, shape index: {}]
  %s1 = inlined_call_operand.vmem [shape: f32[500,100], index: 1, kind: input, shape index: {}]
  %s2 = inlined_call_operand.vmem [shape: f32[1,100], index: 2, kind: input, shape index: {}]
  %s3 = inlined_call_operand.vmem [shape: f32[100,15], index: 3, kind: input, shape index: {}]
  %s4 = inlined_call_operand.vmem [shape: f32[1,15], index: 4, kind: input, shape index: {}]
  %s5 = inlined_call_operand.hbm [shape: f32[2,15], index: 5, kind: output, shape index: {}]
  %s6 = sld [smem:[#allocation0]]
  $region30: #{simplenet_dropout_forward.5} parent=0
    _
  %s8 = ssub.s32 1, %s6
  %s9 = scalar_select 0, %s8, %s6
  $region1: #{simplenet_dropout_forward.5} parent=0
    #allocation2 [shape = 'u8[1024]{0}', space=vmem, size = 0x400, scoped, tag = 'output window, operand 0, single buffered']
    #allocation3 [shape = 's32[1]{0}', space=sflag, size = 0x4, scoped, tag = 'scoped memory for simplenet_dropout_forward.5']
    %10 = vsyncpa [#allocation3], 0
    // Predicated region
    $region2: #{simplenet_dropout_forward.5} parent=1 // pred_check
      _
    $region3: #{simplenet_dropout_forward.5} parent=1 // pred_check_branch
      %12 = sbr.rel (0) target = $region5
    $region4: #{simplenet_dropout_forward.5} parent=1 // pred_region
      _
    $region5: #{simplenet_dropout_forward.5} parent=1 // pred_fallthru
      _
    // Predicated region
    $region6: #{simplenet_dropout_forward.5} parent=1 // pred_check
      _
    $region7: #{simplenet_dropout_forward.5} parent=1 // pred_check_branch
      %14 = sbr.rel (0) target = $region9
    $region8: #{simplenet_dropout_forward.5} parent=1 // pred_region
      _
    $region9: #{simplenet_dropout_forward.5} parent=1 // pred_fallthru
      _
    // Predicated region
    $region10: #{simplenet_dropout_forward.5} parent=1 // pred_check
      _
    $region11: #{simplenet_dropout_forward.5} parent=1 // pred_check_branch
      %16 = sbr.rel (0) target = $region13
    $region12: #{simplenet_dropout_forward.5} parent=1 // pred_region
      _
    $region13: #{simplenet_dropout_forward.5} parent=1 // pred_fallthru
      _
    // Predicated region
    $region14: #{simplenet_dropout_forward.5} parent=1 // pred_check
      _
    $region15: #{simplenet_dropout_forward.5} parent=1 // pred_check_branch
      %18 = sbr.rel (0) target = $region17
    $region16: #{simplenet_dropout_forward.5} parent=1 // pred_region
      _
    $region17: #{simplenet_dropout_forward.5} parent=1 // pred_fallthru
      _
    // Predicated region
    $region18: #{simplenet_dropout_forward.5} parent=1 // pred_check
      _
    $region19: #{simplenet_dropout_forward.5} parent=1 // pred_check_branch
      %20 = sbr.rel (0) target = $region21
    $region20: #{simplenet_dropout_forward.5} parent=1 // pred_region
      _
    $region21: #{simplenet_dropout_forward.5} parent=1 // pred_fallthru
      _
    %v21 = vld [vmem:[%s0] sm:$0xff]
    %v22 = vld [vmem:[%s1] sm:$0xff]
    %v23 = vld [vmem:[%s1 + $0x8] sm:$0xff]
    %v24 = vld [vmem:[%s1 + $0x10] sm:$0xff]
    %v25 = vld [vmem:[%s1 + $0x18] sm:$0xff]
    %v26 = vld [vmem:[%s1 + $0x20] sm:$0xff]
    %v27 = vld [vmem:[%s1 + $0x28] sm:$0xff]
    %v28 = vld [vmem:[%s1 + $0x30] sm:$0xff]
    %v29 = vld [vmem:[%s1 + $0x38] sm:$0xff]
    %v30 = vld [vmem:[%s1 + $0x40] sm:$0xff]
    %v31 = vld [vmem:[%s1 + $0x48] sm:$0xff]
    %v32 = vld [vmem:[%s1 + $0x50] sm:$0xff]
    %v33 = vld [vmem:[%s1 + $0x58] sm:$0xff]
    %v34 = vld [vmem:[%s1 + $0x60] sm:$0xff]
    %v35 = vld [vmem:[%s1 + $0x68] sm:$0xff]
    %v36 = vld [vmem:[%s1 + $0x70] sm:$0xff]
    %v37 = vld [vmem:[%s1 + $0x78] sm:$0xff]
    %v38 = vld [vmem:[%s1 + $0x80] sm:$0xff]
    %v39 = vld [vmem:[%s1 + $0x88] sm:$0xff]
    %v40 = vld [vmem:[%s1 + $0x90] sm:$0xff]
    %v41 = vld [vmem:[%s1 + $0x98] sm:$0xff]
    %v42 = vld [vmem:[%s1 + $0xa0] sm:$0xff]
    %v43 = vld [vmem:[%s1 + $0xa8] sm:$0xff]
    %v44 = vld [vmem:[%s1 + $0xb0] sm:$0xff]
    %v45 = vld [vmem:[%s1 + $0xb8] sm:$0xff]
    %v46 = vld [vmem:[%s1 + $0xc0] sm:$0xff]
    %v47 = vld [vmem:[%s1 + $0xc8] sm:$0xff]
    %v48 = vld [vmem:[%s1 + $0xd0] sm:$0xff]
    %v49 = vld [vmem:[%s1 + $0xd8] sm:$0xff]
    %v50 = vld [vmem:[%s1 + $0xe0] sm:$0xff]
    %v51 = vld [vmem:[%s1 + $0xe8] sm:$0xff]
    %v52 = vld [vmem:[%s1 + $0xf0] sm:$0xff]
    %v53 = vld [vmem:[%s1 + $0xf8] sm:$0xff]
    %v54 = vld [vmem:[%s1 + $0x100] sm:$0xff]
    %v55 = vld [vmem:[%s1 + $0x108] sm:$0xff]
    %v56 = vld [vmem:[%s1 + $0x110] sm:$0xff]
    %v57 = vld [vmem:[%s1 + $0x118] sm:$0xff]
    %v58 = vld [vmem:[%s1 + $0x120] sm:$0xff]
    %v59 = vld [vmem:[%s1 + $0x128] sm:$0xff]
    %v60 = vld [vmem:[%s1 + $0x130] sm:$0xff]
    %v61 = vld [vmem:[%s1 + $0x138] sm:$0xff]
    %v62 = vld [vmem:[%s1 + $0x140] sm:$0xff]
    %v63 = vld [vmem:[%s1 + $0x148] sm:$0xff]
    %v64 = vld [vmem:[%s1 + $0x150] sm:$0xff]
    %v65 = vld [vmem:[%s1 + $0x158] sm:$0xff]
    %v66 = vld [vmem:[%s1 + $0x160] sm:$0xff]
    %v67 = vld [vmem:[%s1 + $0x168] sm:$0xff]
    %v68 = vld [vmem:[%s1 + $0x170] sm:$0xff]
    %v69 = vld [vmem:[%s1 + $0x178] sm:$0xff]
    %v70 = vld [vmem:[%s1 + $0x180] sm:$0xff]
    %v71 = vld [vmem:[%s1 + $0x188] sm:$0xff]
    %v72 = vld [vmem:[%s1 + $0x190] sm:$0xff]
    %v73 = vld [vmem:[%s1 + $0x198] sm:$0xff]
    %v74 = vld [vmem:[%s1 + $0x1a0] sm:$0xff]
    %v75 = vld [vmem:[%s1 + $0x1a8] sm:$0xff]
    %v76 = vld [vmem:[%s1 + $0x1b0] sm:$0xff]
    %v77 = vld [vmem:[%s1 + $0x1b8] sm:$0xff]
    %v78 = vld [vmem:[%s1 + $0x1c0] sm:$0xff]
    %v79 = vld [vmem:[%s1 + $0x1c8] sm:$0xff]
    %v80 = vld [vmem:[%s1 + $0x1d0] sm:$0xff]
    %v81 = vld [vmem:[%s1 + $0x1d8] sm:$0xff]
    %v82 = vld [vmem:[%s1 + $0x1e0] sm:$0xff]
    %v83 = vld [vmem:[%s1 + $0x1e8] sm:$0xff]
    %v84 = vld [vmem:[%s1 + $0x1f0] sm:$0xf]
    %v85 = vld [vmem:[%s2] sm:$0x1]
    %v87 = vlaneseq
    %v88 = vshrl.u32 %v87, 7
    %v89 = vsub.s32 0, %v88
    %v90 = vrot.slane %v85, %v89
    %v93 = vcombine.high %v21, %v21
    %v95 = vunpack.c.l.s4 1983009808
    %v96 = vunpack.c.0.s8 %v95
    %v97 = vlaneseq
    %v98 = vshrl.u32 %v97, 7
    %v99 = vsub.s32 %v96, %v98
    %v100 = vrot.slane %v21, %v99
    %v102 = vunpack.c.l.s4 1983009808
    %v103 = vunpack.c.0.s8 %v102
    %v104 = vlaneseq
    %v105 = vshrl.u32 %v104, 7
    %v106 = vsub.s32 %v103, %v105
    %v107 = vrot.slane %v93, %v106
    %v108 = vcombine.high %v100, %v100
    %v109 = vcombine.high %v107, %v107
    %vm113 = vcmask 949248
    %v114 = vsel %vm113, %v109, 0
    %vm116 = vcmask 1043456
    %v118 = vsel %vm116, %v84, 0
    %120 = vmatprep.subr.mxu0 0.0
    %121 = vmatpush1.msra.mxu0 %v37
    %122 = vmatprep.subr.mxu0 0.0
    %123 = vmatpush1.msra.mxu0 %v36
    %124 = vmatprep.subr.mxu0 0.0
    %125 = vmatpush1.msra.mxu0 %v35
    %126 = vmatprep.subr.mxu0 0.0
    %127 = vmatpush1.msra.mxu0 %v34
    %128 = vmatprep.subr.mxu0 0.0
    %129 = vmatpush1.msra.mxu0 %v33
    %130 = vmatprep.subr.mxu0 0.0
    %131 = vmatpush1.msra.mxu0 %v32
    %132 = vmatprep.subr.mxu0 0.0
    %133 = vmatpush1.msra.mxu0 %v31
    %134 = vmatprep.subr.mxu0 0.0
    %135 = vmatpush1.msra.mxu0 %v30
    %136 = vmatprep.subr.mxu0 0.0
    %137 = vmatpush1.msra.mxu0 %v29
    %138 = vmatprep.subr.mxu0 0.0
    %139 = vmatpush1.msra.mxu0 %v28
    %140 = vmatprep.subr.mxu0 0.0
    %141 = vmatpush1.msra.mxu0 %v27
    %142 = vmatprep.subr.mxu0 0.0
    %143 = vmatpush1.msra.mxu0 %v26
    %144 = vmatprep.subr.mxu0 0.0
    %145 = vmatpush1.msra.mxu0 %v25
    %146 = vmatprep.subr.mxu0 0.0
    %147 = vmatpush1.msra.mxu0 %v24
    %148 = vmatprep.subr.mxu0 0.0
    %149 = vmatpush1.msra.mxu0 %v23
    %150 = vmatprep.subr.mxu0 0.0
    %151 = vmatpush1.msra.mxu0 %v22
    %152 = vmatprep.subr.mxu0 0.0
    %153 = vmatpush2.msra.mxu0 %v53
    %154 = vmatprep.subr.mxu0 0.0
    %155 = vmatpush2.msra.mxu0 %v52
    %156 = vmatprep.subr.mxu0 0.0
    %157 = vmatpush2.msra.mxu0 %v51
    %158 = vmatprep.subr.mxu0 0.0
    %159 = vmatpush2.msra.mxu0 %v50
    %160 = vmatprep.subr.mxu0 0.0
    %161 = vmatpush2.msra.mxu0 %v49
    %162 = vmatprep.subr.mxu0 0.0
    %163 = vmatpush2.msra.mxu0 %v48
    %164 = vmatprep.subr.mxu0 0.0
    %165 = vmatpush2.msra.mxu0 %v47
    %166 = vmatprep.subr.mxu0 0.0
    %167 = vmatpush2.msra.mxu0 %v46
    %168 = vmatprep.subr.mxu0 0.0
    %169 = vmatpush2.msra.mxu0 %v45
    %170 = vmatprep.subr.mxu0 0.0
    %171 = vmatpush2.msra.mxu0 %v44
    %172 = vmatprep.subr.mxu0 0.0
    %173 = vmatpush2.msra.mxu0 %v43
    %174 = vmatprep.subr.mxu0 0.0
    %175 = vmatpush2.msra.mxu0 %v42
    %176 = vmatprep.subr.mxu0 0.0
    %177 = vmatpush2.msra.mxu0 %v41
    %178 = vmatprep.subr.mxu0 0.0
    %179 = vmatpush2.msra.mxu0 %v40
    %180 = vmatprep.subr.mxu0 0.0
    %181 = vmatpush2.msra.mxu0 %v39
    %182 = vmatprep.subr.mxu0 0.0
    %183 = vmatpush2.msra.mxu0 %v38
    %184 = vmatprep.mubr.f32.mxu0 %v108
    %185 = vmatmul.mubr.f32.gmra.mxu0 %v100
    %v186 = vpop.f32.mrf.mxu0
    %v187 = vadd.f32 %v90, %v186
    %v188 = vpop.f32.mrf.mxu0
    %189 = vdwg.mxu0
    %190 = vmatprep.subr.mxu0 0.0
    %191 = vmatpush1.msra.mxu0 %v69
    %192 = vmatprep.subr.mxu0 0.0
    %193 = vmatpush1.msra.mxu0 %v68
    %194 = vmatprep.subr.mxu0 0.0
    %195 = vmatpush1.msra.mxu0 %v67
    %196 = vmatprep.subr.mxu0 0.0
    %197 = vmatpush1.msra.mxu0 %v66
    %198 = vmatprep.subr.mxu0 0.0
    %199 = vmatpush1.msra.mxu0 %v65
    %200 = vmatprep.subr.mxu0 0.0
    %201 = vmatpush1.msra.mxu0 %v64
    %202 = vmatprep.subr.mxu0 0.0
    %203 = vmatpush1.msra.mxu0 %v63
    %204 = vmatprep.subr.mxu0 0.0
    %205 = vmatpush1.msra.mxu0 %v62
    %206 = vmatprep.subr.mxu0 0.0
    %207 = vmatpush1.msra.mxu0 %v61
    %208 = vmatprep.subr.mxu0 0.0
    %209 = vmatpush1.msra.mxu0 %v60
    %210 = vmatprep.subr.mxu0 0.0
    %211 = vmatpush1.msra.mxu0 %v59
    %212 = vmatprep.subr.mxu0 0.0
    %213 = vmatpush1.msra.mxu0 %v58
    %214 = vmatprep.subr.mxu0 0.0
    %215 = vmatpush1.msra.mxu0 %v57
    %216 = vmatprep.subr.mxu0 0.0
    %217 = vmatpush1.msra.mxu0 %v56
    %218 = vmatprep.subr.mxu0 0.0
    %219 = vmatpush1.msra.mxu0 %v55
    %220 = vmatprep.subr.mxu0 0.0
    %221 = vmatpush1.msra.mxu0 %v54
    %222 = vmatprep.subr.mxu0 0.0
    %223 = vmatpush2.msra.mxu0 0.0
    %224 = vmatprep.subr.mxu0 0.0
    %225 = vmatpush2.msra.mxu0 %v118
    %226 = vmatprep.subr.mxu0 0.0
    %227 = vmatpush2.msra.mxu0 %v83
    %228 = vmatprep.subr.mxu0 0.0
    %229 = vmatpush2.msra.mxu0 %v82
    %230 = vmatprep.subr.mxu0 0.0
    %231 = vmatpush2.msra.mxu0 %v81
    %232 = vmatprep.subr.mxu0 0.0
    %233 = vmatpush2.msra.mxu0 %v80
    %234 = vmatprep.subr.mxu0 0.0
    %235 = vmatpush2.msra.mxu0 %v79
    %236 = vmatprep.subr.mxu0 0.0
    %237 = vmatpush2.msra.mxu0 %v78
    %238 = vmatprep.subr.mxu0 0.0
    %239 = vmatpush2.msra.mxu0 %v77
    %240 = vmatprep.subr.mxu0 0.0
    %241 = vmatpush2.msra.mxu0 %v76
    %242 = vmatprep.subr.mxu0 0.0
    %243 = vmatpush2.msra.mxu0 %v75
    %244 = vmatprep.subr.mxu0 0.0
    %245 = vmatpush2.msra.mxu0 %v74
    %246 = vmatprep.subr.mxu0 0.0
    %247 = vmatpush2.msra.mxu0 %v73
    %248 = vmatprep.subr.mxu0 0.0
    %249 = vmatpush2.msra.mxu0 %v72
    %250 = vmatprep.subr.mxu0 0.0
    %251 = vmatpush2.msra.mxu0 %v71
    %252 = vmatprep.subr.mxu0 0.0
    %253 = vmatpush2.msra.mxu0 %v70
    %254 = vmatprep.mubr.f32.mxu0 %v114
    %255 = vmatmul.mubr.f32.gmra.mxu0 %v107
    %v256 = vpop.f32.mrf.mxu0
    %v257 = vadd.f32 %v187, %v256
    %v258 = vpop.f32.mrf.mxu0
    %259 = vdwg.mxu0
    %v260 = vmax.f32 %v257, 0.0
    %v261 = vld [vmem:[%s3] sm:$0xff]
    %v262 = vld [vmem:[%s3 + $0x8] sm:$0xff]
    %v263 = vld [vmem:[%s3 + $0x10] sm:$0xff]
    %v264 = vld [vmem:[%s3 + $0x18] sm:$0xff]
    %v265 = vld [vmem:[%s3 + $0x20] sm:$0xff]
    %v266 = vld [vmem:[%s3 + $0x28] sm:$0xff]
    %v267 = vld [vmem:[%s3 + $0x30] sm:$0xff]
    %v268 = vld [vmem:[%s3 + $0x38] sm:$0xff]
    %v269 = vld [vmem:[%s3 + $0x40] sm:$0xff]
    %v270 = vld [vmem:[%s3 + $0x48] sm:$0xff]
    %v271 = vld [vmem:[%s3 + $0x50] sm:$0xff]
    %v272 = vld [vmem:[%s3 + $0x58] sm:$0xff]
    %v273 = vld [vmem:[%s3 + $0x60] sm:$0xf]
    %v274 = vld [vmem:[%s4] sm:$0x1]
    %v276 = vlaneseq
    %v277 = vshrl.u32 %v276, 7
    %v278 = vsub.s32 0, %v277
    %v279 = vrot.slane %v274, %v278
    %vm281 = vcmask 818176
    %v283 = vsel %vm281, %v260, 0
    %v286 = vsel %vm116, %v273, 0
    %288 = vmatprep.subr.mxu0 0.0
    %289 = vmatpush1.msra.mxu0 0.0
    %290 = vmatprep.subr.mxu0 0.0
    %291 = vmatpush1.msra.mxu0 0.0
    %292 = vmatprep.subr.mxu0 0.0
    %293 = vmatpush1.msra.mxu0 0.0
    %294 = vmatprep.subr.mxu0 0.0
    %295 = vmatpush1.msra.mxu0 %v286
    %296 = vmatprep.subr.mxu0 0.0
    %297 = vmatpush1.msra.mxu0 %v272
    %298 = vmatprep.subr.mxu0 0.0
    %299 = vmatpush1.msra.mxu0 %v271
    %300 = vmatprep.subr.mxu0 0.0
    %301 = vmatpush1.msra.mxu0 %v270
    %302 = vmatprep.subr.mxu0 0.0
    %303 = vmatpush1.msra.mxu0 %v269
    %304 = vmatprep.subr.mxu0 0.0
    %305 = vmatpush1.msra.mxu0 %v268
    %306 = vmatprep.subr.mxu0 0.0
    %307 = vmatpush1.msra.mxu0 %v267
    %308 = vmatprep.subr.mxu0 0.0
    %309 = vmatpush1.msra.mxu0 %v266
    %310 = vmatprep.subr.mxu0 0.0
    %311 = vmatpush1.msra.mxu0 %v265
    %312 = vmatprep.subr.mxu0 0.0
    %313 = vmatpush1.msra.mxu0 %v264
    %314 = vmatprep.subr.mxu0 0.0
    %315 = vmatpush1.msra.mxu0 %v263
    %316 = vmatprep.subr.mxu0 0.0
    %317 = vmatpush1.msra.mxu0 %v262
    %318 = vmatprep.subr.mxu0 0.0
    %319 = vmatpush1.msra.mxu0 %v261
    %320 = vmatprep.subr.mxu0 0.0
    %321 = vmatpush2.msra.mxu0 0.0
    %322 = vmatprep.subr.mxu0 0.0
    %323 = vmatpush2.msra.mxu0 0.0
    %324 = vmatprep.subr.mxu0 0.0
    %325 = vmatpush2.msra.mxu0 0.0
    %326 = vmatprep.subr.mxu0 0.0
    %327 = vmatpush2.msra.mxu0 0.0
    %328 = vmatprep.subr.mxu0 0.0
    %329 = vmatpush2.msra.mxu0 0.0
    %330 = vmatprep.subr.mxu0 0.0
    %331 = vmatpush2.msra.mxu0 0.0
    %332 = vmatprep.subr.mxu0 0.0
    %333 = vmatpush2.msra.mxu0 0.0
    %334 = vmatprep.subr.mxu0 0.0
    %335 = vmatpush2.msra.mxu0 0.0
    %336 = vmatprep.subr.mxu0 0.0
    %337 = vmatpush2.msra.mxu0 0.0
    %338 = vmatprep.subr.mxu0 0.0
    %339 = vmatpush2.msra.mxu0 0.0
    %340 = vmatprep.subr.mxu0 0.0
    %341 = vmatpush2.msra.mxu0 0.0
    %342 = vmatprep.subr.mxu0 0.0
    %343 = vmatpush2.msra.mxu0 0.0
    %344 = vmatprep.subr.mxu0 0.0
    %345 = vmatpush2.msra.mxu0 0.0
    %346 = vmatprep.subr.mxu0 0.0
    %347 = vmatpush2.msra.mxu0 0.0
    %348 = vmatprep.subr.mxu0 0.0
    %349 = vmatpush2.msra.mxu0 0.0
    %350 = vmatprep.subr.mxu0 0.0
    %351 = vmatpush2.msra.mxu0 0.0
    %352 = vmatprep.mubr.f32.mxu0 0.0
    %353 = vmatmul.mubr.f32.gmra.mxu0 %v283
    %v354 = vpop.f32.mrf.mxu0
    %v355 = vadd.f32 %v279, %v354
    %v356 = vpop.f32.mrf.mxu0
    %357 = vdwg.mxu0
    %vm358 = vcmask 115712
    %359 = vst.msk [vmem:[#allocation2] sm:$0x3] %vm358, %v355
    // Predicated region
    $region22: #{simplenet_dropout_forward.5} parent=1 // pred_check
      _
    $region23: #{simplenet_dropout_forward.5} parent=1 // pred_check_branch
      %361 = sbr.rel (0) target = $region25
    $region24: #{simplenet_dropout_forward.5} parent=1 // pred_region
      %s363 = ssub.s32 32, 32
      %364 = vsyncadd [#allocation3], %s363
      %s366 = sshll.u32 [#allocation2], 4
      %s367 = int_to_ptr.vmem [resolvable:$true] %s366
      %369 = dma.vmem_to_hbm [thread:$0]  %s367, 32, %s5, [#allocation3]
    $region25: #{simplenet_dropout_forward.5} parent=1 // pred_fallthru
      _
    // Predicated region
    $region26: #{simplenet_dropout_forward.5} parent=1 // pred_check
      _
    $region27: #{simplenet_dropout_forward.5} parent=1 // pred_check_branch
      %371 = sbr.rel (0) target = $region29
    $region28: #{simplenet_dropout_forward.5} parent=1 // pred_region
      %372 = dma.done [#allocation3], 32
    $region29: #{simplenet_dropout_forward.5} parent=1 // pred_fallthru
      _
    %373 = vsyncpa [#allocation3], 1

</llo_original>
